<compile_context>
chip_gen: v5e
topology: v5e:2x2
jax: 0.10.0
libtpu: 0.0.40
codegen_flags: <defaults>
</compile_context>

<pallas_src>
import functools

import jax
import jax.numpy as jnp
from jax.experimental import pallas as pl
from jax.experimental.pallas import tpu as pltpu


# ------------------------ fused 2-layer LSTM + FC kernel ------------------------
def fused_lstm_fc_kernel(
    x_ref,      # (T*Bp, E)  bf16, time-major embedded input, pre-flattened in wrapper
    wih0_ref,   # (E, 4H)    bf16  (gate cols permuted to [i, f, o, g])
    whh0_ref,   # (H, 4H)    bf16
    b0_ref,     # (1, 4H)    f32   (bias_ih + bias_hh, layer 0)
    w1_ref,     # (2H, 4H)   bf16  (stacked [W_ih1; W_hh1])
    b1_ref,     # (1, 4H)    f32   (bias_ih + bias_hh, layer 1)
    wfc_ref,    # (H, Op)    bf16  (FC weight, zero-padded to 128 lanes)
    bfc_ref,    # (1, Op)    f32
    out_ref,    # (Bp, Op)   f32   (only the last-timestep logits)
    gx_ref,     # scratch (T*Bp, 4H) bf16: hoisted layer-0 input gates
    *,
    hidden,
    seq_len,
    batch_p,
):
    H = hidden
    T = seq_len
    Bp = batch_p

    # 1) Hoisted layer-0 input projection: one large MXU matmul over ALL timesteps.
    gx_ref[...] = jnp.dot(
        x_ref[...], wih0_ref[...], preferred_element_type=jnp.float32
    ).astype(jnp.bfloat16)

    # 2) Loop-invariant weight / bias loads (hoisted once; kept vreg-resident by Mosaic).
    whh0 = whh0_ref[...]
    w1 = w1_ref[...]
    b0 = jnp.broadcast_to(b0_ref[...], (Bp, 4 * H))
    b1 = jnp.broadcast_to(b1_ref[...], (Bp, 4 * H))

    def cell(gates, c):
        # Gate order permuted (in the wrapper) to [i, f, o, g]:
        # a single lane-dense sigmoid over 3H lanes + one tanh.
        sig = jax.nn.sigmoid(gates[:, : 3 * H])
        i = sig[:, 0:H]
        f = sig[:, H : 2 * H]
        o = sig[:, 2 * H : 3 * H]
        g = jnp.tanh(gates[:, 3 * H : 4 * H])
        c_new = f * c + i * g
        h_new = o * jnp.tanh(c_new)
        return h_new, c_new

    def step(t, carry):
        h0, c0, h1, c1 = carry
        # Layer 0: only the recurrent matmul remains on the serial path.
        row = pl.multiple_of(t * Bp, Bp)          # tile-aligned bf16 sublane slice
        gx_t = gx_ref[pl.ds(row, Bp), :].astype(jnp.float32)
        gates0 = gx_t + b0 + jnp.dot(
            h0.astype(jnp.bfloat16), whh0, preferred_element_type=jnp.float32
        )
        h0, c0 = cell(gates0, c0)
        # Layer 1: one dot per step on concatenated [h0, h1] (Bp, 2H) with stacked weights.
        hh = jnp.concatenate([h0, h1], axis=1).astype(jnp.bfloat16)
        gates1 = jnp.dot(hh, w1, preferred_element_type=jnp.float32) + b1
        h1, c1 = cell(gates1, c1)
        return h0, c0, h1, c1

    zeros = jnp.zeros((Bp, H), jnp.float32)       # PyTorch default h0 = c0 = 0
    _, _, h1, _ = jax.lax.fori_loop(
        0, T, step, (zeros, zeros, zeros, zeros), unroll=min(T, 8)
    )

    # 3) Final FC on the last timestep only (dropout in eval mode == identity).
    out_ref[...] = (
        jnp.dot(h1.astype(jnp.bfloat16), wfc_ref[...], preferred_element_type=jnp.float32)
        + bfc_ref[...]
    )


# --------------------------------- full forward ---------------------------------
def _permute_gates(w):
    """Reorder last-dim gate columns from PyTorch [i, f, g, o] to kernel [i, f, o, g]."""
    H = w.shape[-1] // 4
    return jnp.concatenate(
        [w[..., : 2 * H], w[..., 3 * H :], w[..., 2 * H : 3 * H]], axis=-1
    )


def lstm_classifier_forward(params, tokens):
    B, T = tokens.shape
    E = params["wih0"].shape[0]
    H = params["whh0"].shape[0]
    O = params["wfc"].shape[1]
    Bp = ((B + 15) // 16) * 16               # bf16 sublane-tile (16) aligned batch pad
    Op = ((O + 127) // 128) * 128            # lane-dense FC output

    # Embedding gather directly in time-major (T, B, E) order, pad batch, flatten in the
    # WRAPPER (true no-op for the kernel; no in-kernel bf16 relayout).
    emb = jnp.take(params["embedding"], tokens.T, axis=0).astype(jnp.bfloat16)  # (T,B,E)
    if Bp != B:
        emb = jnp.pad(emb, ((0, 0), (0, Bp - B), (0, 0)))
    x_flat = emb.reshape(T * Bp, E)

    # Kernel-ready weights: gate-permuted, bf16 matmul operands, stacked L1, padded FC.
    wih0 = _permute_gates(params["wih0"]).astype(jnp.bfloat16)
    whh0 = _permute_gates(params["whh0"]).astype(jnp.bfloat16)
    b0 = _permute_gates(params["b0"])
    w1 = _permute_gates(
        jnp.concatenate([params["wih1"], params["whh1"]], axis=0)
    ).astype(jnp.bfloat16)
    b1 = _permute_gates(params["b1"])
    wfc = jnp.zeros((H, Op), jnp.float32).at[:, :O].set(params["wfc"]).astype(jnp.bfloat16)
    bfc = jnp.zeros((1, Op), jnp.float32).at[:, :O].set(params["bfc"])

    # Explicit scoped-VMEM budget (resident bytes * 2 for headroom, clamped 4..32 MiB).
    resident = (
        x_flat.size * 2 + (T * Bp * 4 * H) * 2        # x + gx scratch (bf16)
        + (wih0.size + whh0.size + w1.size + wfc.size) * 2
        + (b0.size + b1.size + bfc.size) * 4
        + Bp * Op * 4
    )
    vmem_limit = int(min(max(2 * resident, 4 << 20), 32 << 20))

    kernel = functools.partial(fused_lstm_fc_kernel, hidden=H, seq_len=T, batch_p=Bp)
    out = pl.pallas_call(
        kernel,
        out_shape=jax.ShapeDtypeStruct((Bp, Op), jnp.float32),
        scratch_shapes=[pltpu.VMEM((T * Bp, 4 * H), jnp.bfloat16)],
        compiler_params=pltpu.CompilerParams(vmem_limit_bytes=vmem_limit),
    )(x_flat, wih0, whh0, b0, w1, b1, wfc, bfc)

    return out[:B, :O]


# -------------------------- pure-JAX reference (check) ---------------------------
def _ref_lstm_layer(x_tbe_bf16, wih, whh, b):
    H = whh.shape[0]
    B = x_tbe_bf16.shape[1]
    wih_b = wih.astype(jnp.bfloat16)
    whh_b = whh.astype(jnp.bfloat16)

    def step(carry, x_t):
        h, c = carry
        gates = (
            jnp.dot(x_t, wih_b, preferred_element_type=jnp.float32)
            + jnp.dot(h.astype(jnp.bfloat16), whh_b, preferred_element_type=jnp.float32)
            + b[0]
        )
        i = jax.nn.sigmoid(gates[:, 0:H])
        f = jax.nn.sigmoid(gates[:, H:2 * H])
        g = jnp.tanh(gates[:, 2 * H:3 * H])
        o = jax.nn.sigmoid(gates[:, 3 * H:4 * H])
        c = f * c + i * g
        h = o * jnp.tanh(c)
        return (h, c), h

    init = (jnp.zeros((B, H), jnp.float32), jnp.zeros((B, H), jnp.float32))
    _, ys = jax.lax.scan(step, init, x_tbe_bf16)
    return ys  # (T, B, H) f32


def ref_forward(params, tokens):
    emb = jnp.take(params["embedding"], tokens.T, axis=0)  # (T, B, E)
    h1 = _ref_lstm_layer(emb.astype(jnp.bfloat16), params["wih0"], params["whh0"], params["b0"])
    h2 = _ref_lstm_layer(h1.astype(jnp.bfloat16), params["wih1"], params["whh1"], params["b1"])
    last = h2[-1]
    return (
        jnp.dot(last.astype(jnp.bfloat16), params["wfc"].astype(jnp.bfloat16),
                preferred_element_type=jnp.float32)
        + params["bfc"][0]
    )


# ------------------------------------ params -------------------------------------
def init_params(key, vocab_size, embed_size, hidden_size, output_size):
    k = 1.0 / jnp.sqrt(hidden_size)
    keys = jax.random.split(key, 12)

    def u(kk, shape, scale):
        return jax.random.uniform(kk, shape, jnp.float32, -scale, scale)

    return {
        "embedding": jax.random.normal(keys[0], (vocab_size, embed_size), jnp.float32),
        # layer 0 (input = embed_size); weights pre-transposed: gates = x @ W^T <=> x @ w
        "wih0": u(keys[1], (embed_size, 4 * hidden_size), k),
        "whh0": u(keys[2], (hidden_size, 4 * hidden_size), k),
        "b0": u(keys[3], (1, 4 * hidden_size), k) + u(keys[4], (1, 4 * hidden_size), k),
        # layer 1 (input = hidden_size)
        "wih1": u(keys[5], (hidden_size, 4 * hidden_size), k),
        "whh1": u(keys[6], (hidden_size, 4 * hidden_size), k),
        "b1": u(keys[7], (1, 4 * hidden_size), k) + u(keys[8], (1, 4 * hidden_size), k),
        # fc
        "wfc": u(keys[9], (hidden_size, output_size), k),
        "bfc": u(keys[10], (1, output_size), k),
    }


if __name__ == "__main__":
    vocab_size = 1000   # small stand-in for max_words=10000
    embed_size = 128
    hidden_size = 64
    output_size = 4     # len(label_encoder.classes_) stand-in
    batch = 2
    seq = 8

    key = jax.random.PRNGKey(0)
    pkey, tkey = jax.random.split(key)
    params = init_params(pkey, vocab_size, embed_size, hidden_size, output_size)
    tokens = jax.random.randint(tkey, (batch, seq), 0, vocab_size, dtype=jnp.int32)

    fwd = jax.jit(lstm_classifier_forward)
    out = jax.block_until_ready(fwd(params, tokens))
    ref = jax.block_until_ready(jax.jit(ref_forward)(params, tokens))

    assert out.shape == (batch, output_size)
    # Tolerance covers bf16 matmul operands + the bf16 gx scratch (hoisted input gates).
    assert jnp.allclose(out, ref, atol=1e-2, rtol=1e-2), (
        f"Pallas output mismatch vs JAX reference: max abs diff "
        f"{jnp.max(jnp.abs(out - ref))}"
    )
    print("KERNEL_OK")
</pallas_src>

<mosaic_0001>
module attributes {stable_mosaic.version = 11 : i64} {
  func.func @fused_lstm_fc_kernel(%arg0: memref<128x128xbf16, #tpu.memory_space<vmem>>, %arg1: memref<128x256xbf16, #tpu.memory_space<vmem>>, %arg2: memref<64x256xbf16, #tpu.memory_space<vmem>>, %arg3: memref<1x256xf32, #tpu.memory_space<vmem>>, %arg4: memref<128x256xbf16, #tpu.memory_space<vmem>>, %arg5: memref<1x256xf32, #tpu.memory_space<vmem>>, %arg6: memref<64x128xbf16, #tpu.memory_space<vmem>>, %arg7: memref<1x128xf32, #tpu.memory_space<vmem>>, %arg8: memref<16x128xf32, #tpu.memory_space<vmem>>, %arg9: memref<128x256xbf16, #tpu.memory_space<vmem>>) attributes {dimension_semantics = [], scalar_prefetch = 0 : i64, scratch_operands = 1 : i64, tpu.core_type = #tpu.core_type<tc>} {
    %c0 = arith.constant 0 : index
    %c0_0 = arith.constant 0 : index
    %0 = vector.load %arg0[%c0, %c0_0] : memref<128x128xbf16, #tpu.memory_space<vmem>>, vector<128x128xbf16>
    %c0_1 = arith.constant 0 : index
    %c0_2 = arith.constant 0 : index
    %1 = vector.load %arg1[%c0_1, %c0_2] : memref<128x256xbf16, #tpu.memory_space<vmem>>, vector<128x256xbf16>
    %cst = arith.constant dense<0.000000e+00> : vector<128x256xf32>
    %2 = tpu.matmul %0, %1, %cst {dimension_numbers = #tpu.dot_dimension_numbers<[1], [0], [0], [1], [0, 0, 1, 1], [], []>} : vector<128x128xbf16>, vector<128x256xbf16>, vector<128x256xf32> -> vector<128x256xf32>
    %3 = arith.truncf %2 : vector<128x256xf32> to vector<128x256xbf16>
    %c0_3 = arith.constant 0 : index
    %c0_4 = arith.constant 0 : index
    %4 = vector.load %arg9[%c0_3, %c0_4] : memref<128x256xbf16, #tpu.memory_space<vmem>>, vector<128x256xbf16>
    tpu.vector_store %arg9[%c0_3, %c0_4], %3 {strides = array<i32>} : memref<128x256xbf16, #tpu.memory_space<vmem>>, vector<128x256xbf16>,
    %c0_5 = arith.constant 0 : index
    %c0_6 = arith.constant 0 : index
    %5 = vector.load %arg2[%c0_5, %c0_6] : memref<64x256xbf16, #tpu.memory_space<vmem>>, vector<64x256xbf16>
    %c0_7 = arith.constant 0 : index
    %c0_8 = arith.constant 0 : index
    %6 = vector.load %arg4[%c0_7, %c0_8] : memref<128x256xbf16, #tpu.memory_space<vmem>>, vector<128x256xbf16>
    %c0_9 = arith.constant 0 : index
    %c0_10 = arith.constant 0 : index
    %7 = vector.load %arg3[%c0_9, %c0_10] : memref<1x256xf32, #tpu.memory_space<vmem>>, vector<1x256xf32>
    %8 = vector.shape_cast %7 : vector<1x256xf32> to vector<1x256xf32>
    %9 = vector.broadcast %8 : vector<1x256xf32> to vector<16x256xf32>
    %c0_11 = arith.constant 0 : index
    %c0_12 = arith.constant 0 : index
    %10 = vector.load %arg5[%c0_11, %c0_12] : memref<1x256xf32, #tpu.memory_space<vmem>>, vector<1x256xf32>
    %11 = vector.shape_cast %10 : vector<1x256xf32> to vector<1x256xf32>
    %12 = vector.broadcast %11 : vector<1x256xf32> to vector<16x256xf32>
    %cst_13 = arith.constant 0.000000e+00 : f32
    %13 = vector.broadcast %cst_13 : f32 to vector<16x64xf32>
    %c0_i32 = arith.constant 0 : i32
    %c16_i32 = arith.constant 16 : i32
    %14 = arith.muli %c0_i32, %c16_i32 : i32
    %15 = tpu.assume_multiple %14, 16 : i32
    %16 = arith.index_cast %15 : i32 to index
    %c0_14 = arith.constant 0 : index
    %17 = vector.load %arg9[%16, %c0_14] : memref<128x256xbf16, #tpu.memory_space<vmem>>, vector<16x256xbf16>
    %18 = arith.extf %17 : vector<16x256xbf16> to vector<16x256xf32>
    %19 = arith.addf %18, %9 : vector<16x256xf32>
    %20 = arith.truncf %13 : vector<16x64xf32> to vector<16x64xbf16>
    %cst_15 = arith.constant dense<0.000000e+00> : vector<16x256xf32>
    %21 = tpu.matmul %20, %5, %cst_15 {dimension_numbers = #tpu.dot_dimension_numbers<[1], [0], [0], [1], [0, 0, 1, 1], [], []>} : vector<16x64xbf16>, vector<64x256xbf16>, vector<16x256xf32> -> vector<16x256xf32>
    %22 = arith.addf %19, %21 : vector<16x256xf32>
    %23 = vector.extract_strided_slice %22 {offsets = [0, 0], sizes = [16, 192], strides = [1, 1]} : vector<16x256xf32> to vector<16x192xf32>
    %24 = arith.negf %23 : vector<16x192xf32>
    %25 = math.exp %24 : vector<16x192xf32>
    %cst_16 = arith.constant 1.000000e+00 : f32
    %26 = vector.broadcast %cst_16 : f32 to vector<16x192xf32>
    %27 = arith.addf %26, %25 : vector<16x192xf32>
    %28 = arith.divf %26, %27 : vector<16x192xf32>
    %29 = vector.extract_strided_slice %28 {offsets = [0, 0], sizes = [16, 64], strides = [1, 1]} : vector<16x192xf32> to vector<16x64xf32>
    %30 = vector.extract_strided_slice %28 {offsets = [0, 64], sizes = [16, 64], strides = [1, 1]} : vector<16x192xf32> to vector<16x64xf32>
    %31 = vector.extract_strided_slice %28 {offsets = [0, 128], sizes = [16, 64], strides = [1, 1]} : vector<16x192xf32> to vector<16x64xf32>
    %32 = vector.extract_strided_slice %22 {offsets = [0, 192], sizes = [16, 64], strides = [1, 1]} : vector<16x256xf32> to vector<16x64xf32>
    %33 = math.tanh %32 : vector<16x64xf32>
    %34 = arith.mulf %30, %13 : vector<16x64xf32>
    %35 = arith.mulf %29, %33 : vector<16x64xf32>
    %36 = arith.addf %34, %35 : vector<16x64xf32>
    %37 = math.tanh %36 : vector<16x64xf32>
    %38 = arith.mulf %31, %37 : vector<16x64xf32>
    %39 = tpu.concatenate %38, %13 in 1 : vector<16x64xf32>, vector<16x64xf32> -> vector<16x128xf32>
    %40 = arith.truncf %39 : vector<16x128xf32> to vector<16x128xbf16>
    %cst_17 = arith.constant dense<0.000000e+00> : vector<16x256xf32>
    %41 = tpu.matmul %40, %6, %cst_17 {dimension_numbers = #tpu.dot_dimension_numbers<[1], [0], [0], [1], [0, 0, 1, 1], [], []>} : vector<16x128xbf16>, vector<128x256xbf16>, vector<16x256xf32> -> vector<16x256xf32>
    %42 = arith.addf %41, %12 : vector<16x256xf32>
    %43 = vector.extract_strided_slice %42 {offsets = [0, 0], sizes = [16, 192], strides = [1, 1]} : vector<16x256xf32> to vector<16x192xf32>
    %44 = arith.negf %43 : vector<16x192xf32>
    %45 = math.exp %44 : vector<16x192xf32>
    %cst_18 = arith.constant 1.000000e+00 : f32
    %46 = vector.broadcast %cst_18 : f32 to vector<16x192xf32>
    %47 = arith.addf %46, %45 : vector<16x192xf32>
    %48 = arith.divf %46, %47 : vector<16x192xf32>
    %49 = vector.extract_strided_slice %48 {offsets = [0, 0], sizes = [16, 64], strides = [1, 1]} : vector<16x192xf32> to vector<16x64xf32>
    %50 = vector.extract_strided_slice %48 {offsets = [0, 64], sizes = [16, 64], strides = [1, 1]} : vector<16x192xf32> to vector<16x64xf32>
    %51 = vector.extract_strided_slice %48 {offsets = [0, 128], sizes = [16, 64], strides = [1, 1]} : vector<16x192xf32> to vector<16x64xf32>
    %52 = vector.extract_strided_slice %42 {offsets = [0, 192], sizes = [16, 64], strides = [1, 1]} : vector<16x256xf32> to vector<16x64xf32>
    %53 = math.tanh %52 : vector<16x64xf32>
    %54 = arith.mulf %50, %13 : vector<16x64xf32>
    %55 = arith.mulf %49, %53 : vector<16x64xf32>
    %56 = arith.addf %54, %55 : vector<16x64xf32>
    %57 = math.tanh %56 : vector<16x64xf32>
    %58 = arith.mulf %51, %57 : vector<16x64xf32>
    %c1_i32 = arith.constant 1 : i32
    %c16_i32_19 = arith.constant 16 : i32
    %59 = arith.muli %c1_i32, %c16_i32_19 : i32
    %60 = tpu.assume_multiple %59, 16 : i32
    %61 = arith.index_cast %60 : i32 to index
    %c0_20 = arith.constant 0 : index
    %62 = vector.load %arg9[%61, %c0_20] : memref<128x256xbf16, #tpu.memory_space<vmem>>, vector<16x256xbf16>
    %63 = arith.extf %62 : vector<16x256xbf16> to vector<16x256xf32>
    %64 = arith.addf %63, %9 : vector<16x256xf32>
    %65 = arith.truncf %38 : vector<16x64xf32> to vector<16x64xbf16>
    %cst_21 = arith.constant dense<0.000000e+00> : vector<16x256xf32>
    %66 = tpu.matmul %65, %5, %cst_21 {dimension_numbers = #tpu.dot_dimension_numbers<[1], [0], [0], [1], [0, 0, 1, 1], [], []>} : vector<16x64xbf16>, vector<64x256xbf16>, vector<16x256xf32> -> vector<16x256xf32>
    %67 = arith.addf %64, %66 : vector<16x256xf32>
    %68 = vector.extract_strided_slice %67 {offsets = [0, 0], sizes = [16, 192], strides = [1, 1]} : vector<16x256xf32> to vector<16x192xf32>
    %69 = arith.negf %68 : vector<16x192xf32>
    %70 = math.exp %69 : vector<16x192xf32>
    %cst_22 = arith.constant 1.000000e+00 : f32
    %71 = vector.broadcast %cst_22 : f32 to vector<16x192xf32>
    %72 = arith.addf %71, %70 : vector<16x192xf32>
    %73 = arith.divf %71, %72 : vector<16x192xf32>
    %74 = vector.extract_strided_slice %73 {offsets = [0, 0], sizes = [16, 64], strides = [1, 1]} : vector<16x192xf32> to vector<16x64xf32>
    %75 = vector.extract_strided_slice %73 {offsets = [0, 64], sizes = [16, 64], strides = [1, 1]} : vector<16x192xf32> to vector<16x64xf32>
    %76 = vector.extract_strided_slice %73 {offsets = [0, 128], sizes = [16, 64], strides = [1, 1]} : vector<16x192xf32> to vector<16x64xf32>
    %77 = vector.extract_strided_slice %67 {offsets = [0, 192], sizes = [16, 64], strides = [1, 1]} : vector<16x256xf32> to vector<16x64xf32>
    %78 = math.tanh %77 : vector<16x64xf32>
    %79 = arith.mulf %75, %36 : vector<16x64xf32>
    %80 = arith.mulf %74, %78 : vector<16x64xf32>
    %81 = arith.addf %79, %80 : vector<16x64xf32>
    %82 = math.tanh %81 : vector<16x64xf32>
    %83 = arith.mulf %76, %82 : vector<16x64xf32>
    %84 = tpu.concatenate %83, %58 in 1 : vector<16x64xf32>, vector<16x64xf32> -> vector<16x128xf32>
    %85 = arith.truncf %84 : vector<16x128xf32> to vector<16x128xbf16>
    %cst_23 = arith.constant dense<0.000000e+00> : vector<16x256xf32>
    %86 = tpu.matmul %85, %6, %cst_23 {dimension_numbers = #tpu.dot_dimension_numbers<[1], [0], [0], [1], [0, 0, 1, 1], [], []>} : vector<16x128xbf16>, vector<128x256xbf16>, vector<16x256xf32> -> vector<16x256xf32>
    %87 = arith.addf %86, %12 : vector<16x256xf32>
    %88 = vector.extract_strided_slice %87 {offsets = [0, 0], sizes = [16, 192], strides = [1, 1]} : vector<16x256xf32> to vector<16x192xf32>
    %89 = arith.negf %88 : vector<16x192xf32>
    %90 = math.exp %89 : vector<16x192xf32>
    %cst_24 = arith.constant 1.000000e+00 : f32
    %91 = vector.broadcast %cst_24 : f32 to vector<16x192xf32>
    %92 = arith.addf %91, %90 : vector<16x192xf32>
    %93 = arith.divf %91, %92 : vector<16x192xf32>
    %94 = vector.extract_strided_slice %93 {offsets = [0, 0], sizes = [16, 64], strides = [1, 1]} : vector<16x192xf32> to vector<16x64xf32>
    %95 = vector.extract_strided_slice %93 {offsets = [0, 64], sizes = [16, 64], strides = [1, 1]} : vector<16x192xf32> to vector<16x64xf32>
    %96 = vector.extract_strided_slice %93 {offsets = [0, 128], sizes = [16, 64], strides = [1, 1]} : vector<16x192xf32> to vector<16x64xf32>
    %97 = vector.extract_strided_slice %87 {offsets = [0, 192], sizes = [16, 64], strides = [1, 1]} : vector<16x256xf32> to vector<16x64xf32>
    %98 = math.tanh %97 : vector<16x64xf32>
    %99 = arith.mulf %95, %56 : vector<16x64xf32>
    %100 = arith.mulf %94, %98 : vector<16x64xf32>
    %101 = arith.addf %99, %100 : vector<16x64xf32>
    %102 = math.tanh %101 : vector<16x64xf32>
    %103 = arith.mulf %96, %102 : vector<16x64xf32>
    %c2_i32 = arith.constant 2 : i32
    %c16_i32_25 = arith.constant 16 : i32
    %104 = arith.muli %c2_i32, %c16_i32_25 : i32
    %105 = tpu.assume_multiple %104, 16 : i32
    %106 = arith.index_cast %105 : i32 to index
    %c0_26 = arith.constant 0 : index
    %107 = vector.load %arg9[%106, %c0_26] : memref<128x256xbf16, #tpu.memory_space<vmem>>, vector<16x256xbf16>
    %108 = arith.extf %107 : vector<16x256xbf16> to vector<16x256xf32>
    %109 = arith.addf %108, %9 : vector<16x256xf32>
    %110 = arith.truncf %83 : vector<16x64xf32> to vector<16x64xbf16>
    %cst_27 = arith.constant dense<0.000000e+00> : vector<16x256xf32>
    %111 = tpu.matmul %110, %5, %cst_27 {dimension_numbers = #tpu.dot_dimension_numbers<[1], [0], [0], [1], [0, 0, 1, 1], [], []>} : vector<16x64xbf16>, vector<64x256xbf16>, vector<16x256xf32> -> vector<16x256xf32>
    %112 = arith.addf %109, %111 : vector<16x256xf32>
    %113 = vector.extract_strided_slice %112 {offsets = [0, 0], sizes = [16, 192], strides = [1, 1]} : vector<16x256xf32> to vector<16x192xf32>
    %114 = arith.negf %113 : vector<16x192xf32>
    %115 = math.exp %114 : vector<16x192xf32>
    %cst_28 = arith.constant 1.000000e+00 : f32
    %116 = vector.broadcast %cst_28 : f32 to vector<16x192xf32>
    %117 = arith.addf %116, %115 : vector<16x192xf32>
    %118 = arith.divf %116, %117 : vector<16x192xf32>
    %119 = vector.extract_strided_slice %118 {offsets = [0, 0], sizes = [16, 64], strides = [1, 1]} : vector<16x192xf32> to vector<16x64xf32>
    %120 = vector.extract_strided_slice %118 {offsets = [0, 64], sizes = [16, 64], strides = [1, 1]} : vector<16x192xf32> to vector<16x64xf32>
    %121 = vector.extract_strided_slice %118 {offsets = [0, 128], sizes = [16, 64], strides = [1, 1]} : vector<16x192xf32> to vector<16x64xf32>
    %122 = vector.extract_strided_slice %112 {offsets = [0, 192], sizes = [16, 64], strides = [1, 1]} : vector<16x256xf32> to vector<16x64xf32>
    %123 = math.tanh %122 : vector<16x64xf32>
    %124 = arith.mulf %120, %81 : vector<16x64xf32>
    %125 = arith.mulf %119, %123 : vector<16x64xf32>
    %126 = arith.addf %124, %125 : vector<16x64xf32>
    %127 = math.tanh %126 : vector<16x64xf32>
    %128 = arith.mulf %121, %127 : vector<16x64xf32>
    %129 = tpu.concatenate %128, %103 in 1 : vector<16x64xf32>, vector<16x64xf32> -> vector<16x128xf32>
    %130 = arith.truncf %129 : vector<16x128xf32> to vector<16x128xbf16>
    %cst_29 = arith.constant dense<0.000000e+00> : vector<16x256xf32>
    %131 = tpu.matmul %130, %6, %cst_29 {dimension_numbers = #tpu.dot_dimension_numbers<[1], [0], [0], [1], [0, 0, 1, 1], [], []>} : vector<16x128xbf16>, vector<128x256xbf16>, vector<16x256xf32> -> vector<16x256xf32>
    %132 = arith.addf %131, %12 : vector<16x256xf32>
    %133 = vector.extract_strided_slice %132 {offsets = [0, 0], sizes = [16, 192], strides = [1, 1]} : vector<16x256xf32> to vector<16x192xf32>
    %134 = arith.negf %133 : vector<16x192xf32>
    %135 = math.exp %134 : vector<16x192xf32>
    %cst_30 = arith.constant 1.000000e+00 : f32
    %136 = vector.broadcast %cst_30 : f32 to vector<16x192xf32>
    %137 = arith.addf %136, %135 : vector<16x192xf32>
    %138 = arith.divf %136, %137 : vector<16x192xf32>
    %139 = vector.extract_strided_slice %138 {offsets = [0, 0], sizes = [16, 64], strides = [1, 1]} : vector<16x192xf32> to vector<16x64xf32>
    %140 = vector.extract_strided_slice %138 {offsets = [0, 64], sizes = [16, 64], strides = [1, 1]} : vector<16x192xf32> to vector<16x64xf32>
    %141 = vector.extract_strided_slice %138 {offsets = [0, 128], sizes = [16, 64], strides = [1, 1]} : vector<16x192xf32> to vector<16x64xf32>
    %142 = vector.extract_strided_slice %132 {offsets = [0, 192], sizes = [16, 64], strides = [1, 1]} : vector<16x256xf32> to vector<16x64xf32>
    %143 = math.tanh %142 : vector<16x64xf32>
    %144 = arith.mulf %140, %101 : vector<16x64xf32>
    %145 = arith.mulf %139, %143 : vector<16x64xf32>
    %146 = arith.addf %144, %145 : vector<16x64xf32>
    %147 = math.tanh %146 : vector<16x64xf32>
    %148 = arith.mulf %141, %147 : vector<16x64xf32>
    %c3_i32 = arith.constant 3 : i32
    %c16_i32_31 = arith.constant 16 : i32
    %149 = arith.muli %c3_i32, %c16_i32_31 : i32
    %150 = tpu.assume_multiple %149, 16 : i32
    %151 = arith.index_cast %150 : i32 to index
    %c0_32 = arith.constant 0 : index
    %152 = vector.load %arg9[%151, %c0_32] : memref<128x256xbf16, #tpu.memory_space<vmem>>, vector<16x256xbf16>
    %153 = arith.extf %152 : vector<16x256xbf16> to vector<16x256xf32>
    %154 = arith.addf %153, %9 : vector<16x256xf32>
    %155 = arith.truncf %128 : vector<16x64xf32> to vector<16x64xbf16>
    %cst_33 = arith.constant dense<0.000000e+00> : vector<16x256xf32>
    %156 = tpu.matmul %155, %5, %cst_33 {dimension_numbers = #tpu.dot_dimension_numbers<[1], [0], [0], [1], [0, 0, 1, 1], [], []>} : vector<16x64xbf16>, vector<64x256xbf16>, vector<16x256xf32> -> vector<16x256xf32>
    %157 = arith.addf %154, %156 : vector<16x256xf32>
    %158 = vector.extract_strided_slice %157 {offsets = [0, 0], sizes = [16, 192], strides = [1, 1]} : vector<16x256xf32> to vector<16x192xf32>
    %159 = arith.negf %158 : vector<16x192xf32>
    %160 = math.exp %159 : vector<16x192xf32>
    %cst_34 = arith.constant 1.000000e+00 : f32
    %161 = vector.broadcast %cst_34 : f32 to vector<16x192xf32>
    %162 = arith.addf %161, %160 : vector<16x192xf32>
    %163 = arith.divf %161, %162 : vector<16x192xf32>
    %164 = vector.extract_strided_slice %163 {offsets = [0, 0], sizes = [16, 64], strides = [1, 1]} : vector<16x192xf32> to vector<16x64xf32>
    %165 = vector.extract_strided_slice %163 {offsets = [0, 64], sizes = [16, 64], strides = [1, 1]} : vector<16x192xf32> to vector<16x64xf32>
    %166 = vector.extract_strided_slice %163 {offsets = [0, 128], sizes = [16, 64], strides = [1, 1]} : vector<16x192xf32> to vector<16x64xf32>
    %167 = vector.extract_strided_slice %157 {offsets = [0, 192], sizes = [16, 64], strides = [1, 1]} : vector<16x256xf32> to vector<16x64xf32>
    %168 = math.tanh %167 : vector<16x64xf32>
    %169 = arith.mulf %165, %126 : vector<16x64xf32>
    %170 = arith.mulf %164, %168 : vector<16x64xf32>
    %171 = arith.addf %169, %170 : vector<16x64xf32>
    %172 = math.tanh %171 : vector<16x64xf32>
    %173 = arith.mulf %166, %172 : vector<16x64xf32>
    %174 = tpu.concatenate %173, %148 in 1 : vector<16x64xf32>, vector<16x64xf32> -> vector<16x128xf32>
    %175 = arith.truncf %174 : vector<16x128xf32> to vector<16x128xbf16>
    %cst_35 = arith.constant dense<0.000000e+00> : vector<16x256xf32>
    %176 = tpu.matmul %175, %6, %cst_35 {dimension_numbers = #tpu.dot_dimension_numbers<[1], [0], [0], [1], [0, 0, 1, 1], [], []>} : vector<16x128xbf16>, vector<128x256xbf16>, vector<16x256xf32> -> vector<16x256xf32>
    %177 = arith.addf %176, %12 : vector<16x256xf32>
    %178 = vector.extract_strided_slice %177 {offsets = [0, 0], sizes = [16, 192], strides = [1, 1]} : vector<16x256xf32> to vector<16x192xf32>
    %179 = arith.negf %178 : vector<16x192xf32>
    %180 = math.exp %179 : vector<16x192xf32>
    %cst_36 = arith.constant 1.000000e+00 : f32
    %181 = vector.broadcast %cst_36 : f32 to vector<16x192xf32>
    %182 = arith.addf %181, %180 : vector<16x192xf32>
    %183 = arith.divf %181, %182 : vector<16x192xf32>
    %184 = vector.extract_strided_slice %183 {offsets = [0, 0], sizes = [16, 64], strides = [1, 1]} : vector<16x192xf32> to vector<16x64xf32>
    %185 = vector.extract_strided_slice %183 {offsets = [0, 64], sizes = [16, 64], strides = [1, 1]} : vector<16x192xf32> to vector<16x64xf32>
    %186 = vector.extract_strided_slice %183 {offsets = [0, 128], sizes = [16, 64], strides = [1, 1]} : vector<16x192xf32> to vector<16x64xf32>
    %187 = vector.extract_strided_slice %177 {offsets = [0, 192], sizes = [16, 64], strides = [1, 1]} : vector<16x256xf32> to vector<16x64xf32>
    %188 = math.tanh %187 : vector<16x64xf32>
    %189 = arith.mulf %185, %146 : vector<16x64xf32>
    %190 = arith.mulf %184, %188 : vector<16x64xf32>
    %191 = arith.addf %189, %190 : vector<16x64xf32>
    %192 = math.tanh %191 : vector<16x64xf32>
    %193 = arith.mulf %186, %192 : vector<16x64xf32>
    %c4_i32 = arith.constant 4 : i32
    %c16_i32_37 = arith.constant 16 : i32
    %194 = arith.muli %c4_i32, %c16_i32_37 : i32
    %195 = tpu.assume_multiple %194, 16 : i32
    %196 = arith.index_cast %195 : i32 to index
    %c0_38 = arith.constant 0 : index
    %197 = vector.load %arg9[%196, %c0_38] : memref<128x256xbf16, #tpu.memory_space<vmem>>, vector<16x256xbf16>
    %198 = arith.extf %197 : vector<16x256xbf16> to vector<16x256xf32>
    %199 = arith.addf %198, %9 : vector<16x256xf32>
    %200 = arith.truncf %173 : vector<16x64xf32> to vector<16x64xbf16>
    %cst_39 = arith.constant dense<0.000000e+00> : vector<16x256xf32>
    %201 = tpu.matmul %200, %5, %cst_39 {dimension_numbers = #tpu.dot_dimension_numbers<[1], [0], [0], [1], [0, 0, 1, 1], [], []>} : vector<16x64xbf16>, vector<64x256xbf16>, vector<16x256xf32> -> vector<16x256xf32>
    %202 = arith.addf %199, %201 : vector<16x256xf32>
    %203 = vector.extract_strided_slice %202 {offsets = [0, 0], sizes = [16, 192], strides = [1, 1]} : vector<16x256xf32> to vector<16x192xf32>
    %204 = arith.negf %203 : vector<16x192xf32>
    %205 = math.exp %204 : vector<16x192xf32>
    %cst_40 = arith.constant 1.000000e+00 : f32
    %206 = vector.broadcast %cst_40 : f32 to vector<16x192xf32>
    %207 = arith.addf %206, %205 : vector<16x192xf32>
    %208 = arith.divf %206, %207 : vector<16x192xf32>
    %209 = vector.extract_strided_slice %208 {offsets = [0, 0], sizes = [16, 64], strides = [1, 1]} : vector<16x192xf32> to vector<16x64xf32>
    %210 = vector.extract_strided_slice %208 {offsets = [0, 64], sizes = [16, 64], strides = [1, 1]} : vector<16x192xf32> to vector<16x64xf32>
    %211 = vector.extract_strided_slice %208 {offsets = [0, 128], sizes = [16, 64], strides = [1, 1]} : vector<16x192xf32> to vector<16x64xf32>
    %212 = vector.extract_strided_slice %202 {offsets = [0, 192], sizes = [16, 64], strides = [1, 1]} : vector<16x256xf32> to vector<16x64xf32>
    %213 = math.tanh %212 : vector<16x64xf32>
    %214 = arith.mulf %210, %171 : vector<16x64xf32>
    %215 = arith.mulf %209, %213 : vector<16x64xf32>
    %216 = arith.addf %214, %215 : vector<16x64xf32>
    %217 = math.tanh %216 : vector<16x64xf32>
    %218 = arith.mulf %211, %217 : vector<16x64xf32>
    %219 = tpu.concatenate %218, %193 in 1 : vector<16x64xf32>, vector<16x64xf32> -> vector<16x128xf32>
    %220 = arith.truncf %219 : vector<16x128xf32> to vector<16x128xbf16>
    %cst_41 = arith.constant dense<0.000000e+00> : vector<16x256xf32>
    %221 = tpu.matmul %220, %6, %cst_41 {dimension_numbers = #tpu.dot_dimension_numbers<[1], [0], [0], [1], [0, 0, 1, 1], [], []>} : vector<16x128xbf16>, vector<128x256xbf16>, vector<16x256xf32> -> vector<16x256xf32>
    %222 = arith.addf %221, %12 : vector<16x256xf32>
    %223 = vector.extract_strided_slice %222 {offsets = [0, 0], sizes = [16, 192], strides = [1, 1]} : vector<16x256xf32> to vector<16x192xf32>
    %224 = arith.negf %223 : vector<16x192xf32>
    %225 = math.exp %224 : vector<16x192xf32>
    %cst_42 = arith.constant 1.000000e+00 : f32
    %226 = vector.broadcast %cst_42 : f32 to vector<16x192xf32>
    %227 = arith.addf %226, %225 : vector<16x192xf32>
    %228 = arith.divf %226, %227 : vector<16x192xf32>
    %229 = vector.extract_strided_slice %228 {offsets = [0, 0], sizes = [16, 64], strides = [1, 1]} : vector<16x192xf32> to vector<16x64xf32>
    %230 = vector.extract_strided_slice %228 {offsets = [0, 64], sizes = [16, 64], strides = [1, 1]} : vector<16x192xf32> to vector<16x64xf32>
    %231 = vector.extract_strided_slice %228 {offsets = [0, 128], sizes = [16, 64], strides = [1, 1]} : vector<16x192xf32> to vector<16x64xf32>
    %232 = vector.extract_strided_slice %222 {offsets = [0, 192], sizes = [16, 64], strides = [1, 1]} : vector<16x256xf32> to vector<16x64xf32>
    %233 = math.tanh %232 : vector<16x64xf32>
    %234 = arith.mulf %230, %191 : vector<16x64xf32>
    %235 = arith.mulf %229, %233 : vector<16x64xf32>
    %236 = arith.addf %234, %235 : vector<16x64xf32>
    %237 = math.tanh %236 : vector<16x64xf32>
    %238 = arith.mulf %231, %237 : vector<16x64xf32>
    %c5_i32 = arith.constant 5 : i32
    %c16_i32_43 = arith.constant 16 : i32
    %239 = arith.muli %c5_i32, %c16_i32_43 : i32
    %240 = tpu.assume_multiple %239, 16 : i32
    %241 = arith.index_cast %240 : i32 to index
    %c0_44 = arith.constant 0 : index
    %242 = vector.load %arg9[%241, %c0_44] : memref<128x256xbf16, #tpu.memory_space<vmem>>, vector<16x256xbf16>
    %243 = arith.extf %242 : vector<16x256xbf16> to vector<16x256xf32>
    %244 = arith.addf %243, %9 : vector<16x256xf32>
    %245 = arith.truncf %218 : vector<16x64xf32> to vector<16x64xbf16>
    %cst_45 = arith.constant dense<0.000000e+00> : vector<16x256xf32>
    %246 = tpu.matmul %245, %5, %cst_45 {dimension_numbers = #tpu.dot_dimension_numbers<[1], [0], [0], [1], [0, 0, 1, 1], [], []>} : vector<16x64xbf16>, vector<64x256xbf16>, vector<16x256xf32> -> vector<16x256xf32>
    %247 = arith.addf %244, %246 : vector<16x256xf32>
    %248 = vector.extract_strided_slice %247 {offsets = [0, 0], sizes = [16, 192], strides = [1, 1]} : vector<16x256xf32> to vector<16x192xf32>
    %249 = arith.negf %248 : vector<16x192xf32>
    %250 = math.exp %249 : vector<16x192xf32>
    %cst_46 = arith.constant 1.000000e+00 : f32
    %251 = vector.broadcast %cst_46 : f32 to vector<16x192xf32>
    %252 = arith.addf %251, %250 : vector<16x192xf32>
    %253 = arith.divf %251, %252 : vector<16x192xf32>
    %254 = vector.extract_strided_slice %253 {offsets = [0, 0], sizes = [16, 64], strides = [1, 1]} : vector<16x192xf32> to vector<16x64xf32>
    %255 = vector.extract_strided_slice %253 {offsets = [0, 64], sizes = [16, 64], strides = [1, 1]} : vector<16x192xf32> to vector<16x64xf32>
    %256 = vector.extract_strided_slice %253 {offsets = [0, 128], sizes = [16, 64], strides = [1, 1]} : vector<16x192xf32> to vector<16x64xf32>
    %257 = vector.extract_strided_slice %247 {offsets = [0, 192], sizes = [16, 64], strides = [1, 1]} : vector<16x256xf32> to vector<16x64xf32>
    %258 = math.tanh %257 : vector<16x64xf32>
    %259 = arith.mulf %255, %216 : vector<16x64xf32>
    %260 = arith.mulf %254, %258 : vector<16x64xf32>
    %261 = arith.addf %259, %260 : vector<16x64xf32>
    %262 = math.tanh %261 : vector<16x64xf32>
    %263 = arith.mulf %256, %262 : vector<16x64xf32>
    %264 = tpu.concatenate %263, %238 in 1 : vector<16x64xf32>, vector<16x64xf32> -> vector<16x128xf32>
    %265 = arith.truncf %264 : vector<16x128xf32> to vector<16x128xbf16>
    %cst_47 = arith.constant dense<0.000000e+00> : vector<16x256xf32>
    %266 = tpu.matmul %265, %6, %cst_47 {dimension_numbers = #tpu.dot_dimension_numbers<[1], [0], [0], [1], [0, 0, 1, 1], [], []>} : vector<16x128xbf16>, vector<128x256xbf16>, vector<16x256xf32> -> vector<16x256xf32>
    %267 = arith.addf %266, %12 : vector<16x256xf32>
    %268 = vector.extract_strided_slice %267 {offsets = [0, 0], sizes = [16, 192], strides = [1, 1]} : vector<16x256xf32> to vector<16x192xf32>
    %269 = arith.negf %268 : vector<16x192xf32>
    %270 = math.exp %269 : vector<16x192xf32>
    %cst_48 = arith.constant 1.000000e+00 : f32
    %271 = vector.broadcast %cst_48 : f32 to vector<16x192xf32>
    %272 = arith.addf %271, %270 : vector<16x192xf32>
    %273 = arith.divf %271, %272 : vector<16x192xf32>
    %274 = vector.extract_strided_slice %273 {offsets = [0, 0], sizes = [16, 64], strides = [1, 1]} : vector<16x192xf32> to vector<16x64xf32>
    %275 = vector.extract_strided_slice %273 {offsets = [0, 64], sizes = [16, 64], strides = [1, 1]} : vector<16x192xf32> to vector<16x64xf32>
    %276 = vector.extract_strided_slice %273 {offsets = [0, 128], sizes = [16, 64], strides = [1, 1]} : vector<16x192xf32> to vector<16x64xf32>
    %277 = vector.extract_strided_slice %267 {offsets = [0, 192], sizes = [16, 64], strides = [1, 1]} : vector<16x256xf32> to vector<16x64xf32>
    %278 = math.tanh %277 : vector<16x64xf32>
    %279 = arith.mulf %275, %236 : vector<16x64xf32>
    %280 = arith.mulf %274, %278 : vector<16x64xf32>
    %281 = arith.addf %279, %280 : vector<16x64xf32>
    %282 = math.tanh %281 : vector<16x64xf32>
    %283 = arith.mulf %276, %282 : vector<16x64xf32>
    %c6_i32 = arith.constant 6 : i32
    %c16_i32_49 = arith.constant 16 : i32
    %284 = arith.muli %c6_i32, %c16_i32_49 : i32
    %285 = tpu.assume_multiple %284, 16 : i32
    %286 = arith.index_cast %285 : i32 to index
    %c0_50 = arith.constant 0 : index
    %287 = vector.load %arg9[%286, %c0_50] : memref<128x256xbf16, #tpu.memory_space<vmem>>, vector<16x256xbf16>
    %288 = arith.extf %287 : vector<16x256xbf16> to vector<16x256xf32>
    %289 = arith.addf %288, %9 : vector<16x256xf32>
    %290 = arith.truncf %263 : vector<16x64xf32> to vector<16x64xbf16>
    %cst_51 = arith.constant dense<0.000000e+00> : vector<16x256xf32>
    %291 = tpu.matmul %290, %5, %cst_51 {dimension_numbers = #tpu.dot_dimension_numbers<[1], [0], [0], [1], [0, 0, 1, 1], [], []>} : vector<16x64xbf16>, vector<64x256xbf16>, vector<16x256xf32> -> vector<16x256xf32>
    %292 = arith.addf %289, %291 : vector<16x256xf32>
    %293 = vector.extract_strided_slice %292 {offsets = [0, 0], sizes = [16, 192], strides = [1, 1]} : vector<16x256xf32> to vector<16x192xf32>
    %294 = arith.negf %293 : vector<16x192xf32>
    %295 = math.exp %294 : vector<16x192xf32>
    %cst_52 = arith.constant 1.000000e+00 : f32
    %296 = vector.broadcast %cst_52 : f32 to vector<16x192xf32>
    %297 = arith.addf %296, %295 : vector<16x192xf32>
    %298 = arith.divf %296, %297 : vector<16x192xf32>
    %299 = vector.extract_strided_slice %298 {offsets = [0, 0], sizes = [16, 64], strides = [1, 1]} : vector<16x192xf32> to vector<16x64xf32>
    %300 = vector.extract_strided_slice %298 {offsets = [0, 64], sizes = [16, 64], strides = [1, 1]} : vector<16x192xf32> to vector<16x64xf32>
    %301 = vector.extract_strided_slice %298 {offsets = [0, 128], sizes = [16, 64], strides = [1, 1]} : vector<16x192xf32> to vector<16x64xf32>
    %302 = vector.extract_strided_slice %292 {offsets = [0, 192], sizes = [16, 64], strides = [1, 1]} : vector<16x256xf32> to vector<16x64xf32>
    %303 = math.tanh %302 : vector<16x64xf32>
    %304 = arith.mulf %300, %261 : vector<16x64xf32>
    %305 = arith.mulf %299, %303 : vector<16x64xf32>
    %306 = arith.addf %304, %305 : vector<16x64xf32>
    %307 = math.tanh %306 : vector<16x64xf32>
    %308 = arith.mulf %301, %307 : vector<16x64xf32>
    %309 = tpu.concatenate %308, %283 in 1 : vector<16x64xf32>, vector<16x64xf32> -> vector<16x128xf32>
    %310 = arith.truncf %309 : vector<16x128xf32> to vector<16x128xbf16>
    %cst_53 = arith.constant dense<0.000000e+00> : vector<16x256xf32>
    %311 = tpu.matmul %310, %6, %cst_53 {dimension_numbers = #tpu.dot_dimension_numbers<[1], [0], [0], [1], [0, 0, 1, 1], [], []>} : vector<16x128xbf16>, vector<128x256xbf16>, vector<16x256xf32> -> vector<16x256xf32>
    %312 = arith.addf %311, %12 : vector<16x256xf32>
    %313 = vector.extract_strided_slice %312 {offsets = [0, 0], sizes = [16, 192], strides = [1, 1]} : vector<16x256xf32> to vector<16x192xf32>
    %314 = arith.negf %313 : vector<16x192xf32>
    %315 = math.exp %314 : vector<16x192xf32>
    %cst_54 = arith.constant 1.000000e+00 : f32
    %316 = vector.broadcast %cst_54 : f32 to vector<16x192xf32>
    %317 = arith.addf %316, %315 : vector<16x192xf32>
    %318 = arith.divf %316, %317 : vector<16x192xf32>
    %319 = vector.extract_strided_slice %318 {offsets = [0, 0], sizes = [16, 64], strides = [1, 1]} : vector<16x192xf32> to vector<16x64xf32>
    %320 = vector.extract_strided_slice %318 {offsets = [0, 64], sizes = [16, 64], strides = [1, 1]} : vector<16x192xf32> to vector<16x64xf32>
    %321 = vector.extract_strided_slice %318 {offsets = [0, 128], sizes = [16, 64], strides = [1, 1]} : vector<16x192xf32> to vector<16x64xf32>
    %322 = vector.extract_strided_slice %312 {offsets = [0, 192], sizes = [16, 64], strides = [1, 1]} : vector<16x256xf32> to vector<16x64xf32>
    %323 = math.tanh %322 : vector<16x64xf32>
    %324 = arith.mulf %320, %281 : vector<16x64xf32>
    %325 = arith.mulf %319, %323 : vector<16x64xf32>
    %326 = arith.addf %324, %325 : vector<16x64xf32>
    %327 = math.tanh %326 : vector<16x64xf32>
    %328 = arith.mulf %321, %327 : vector<16x64xf32>
    %c7_i32 = arith.constant 7 : i32
    %c16_i32_55 = arith.constant 16 : i32
    %329 = arith.muli %c7_i32, %c16_i32_55 : i32
    %330 = tpu.assume_multiple %329, 16 : i32
    %331 = arith.index_cast %330 : i32 to index
    %c0_56 = arith.constant 0 : index
    %332 = vector.load %arg9[%331, %c0_56] : memref<128x256xbf16, #tpu.memory_space<vmem>>, vector<16x256xbf16>
    %333 = arith.extf %332 : vector<16x256xbf16> to vector<16x256xf32>
    %334 = arith.addf %333, %9 : vector<16x256xf32>
    %335 = arith.truncf %308 : vector<16x64xf32> to vector<16x64xbf16>
    %cst_57 = arith.constant dense<0.000000e+00> : vector<16x256xf32>
    %336 = tpu.matmul %335, %5, %cst_57 {dimension_numbers = #tpu.dot_dimension_numbers<[1], [0], [0], [1], [0, 0, 1, 1], [], []>} : vector<16x64xbf16>, vector<64x256xbf16>, vector<16x256xf32> -> vector<16x256xf32>
    %337 = arith.addf %334, %336 : vector<16x256xf32>
    %338 = vector.extract_strided_slice %337 {offsets = [0, 0], sizes = [16, 192], strides = [1, 1]} : vector<16x256xf32> to vector<16x192xf32>
    %339 = arith.negf %338 : vector<16x192xf32>
    %340 = math.exp %339 : vector<16x192xf32>
    %cst_58 = arith.constant 1.000000e+00 : f32
    %341 = vector.broadcast %cst_58 : f32 to vector<16x192xf32>
    %342 = arith.addf %341, %340 : vector<16x192xf32>
    %343 = arith.divf %341, %342 : vector<16x192xf32>
    %344 = vector.extract_strided_slice %343 {offsets = [0, 0], sizes = [16, 64], strides = [1, 1]} : vector<16x192xf32> to vector<16x64xf32>
    %345 = vector.extract_strided_slice %343 {offsets = [0, 64], sizes = [16, 64], strides = [1, 1]} : vector<16x192xf32> to vector<16x64xf32>
    %346 = vector.extract_strided_slice %343 {offsets = [0, 128], sizes = [16, 64], strides = [1, 1]} : vector<16x192xf32> to vector<16x64xf32>
    %347 = vector.extract_strided_slice %337 {offsets = [0, 192], sizes = [16, 64], strides = [1, 1]} : vector<16x256xf32> to vector<16x64xf32>
    %348 = math.tanh %347 : vector<16x64xf32>
    %349 = arith.mulf %345, %306 : vector<16x64xf32>
    %350 = arith.mulf %344, %348 : vector<16x64xf32>
    %351 = arith.addf %349, %350 : vector<16x64xf32>
    %352 = math.tanh %351 : vector<16x64xf32>
    %353 = arith.mulf %346, %352 : vector<16x64xf32>
    %354 = tpu.concatenate %353, %328 in 1 : vector<16x64xf32>, vector<16x64xf32> -> vector<16x128xf32>
    %355 = arith.truncf %354 : vector<16x128xf32> to vector<16x128xbf16>
    %cst_59 = arith.constant dense<0.000000e+00> : vector<16x256xf32>
    %356 = tpu.matmul %355, %6, %cst_59 {dimension_numbers = #tpu.dot_dimension_numbers<[1], [0], [0], [1], [0, 0, 1, 1], [], []>} : vector<16x128xbf16>, vector<128x256xbf16>, vector<16x256xf32> -> vector<16x256xf32>
    %357 = arith.addf %356, %12 : vector<16x256xf32>
    %358 = vector.extract_strided_slice %357 {offsets = [0, 0], sizes = [16, 192], strides = [1, 1]} : vector<16x256xf32> to vector<16x192xf32>
    %359 = arith.negf %358 : vector<16x192xf32>
    %360 = math.exp %359 : vector<16x192xf32>
    %cst_60 = arith.constant 1.000000e+00 : f32
    %361 = vector.broadcast %cst_60 : f32 to vector<16x192xf32>
    %362 = arith.addf %361, %360 : vector<16x192xf32>
    %363 = arith.divf %361, %362 : vector<16x192xf32>
    %364 = vector.extract_strided_slice %363 {offsets = [0, 0], sizes = [16, 64], strides = [1, 1]} : vector<16x192xf32> to vector<16x64xf32>
    %365 = vector.extract_strided_slice %363 {offsets = [0, 64], sizes = [16, 64], strides = [1, 1]} : vector<16x192xf32> to vector<16x64xf32>
    %366 = vector.extract_strided_slice %363 {offsets = [0, 128], sizes = [16, 64], strides = [1, 1]} : vector<16x192xf32> to vector<16x64xf32>
    %367 = vector.extract_strided_slice %357 {offsets = [0, 192], sizes = [16, 64], strides = [1, 1]} : vector<16x256xf32> to vector<16x64xf32>
    %368 = math.tanh %367 : vector<16x64xf32>
    %369 = arith.mulf %365, %326 : vector<16x64xf32>
    %370 = arith.mulf %364, %368 : vector<16x64xf32>
    %371 = arith.addf %369, %370 : vector<16x64xf32>
    %372 = math.tanh %371 : vector<16x64xf32>
    %373 = arith.mulf %366, %372 : vector<16x64xf32>
    %c8_i32 = arith.constant 8 : i32
    %374 = arith.truncf %373 : vector<16x64xf32> to vector<16x64xbf16>
    %c0_61 = arith.constant 0 : index
    %c0_62 = arith.constant 0 : index
    %375 = vector.load %arg6[%c0_61, %c0_62] : memref<64x128xbf16, #tpu.memory_space<vmem>>, vector<64x128xbf16>
    %cst_63 = arith.constant dense<0.000000e+00> : vector<16x128xf32>
    %376 = tpu.matmul %374, %375, %cst_63 {dimension_numbers = #tpu.dot_dimension_numbers<[1], [0], [0], [1], [0, 0, 1, 1], [], []>} : vector<16x64xbf16>, vector<64x128xbf16>, vector<16x128xf32> -> vector<16x128xf32>
    %c0_64 = arith.constant 0 : index
    %c0_65 = arith.constant 0 : index
    %377 = vector.load %arg7[%c0_64, %c0_65] : memref<1x128xf32, #tpu.memory_space<vmem>>, vector<1x128xf32>
    %378 = vector.broadcast %377 : vector<1x128xf32> to vector<16x128xf32>
    %379 = arith.addf %376, %378 : vector<16x128xf32>
    %c0_66 = arith.constant 0 : index
    %c0_67 = arith.constant 0 : index
    %380 = vector.load %arg8[%c0_66, %c0_67] : memref<16x128xf32, #tpu.memory_space<vmem>>, vector<16x128xf32>
    tpu.vector_store %arg8[%c0_66, %c0_67], %379 {strides = array<i32>} : memref<16x128xf32, #tpu.memory_space<vmem>>, vector<16x128xf32>,
    return
  }
}

</mosaic_0001>

<llo_original>
// kernel: lstm_classifier_forward.1
$region0: #{lstm_classifier_forward.1}
  #allocation0 [shape = 'u32[]', space=smem, size = 0x4, offset = 0x4, fixed_abs, tag = 'smem constant byte address 0x4 - core index']
  #allocation1 [shape = 'u32[72,128]{1,0:T(1,128)}', space=vmem, size = 0x9000, scoped, tag = 'internal scratch']
  #allocation2 [shape = 'bf16[128,256]{1,0:T(8,128)(2,1)}', space=vmem, size = 0x10000, scoped, tag = 'scratch operand']
  %s0 = inlined_call_operand.vmem [shape: bf16[128,128], index: 0, kind: input, shape index: {}]
  %s1 = inlined_call_operand.vmem [shape: bf16[128,256], index: 1, kind: input, shape index: {}]
  %s2 = inlined_call_operand.vmem [shape: bf16[64,256], index: 2, kind: input, shape index: {}]
  %s3 = inlined_call_operand.vmem [shape: f32[1,256], index: 3, kind: input, shape index: {}]
  %s4 = inlined_call_operand.vmem [shape: bf16[128,256], index: 4, kind: input, shape index: {}]
  %s5 = inlined_call_operand.vmem [shape: f32[1,256], index: 5, kind: input, shape index: {}]
  %s6 = inlined_call_operand.vmem [shape: bf16[64,128], index: 6, kind: input, shape index: {}]
  %s7 = inlined_call_operand.vmem [shape: f32[1,128], index: 7, kind: input, shape index: {}]
  %s8 = inlined_call_operand.vmem [shape: f32[16,128], index: 8, kind: output, shape index: {}]
  %s9 = sld [smem:[#allocation0]]
  $region42: #{lstm_classifier_forward.1} parent=0
    _
  %s11 = ssub.s32 1, %s9
  %s12 = scalar_select 0, %s11, %s9
  // Predicated region
  $region2: #{lstm_classifier_forward.1} parent=0 // pred_check
    _
  $region3: #{lstm_classifier_forward.1} parent=0 // pred_check_branch
    %14 = sbr.rel (0) target = $region5
  $region4: #{lstm_classifier_forward.1} parent=0 // pred_region
    _
  $region5: #{lstm_classifier_forward.1} parent=0 // pred_fallthru
    _
  // Predicated region
  $region6: #{lstm_classifier_forward.1} parent=0 // pred_check
    _
  $region7: #{lstm_classifier_forward.1} parent=0 // pred_check_branch
    %16 = sbr.rel (0) target = $region9
  $region8: #{lstm_classifier_forward.1} parent=0 // pred_region
    _
  $region9: #{lstm_classifier_forward.1} parent=0 // pred_fallthru
    _
  // Predicated region
  $region10: #{lstm_classifier_forward.1} parent=0 // pred_check
    _
  $region11: #{lstm_classifier_forward.1} parent=0 // pred_check_branch
    %18 = sbr.rel (0) target = $region13
  $region12: #{lstm_classifier_forward.1} parent=0 // pred_region
    _
  $region13: #{lstm_classifier_forward.1} parent=0 // pred_fallthru
    _
  // Predicated region
  $region14: #{lstm_classifier_forward.1} parent=0 // pred_check
    _
  $region15: #{lstm_classifier_forward.1} parent=0 // pred_check_branch
    %20 = sbr.rel (0) target = $region17
  $region16: #{lstm_classifier_forward.1} parent=0 // pred_region
    _
  $region17: #{lstm_classifier_forward.1} parent=0 // pred_fallthru
    _
  // Predicated region
  $region18: #{lstm_classifier_forward.1} parent=0 // pred_check
    _
  $region19: #{lstm_classifier_forward.1} parent=0 // pred_check_branch
    %22 = sbr.rel (0) target = $region21
  $region20: #{lstm_classifier_forward.1} parent=0 // pred_region
    _
  $region21: #{lstm_classifier_forward.1} parent=0 // pred_fallthru
    _
  // Predicated region
  $region22: #{lstm_classifier_forward.1} parent=0 // pred_check
    _
  $region23: #{lstm_classifier_forward.1} parent=0 // pred_check_branch
    %24 = sbr.rel (0) target = $region25
  $region24: #{lstm_classifier_forward.1} parent=0 // pred_region
    _
  $region25: #{lstm_classifier_forward.1} parent=0 // pred_fallthru
    _
  // Predicated region
  $region26: #{lstm_classifier_forward.1} parent=0 // pred_check
    _
  $region27: #{lstm_classifier_forward.1} parent=0 // pred_check_branch
    %26 = sbr.rel (0) target = $region29
  $region28: #{lstm_classifier_forward.1} parent=0 // pred_region
    _
  $region29: #{lstm_classifier_forward.1} parent=0 // pred_fallthru
    _
  // Predicated region
  $region30: #{lstm_classifier_forward.1} parent=0 // pred_check
    _
  $region31: #{lstm_classifier_forward.1} parent=0 // pred_check_branch
    %28 = sbr.rel (0) target = $region33
  $region32: #{lstm_classifier_forward.1} parent=0 // pred_region
    _
  $region33: #{lstm_classifier_forward.1} parent=0 // pred_fallthru
    _
  %v30 = vld [vmem:[%s0] sm:$0xf]
  %v31 = vld [vmem:[%s0 + $0x4] sm:$0xf]
  %v32 = vld [vmem:[%s0 + $0x8] sm:$0xf]
  %v33 = vld [vmem:[%s0 + $0xc] sm:$0xf]
  %v34 = vld [vmem:[%s0 + $0x10] sm:$0xf]
  %v35 = vld [vmem:[%s0 + $0x14] sm:$0xf]
  %v36 = vld [vmem:[%s0 + $0x18] sm:$0xf]
  %v37 = vld [vmem:[%s0 + $0x1c] sm:$0xf]
  %v38 = vld [vmem:[%s0 + $0x20] sm:$0xf]
  %v39 = vld [vmem:[%s0 + $0x24] sm:$0xf]
  %v40 = vld [vmem:[%s0 + $0x28] sm:$0xf]
  %v41 = vld [vmem:[%s0 + $0x2c] sm:$0xf]
  %v42 = vld [vmem:[%s0 + $0x30] sm:$0xf]
  %v43 = vld [vmem:[%s0 + $0x34] sm:$0xf]
  %v44 = vld [vmem:[%s0 + $0x38] sm:$0xf]
  %v45 = vld [vmem:[%s0 + $0x3c] sm:$0xf]
  %v46 = vld [vmem:[%s1] sm:$0xff]
  %v47 = vld [vmem:[%s1 + $0x8] sm:$0xff]
  %v48 = vld [vmem:[%s1 + $0x10] sm:$0xff]
  %v49 = vld [vmem:[%s1 + $0x18] sm:$0xff]
  %v50 = vld [vmem:[%s1 + $0x20] sm:$0xff]
  %v51 = vld [vmem:[%s1 + $0x28] sm:$0xff]
  %v52 = vld [vmem:[%s1 + $0x30] sm:$0xff]
  %v53 = vld [vmem:[%s1 + $0x38] sm:$0xff]
  %v54 = vld [vmem:[%s1 + $0x40] sm:$0xff]
  %v55 = vld [vmem:[%s1 + $0x48] sm:$0xff]
  %v56 = vld [vmem:[%s1 + $0x50] sm:$0xff]
  %v57 = vld [vmem:[%s1 + $0x58] sm:$0xff]
  %v58 = vld [vmem:[%s1 + $0x60] sm:$0xff]
  %v59 = vld [vmem:[%s1 + $0x68] sm:$0xff]
  %v60 = vld [vmem:[%s1 + $0x70] sm:$0xff]
  %v61 = vld [vmem:[%s1 + $0x78] sm:$0xff]
  %v78 = vunpack.c.l.b16 %v30
  %v79 = vunpack.c.l.b16 %v31
  %v80 = vunpack.c.l.b16 %v32
  %v81 = vunpack.c.l.b16 %v33
  %v82 = vunpack.c.l.b16 %v34
  %v83 = vunpack.c.l.b16 %v35
  %v84 = vunpack.c.l.b16 %v36
  %v85 = vunpack.c.l.b16 %v37
  %v86 = vunpack.c.l.b16 %v38
  %v87 = vunpack.c.l.b16 %v39
  %v88 = vunpack.c.l.b16 %v40
  %v89 = vunpack.c.l.b16 %v41
  %v90 = vunpack.c.l.b16 %v42
  %v91 = vunpack.c.l.b16 %v43
  %v92 = vunpack.c.l.b16 %v44
  %v93 = vunpack.c.l.b16 %v45
  %v94 = vpack.c.b16 %v79, %v78
  %v95 = vpack.c.b16 %v81, %v80
  %v96 = vpack.c.b16 %v83, %v82
  %v97 = vpack.c.b16 %v85, %v84
  %v98 = vpack.c.b16 %v87, %v86
  %v99 = vpack.c.b16 %v89, %v88
  %v100 = vpack.c.b16 %v91, %v90
  %v101 = vpack.c.b16 %v93, %v92
  %v126 = vunpack.c.l.b16 %v46
  %v127 = vunpack.c.h.b16 %v46
  %v128 = vunpack.c.l.b16 %v47
  %v129 = vunpack.c.h.b16 %v47
  %v130 = vunpack.c.l.b16 %v48
  %v131 = vunpack.c.h.b16 %v48
  %v132 = vunpack.c.l.b16 %v49
  %v133 = vunpack.c.h.b16 %v49
  %v134 = vunpack.c.l.b16 %v50
  %v135 = vunpack.c.h.b16 %v50
  %v136 = vunpack.c.l.b16 %v51
  %v137 = vunpack.c.h.b16 %v51
  %v138 = vunpack.c.l.b16 %v52
  %v139 = vunpack.c.h.b16 %v52
  %v140 = vunpack.c.l.b16 %v53
  %v141 = vunpack.c.h.b16 %v53
  %v142 = vunpack.c.l.b16 %v54
  %v143 = vunpack.c.h.b16 %v54
  %v144 = vunpack.c.l.b16 %v55
  %v145 = vunpack.c.h.b16 %v55
  %v146 = vunpack.c.l.b16 %v56
  %v147 = vunpack.c.h.b16 %v56
  %v148 = vunpack.c.l.b16 %v57
  %v149 = vunpack.c.h.b16 %v57
  %v150 = vunpack.c.l.b16 %v58
  %v151 = vunpack.c.h.b16 %v58
  %v152 = vunpack.c.l.b16 %v59
  %v153 = vunpack.c.h.b16 %v59
  %v154 = vunpack.c.l.b16 %v60
  %v155 = vunpack.c.h.b16 %v60
  %v156 = vunpack.c.l.b16 %v61
  %v157 = vunpack.c.h.b16 %v61
  %v158 = vpack.c.b16 %v128, %v126
  %v159 = vpack.c.b16 %v129, %v127
  %v160 = vpack.c.b16 %v132, %v130
  %v161 = vpack.c.b16 %v133, %v131
  %v162 = vpack.c.b16 %v136, %v134
  %v163 = vpack.c.b16 %v137, %v135
  %v164 = vpack.c.b16 %v140, %v138
  %v165 = vpack.c.b16 %v141, %v139
  %v166 = vpack.c.b16 %v144, %v142
  %v167 = vpack.c.b16 %v145, %v143
  %v168 = vpack.c.b16 %v148, %v146
  %v169 = vpack.c.b16 %v149, %v147
  %v170 = vpack.c.b16 %v152, %v150
  %v171 = vpack.c.b16 %v153, %v151
  %v172 = vpack.c.b16 %v156, %v154
  %v173 = vpack.c.b16 %v157, %v155
  %190 = vmatpush.bf16.msra.mxu0 %v172
  %191 = vmatpush.bf16.msra.mxu0 %v170
  %192 = vmatpush.bf16.msra.mxu0 %v168
  %193 = vmatpush.bf16.msra.mxu0 %v166
  %194 = vmatpush.bf16.msra.mxu0 %v164
  %195 = vmatpush.bf16.msra.mxu0 %v162
  %196 = vmatpush.bf16.msra.mxu0 %v160
  %197 = vmatpush.bf16.msra.mxu0 %v158
  %198 = vmatmul.bf16.gmra.mxu0 %v94
  %v199 = vpop.f32.mrf.mxu0
  %v200 = vadd.f32 0.0, %v199
  %v201 = vpop.f32.mrf.mxu0
  %v202 = vadd.f32 0.0, %v201
  %203 = vmatmul.bf16.gmra.mxu0 %v95
  %v204 = vpop.f32.mrf.mxu0
  %v205 = vadd.f32 0.0, %v204
  %v206 = vpop.f32.mrf.mxu0
  %v207 = vadd.f32 0.0, %v206
  %208 = vmatmul.bf16.gmra.mxu0 %v96
  %v209 = vpop.f32.mrf.mxu0
  %v210 = vadd.f32 0.0, %v209
  %v211 = vpop.f32.mrf.mxu0
  %v212 = vadd.f32 0.0, %v211
  %213 = vmatmul.bf16.gmra.mxu0 %v97
  %v214 = vpop.f32.mrf.mxu0
  %v215 = vadd.f32 0.0, %v214
  %v216 = vpop.f32.mrf.mxu0
  %v217 = vadd.f32 0.0, %v216
  %218 = vmatmul.bf16.gmra.mxu0 %v98
  %v219 = vpop.f32.mrf.mxu0
  %v220 = vadd.f32 0.0, %v219
  %v221 = vpop.f32.mrf.mxu0
  %v222 = vadd.f32 0.0, %v221
  %223 = vmatmul.bf16.gmra.mxu0 %v99
  %v224 = vpop.f32.mrf.mxu0
  %v225 = vadd.f32 0.0, %v224
  %v226 = vpop.f32.mrf.mxu0
  %v227 = vadd.f32 0.0, %v226
  %228 = vmatmul.bf16.gmra.mxu0 %v100
  %v229 = vpop.f32.mrf.mxu0
  %v230 = vadd.f32 0.0, %v229
  %v231 = vpop.f32.mrf.mxu0
  %v232 = vadd.f32 0.0, %v231
  %233 = vmatmul.bf16.gmra.mxu0 %v101
  %v234 = vpop.f32.mrf.mxu0
  %v235 = vadd.f32 0.0, %v234
  %v236 = vpop.f32.mrf.mxu0
  %v237 = vadd.f32 0.0, %v236
  %238 = vdwg.mxu0
  %239 = vmatpush.bf16.msra.mxu0 %v173
  %240 = vmatpush.bf16.msra.mxu0 %v171
  %241 = vmatpush.bf16.msra.mxu0 %v169
  %242 = vmatpush.bf16.msra.mxu0 %v167
  %243 = vmatpush.bf16.msra.mxu0 %v165
  %244 = vmatpush.bf16.msra.mxu0 %v163
  %245 = vmatpush.bf16.msra.mxu0 %v161
  %246 = vmatpush.bf16.msra.mxu0 %v159
  %247 = vmatmul.bf16.gmra.mxu0 %v94
  %v248 = vpop.f32.mrf.mxu0
  %v249 = vadd.f32 0.0, %v248
  %v250 = vpop.f32.mrf.mxu0
  %v251 = vadd.f32 0.0, %v250
  %252 = vmatmul.bf16.gmra.mxu0 %v95
  %v253 = vpop.f32.mrf.mxu0
  %v254 = vadd.f32 0.0, %v253
  %v255 = vpop.f32.mrf.mxu0
  %v256 = vadd.f32 0.0, %v255
  %257 = vmatmul.bf16.gmra.mxu0 %v96
  %v258 = vpop.f32.mrf.mxu0
  %v259 = vadd.f32 0.0, %v258
  %v260 = vpop.f32.mrf.mxu0
  %v261 = vadd.f32 0.0, %v260
  %262 = vmatmul.bf16.gmra.mxu0 %v97
  %v263 = vpop.f32.mrf.mxu0
  %v264 = vadd.f32 0.0, %v263
  %v265 = vpop.f32.mrf.mxu0
  %v266 = vadd.f32 0.0, %v265
  %267 = vmatmul.bf16.gmra.mxu0 %v98
  %v268 = vpop.f32.mrf.mxu0
  %v269 = vadd.f32 0.0, %v268
  %v270 = vpop.f32.mrf.mxu0
  %v271 = vadd.f32 0.0, %v270
  %272 = vmatmul.bf16.gmra.mxu0 %v99
  %v273 = vpop.f32.mrf.mxu0
  %v274 = vadd.f32 0.0, %v273
  %v275 = vpop.f32.mrf.mxu0
  %v276 = vadd.f32 0.0, %v275
  %277 = vmatmul.bf16.gmra.mxu0 %v100
  %v278 = vpop.f32.mrf.mxu0
  %v279 = vadd.f32 0.0, %v278
  %v280 = vpop.f32.mrf.mxu0
  %v281 = vadd.f32 0.0, %v280
  %282 = vmatmul.bf16.gmra.mxu0 %v101
  %v283 = vpop.f32.mrf.mxu0
  %v284 = vadd.f32 0.0, %v283
  %v285 = vpop.f32.mrf.mxu0
  %v286 = vadd.f32 0.0, %v285
  %287 = vdwg.mxu0
  %v288 = vpack.c.bf16 %v249, %v200
  %v289 = vpack.c.bf16 %v251, %v202
  %v290 = vpack.c.bf16 %v254, %v205
  %v291 = vpack.c.bf16 %v256, %v207
  %v292 = vpack.c.bf16 %v259, %v210
  %v293 = vpack.c.bf16 %v261, %v212
  %v294 = vpack.c.bf16 %v264, %v215
  %v295 = vpack.c.bf16 %v266, %v217
  %v296 = vpack.c.bf16 %v269, %v220
  %v297 = vpack.c.bf16 %v271, %v222
  %v298 = vpack.c.bf16 %v274, %v225
  %v299 = vpack.c.bf16 %v276, %v227
  %v300 = vpack.c.bf16 %v279, %v230
  %v301 = vpack.c.bf16 %v281, %v232
  %v302 = vpack.c.bf16 %v284, %v235
  %v303 = vpack.c.bf16 %v286, %v237
  %304 = vst [vmem:[#allocation2] sm:$0xff] %v288
  %305 = vst [vmem:[#allocation2 + $0x8] sm:$0xff] %v289
  %306 = vst [vmem:[#allocation2 + $0x10] sm:$0xff] %v290
  %307 = vst [vmem:[#allocation2 + $0x18] sm:$0xff] %v291
  %308 = vst [vmem:[#allocation2 + $0x20] sm:$0xff] %v292
  %309 = vst [vmem:[#allocation2 + $0x28] sm:$0xff] %v293
  %310 = vst [vmem:[#allocation2 + $0x30] sm:$0xff] %v294
  %311 = vst [vmem:[#allocation2 + $0x38] sm:$0xff] %v295
  %312 = vst [vmem:[#allocation2 + $0x40] sm:$0xff] %v296
  %313 = vst [vmem:[#allocation2 + $0x48] sm:$0xff] %v297
  %314 = vst [vmem:[#allocation2 + $0x50] sm:$0xff] %v298
  %315 = vst [vmem:[#allocation2 + $0x58] sm:$0xff] %v299
  %316 = vst [vmem:[#allocation2 + $0x60] sm:$0xff] %v300
  %317 = vst [vmem:[#allocation2 + $0x68] sm:$0xff] %v301
  %318 = vst [vmem:[#allocation2 + $0x70] sm:$0xff] %v302
  %319 = vst [vmem:[#allocation2 + $0x78] sm:$0xff] %v303
  %v320 = vld [vmem:[%s2] sm:$0xff]
  %v321 = vld [vmem:[%s2 + $0x8] sm:$0xff]
  %v322 = vld [vmem:[%s2 + $0x10] sm:$0xff]
  %v323 = vld [vmem:[%s2 + $0x18] sm:$0xff]
  %v324 = vld [vmem:[%s2 + $0x20] sm:$0xff]
  %v325 = vld [vmem:[%s2 + $0x28] sm:$0xff]
  %v326 = vld [vmem:[%s2 + $0x30] sm:$0xff]
  %v327 = vld [vmem:[%s2 + $0x38] sm:$0xff]
  %v328 = vld [vmem:[%s4] sm:$0xff]
  %v329 = vld [vmem:[%s4 + $0x8] sm:$0xff]
  %v330 = vld [vmem:[%s4 + $0x10] sm:$0xff]
  %v331 = vld [vmem:[%s4 + $0x18] sm:$0xff]
  %v332 = vld [vmem:[%s4 + $0x20] sm:$0xff]
  %v333 = vld [vmem:[%s4 + $0x28] sm:$0xff]
  %v334 = vld [vmem:[%s4 + $0x30] sm:$0xff]
  %v335 = vld [vmem:[%s4 + $0x38] sm:$0xff]
  %v336 = vld [vmem:[%s4 + $0x40] sm:$0xff]
  %v337 = vld [vmem:[%s4 + $0x48] sm:$0xff]
  %v338 = vld [vmem:[%s4 + $0x50] sm:$0xff]
  %v339 = vld [vmem:[%s4 + $0x58] sm:$0xff]
  %v340 = vld [vmem:[%s4 + $0x60] sm:$0xff]
  %v341 = vld [vmem:[%s4 + $0x68] sm:$0xff]
  %v342 = vld [vmem:[%s4 + $0x70] sm:$0xff]
  %v343 = vld [vmem:[%s4 + $0x78] sm:$0xff]
  %v344 = vld [vmem:[%s3] sm:$0x3]
  %v346 = vperm.slane %v344, 0
  %v347 = vperm.slane %v344, 1
  %v350 = vld [vmem:[%s5] sm:$0x3]
  %v352 = vperm.slane %v350, 0
  %v353 = vperm.slane %v350, 1
  %s356 = smul.u32 0, 2
  %s357 = smul.addr %s356, 4
  %s358 = scalar_lea.vmem [#allocation2], %s357
  %v359 = vld [vmem:[%s358] sm:$0xff]
  %v360 = vld [vmem:[%s358 + $0x8] sm:$0xff]
  %v361 = vunpack.c.l.bf16 %v359
  %v362 = vunpack.c.h.bf16 %v359
  %v363 = vunpack.c.l.bf16 %v360
  %v364 = vunpack.c.h.bf16 %v360
  %v365 = vadd.f32 %v361, %v346
  %v366 = vadd.f32 %v362, %v347
  %v367 = vadd.f32 %v363, %v346
  %v368 = vadd.f32 %v364, %v347
  %v377 = vunpack.c.l.b16 %v320
  %v378 = vunpack.c.h.b16 %v320
  %v379 = vunpack.c.l.b16 %v321
  %v380 = vunpack.c.h.b16 %v321
  %v381 = vunpack.c.l.b16 %v322
  %v382 = vunpack.c.h.b16 %v322
  %v383 = vunpack.c.l.b16 %v323
  %v384 = vunpack.c.h.b16 %v323
  %v385 = vunpack.c.l.b16 %v324
  %v386 = vunpack.c.h.b16 %v324
  %v387 = vunpack.c.l.b16 %v325
  %v388 = vunpack.c.h.b16 %v325
  %v389 = vunpack.c.l.b16 %v326
  %v390 = vunpack.c.h.b16 %v326
  %v391 = vunpack.c.l.b16 %v327
  %v392 = vunpack.c.h.b16 %v327
  %v393 = vpack.c.b16 %v379, %v377
  %v394 = vpack.c.b16 %v380, %v378
  %v395 = vpack.c.b16 %v383, %v381
  %v396 = vpack.c.b16 %v384, %v382
  %v397 = vpack.c.b16 %v387, %v385
  %v398 = vpack.c.b16 %v388, %v386
  %v399 = vpack.c.b16 %v391, %v389
  %v400 = vpack.c.b16 %v392, %v390
  %vm409 = vcmask 523264
  %v411 = vsel %vm409, 0, 0
  %413 = vmatpush.bf16.msra.mxu0 0
  %414 = vmatpush.bf16.msra.mxu0 0
  %415 = vmatpush.bf16.msra.mxu0 0
  %416 = vmatpush.bf16.msra.mxu0 0
  %417 = vmatpush.bf16.msra.mxu0 %v399
  %418 = vmatpush.bf16.msra.mxu0 %v397
  %419 = vmatpush.bf16.msra.mxu0 %v395
  %420 = vmatpush.bf16.msra.mxu0 %v393
  %421 = vmatmul.bf16.gmra.mxu0 %v411
  %v422 = vpop.f32.mrf.mxu0
  %v423 = vadd.f32 0.0, %v422
  %v424 = vpop.f32.mrf.mxu0
  %v425 = vadd.f32 0.0, %v424
  %426 = vdwg.mxu0
  %427 = vmatpush.bf16.msra.mxu0 0
  %428 = vmatpush.bf16.msra.mxu0 0
  %429 = vmatpush.bf16.msra.mxu0 0
  %430 = vmatpush.bf16.msra.mxu0 0
  %431 = vmatpush.bf16.msra.mxu0 %v400
  %432 = vmatpush.bf16.msra.mxu0 %v398
  %433 = vmatpush.bf16.msra.mxu0 %v396
  %434 = vmatpush.bf16.msra.mxu0 %v394
  %435 = vmatmul.bf16.gmra.mxu0 %v411
  %v436 = vpop.f32.mrf.mxu0
  %v437 = vadd.f32 0.0, %v436
  %v438 = vpop.f32.mrf.mxu0
  %v439 = vadd.f32 0.0, %v438
  %440 = vdwg.mxu0
  %v441 = vadd.f32 %v365, %v423
  %v442 = vadd.f32 %v366, %v437
  %v443 = vadd.f32 %v367, %v425
  %v444 = vadd.f32 %v368, %v439
  %v445 = vxor.u32 %v441, 2147483648
  %v446 = vxor.u32 %v442, 2147483648
  %v447 = vxor.u32 %v443, 2147483648
  %v448 = vxor.u32 %v444, 2147483648
  %v449 = vmul.f32 %v445, 1.442695
  %v450 = vpow.pop %v449
  %v451 = vmul.f32 %v446, 1.442695
  %v452 = vpow.pop %v451
  %v453 = vmul.f32 %v447, 1.442695
  %v454 = vpow.pop %v453
  %v455 = vmul.f32 %v448, 1.442695
  %v456 = vpow.pop %v455
  %v457 = vadd.f32 %v450, 1.0
  %v458 = vadd.f32 %v452, 1.0
  %v459 = vadd.f32 %v454, 1.0
  %v460 = vadd.f32 %v456, 1.0
  %v461 = vrcp.pop %v457
  %v462 = vmul.f32 %v457, %v461
  %v463 = vsub.f32 1.0, %v462
  %v464 = vmul.f32 %v461, %v463
  %v465 = vadd.f32 %v461, %v464
  %vm466 = vweird.f32 %v457
  %vm467 = vweird.f32 %v461
  %vm468 = vmor %vm466, %vm467
  %v469 = vsel %vm468, %v461, %v465
  %v470 = vand.u32 2147483647, %v457
  %vm471 = vcmp.eq.f32.partialorder %v470, 8.507059e+37
  %v472 = vand.u32 %v457, 2147483648
  %v473 = vor.u32 1.1754944e-38, %v472
  %v474 = vsel %vm471, %v473, %v469
  %v475 = vmul.f32 1.0, %v474
  %v476 = vrcp.pop %v458
  %v477 = vmul.f32 %v458, %v476
  %v478 = vsub.f32 1.0, %v477
  %v479 = vmul.f32 %v476, %v478
  %v480 = vadd.f32 %v476, %v479
  %vm481 = vweird.f32 %v458
  %vm482 = vweird.f32 %v476
  %vm483 = vmor %vm481, %vm482
  %v484 = vsel %vm483, %v476, %v480
  %v485 = vand.u32 2147483647, %v458
  %vm486 = vcmp.eq.f32.partialorder %v485, 8.507059e+37
  %v487 = vand.u32 %v458, 2147483648
  %v488 = vor.u32 1.1754944e-38, %v487
  %v489 = vsel %vm486, %v488, %v484
  %v490 = vmul.f32 1.0, %v489
  %v491 = vrcp.pop %v459
  %v492 = vmul.f32 %v459, %v491
  %v493 = vsub.f32 1.0, %v492
  %v494 = vmul.f32 %v491, %v493
  %v495 = vadd.f32 %v491, %v494
  %vm496 = vweird.f32 %v459
  %vm497 = vweird.f32 %v491
  %vm498 = vmor %vm496, %vm497
  %v499 = vsel %vm498, %v491, %v495
  %v500 = vand.u32 2147483647, %v459
  %vm501 = vcmp.eq.f32.partialorder %v500, 8.507059e+37
  %v502 = vand.u32 %v459, 2147483648
  %v503 = vor.u32 1.1754944e-38, %v502
  %v504 = vsel %vm501, %v503, %v499
  %v505 = vmul.f32 1.0, %v504
  %v506 = vrcp.pop %v460
  %v507 = vmul.f32 %v460, %v506
  %v508 = vsub.f32 1.0, %v507
  %v509 = vmul.f32 %v506, %v508
  %v510 = vadd.f32 %v506, %v509
  %vm511 = vweird.f32 %v460
  %vm512 = vweird.f32 %v506
  %vm513 = vmor %vm511, %vm512
  %v514 = vsel %vm513, %v506, %v510
  %v515 = vand.u32 2147483647, %v460
  %vm516 = vcmp.eq.f32.partialorder %v515, 8.507059e+37
  %v517 = vand.u32 %v460, 2147483648
  %v518 = vor.u32 1.1754944e-38, %v517
  %v519 = vsel %vm516, %v518, %v514
  %v520 = vmul.f32 1.0, %v519
  %v521 = vtanh.pop %v442
  %v522 = vtanh.pop %v444
  %v523 = vmul.f32 %v475, 0.0
  %v524 = vmul.f32 %v505, 0.0
  %527 = vrot.lane.b32.xlu0 %v521, 64
  %v528 = vpop.permute.xlu0 %527
  %529 = vrot.lane.b32.xlu0 %v522, 64
  %v530 = vpop.permute.xlu0 %529
  %v533 = vmul.f32 %v475, %v528
  %v534 = vmul.f32 %v505, %v530
  %537 = vrot.lane.b32.xlu0 %v533, 64
  %v538 = vpop.permute.xlu0 %537
  %539 = vrot.lane.b32.xlu0 %v534, 64
  %v540 = vpop.permute.xlu0 %539
  %v543 = vadd.f32 %v523, %v538
  %v544 = vadd.f32 %v524, %v540
  %v545 = vtanh.pop %v543
  %v546 = vtanh.pop %v544
  %549 = vrot.lane.b32.xlu0 %v545, 64
  %v550 = vpop.permute.xlu0 %549
  %551 = vrot.lane.b32.xlu0 %v546, 64
  %v552 = vpop.permute.xlu0 %551
  %v555 = vmul.f32 %v490, %v550
  %v556 = vmul.f32 %v520, %v552
  %v557 = vsel %vm409, %v555, 0.0
  %v558 = vsel %vm409, %v556, 0.0
  %v559 = vpack.c.bf16 %v558, %v557
  %v576 = vunpack.c.l.b16 %v328
  %v577 = vunpack.c.h.b16 %v328
  %v578 = vunpack.c.l.b16 %v329
  %v579 = vunpack.c.h.b16 %v329
  %v580 = vunpack.c.l.b16 %v330
  %v581 = vunpack.c.h.b16 %v330
  %v582 = vunpack.c.l.b16 %v331
  %v583 = vunpack.c.h.b16 %v331
  %v584 = vunpack.c.l.b16 %v332
  %v585 = vunpack.c.h.b16 %v332
  %v586 = vunpack.c.l.b16 %v333
  %v587 = vunpack.c.h.b16 %v333
  %v588 = vunpack.c.l.b16 %v334
  %v589 = vunpack.c.h.b16 %v334
  %v590 = vunpack.c.l.b16 %v335
  %v591 = vunpack.c.h.b16 %v335
  %v592 = vunpack.c.l.b16 %v336
  %v593 = vunpack.c.h.b16 %v336
  %v594 = vunpack.c.l.b16 %v337
  %v595 = vunpack.c.h.b16 %v337
  %v596 = vunpack.c.l.b16 %v338
  %v597 = vunpack.c.h.b16 %v338
  %v598 = vunpack.c.l.b16 %v339
  %v599 = vunpack.c.h.b16 %v339
  %v600 = vunpack.c.l.b16 %v340
  %v601 = vunpack.c.h.b16 %v340
  %v602 = vunpack.c.l.b16 %v341
  %v603 = vunpack.c.h.b16 %v341
  %v604 = vunpack.c.l.b16 %v342
  %v605 = vunpack.c.h.b16 %v342
  %v606 = vunpack.c.l.b16 %v343
  %v607 = vunpack.c.h.b16 %v343
  %v608 = vpack.c.b16 %v578, %v576
  %v609 = vpack.c.b16 %v579, %v577
  %v610 = vpack.c.b16 %v582, %v580
  %v611 = vpack.c.b16 %v583, %v581
  %v612 = vpack.c.b16 %v586, %v584
  %v613 = vpack.c.b16 %v587, %v585
  %v614 = vpack.c.b16 %v590, %v588
  %v615 = vpack.c.b16 %v591, %v589
  %v616 = vpack.c.b16 %v594, %v592
  %v617 = vpack.c.b16 %v595, %v593
  %v618 = vpack.c.b16 %v598, %v596
  %v619 = vpack.c.b16 %v599, %v597
  %v620 = vpack.c.b16 %v602, %v600
  %v621 = vpack.c.b16 %v603, %v601
  %v622 = vpack.c.b16 %v606, %v604
  %v623 = vpack.c.b16 %v607, %v605
  %640 = vmatpush.bf16.msra.mxu0 %v622
  %641 = vmatpush.bf16.msra.mxu0 %v620
  %642 = vmatpush.bf16.msra.mxu0 %v618
  %643 = vmatpush.bf16.msra.mxu0 %v616
  %644 = vmatpush.bf16.msra.mxu0 %v614
  %645 = vmatpush.bf16.msra.mxu0 %v612
  %646 = vmatpush.bf16.msra.mxu0 %v610
  %647 = vmatpush.bf16.msra.mxu0 %v608
  %648 = vmatmul.bf16.gmra.mxu0 %v559
  %v649 = vpop.f32.mrf.mxu0
  %v650 = vadd.f32 %v352, %v649
  %v651 = vpop.f32.mrf.mxu0
  %v652 = vadd.f32 %v352, %v651
  %653 = vdwg.mxu0
  %654 = vmatpush.bf16.msra.mxu0 %v623
  %655 = vmatpush.bf16.msra.mxu0 %v621
  %656 = vmatpush.bf16.msra.mxu0 %v619
  %657 = vmatpush.bf16.msra.mxu0 %v617
  %658 = vmatpush.bf16.msra.mxu0 %v615
  %659 = vmatpush.bf16.msra.mxu0 %v613
  %660 = vmatpush.bf16.msra.mxu0 %v611
  %661 = vmatpush.bf16.msra.mxu0 %v609
  %662 = vmatmul.bf16.gmra.mxu0 %v559
  %v663 = vpop.f32.mrf.mxu0
  %v664 = vadd.f32 %v353, %v663
  %v665 = vpop.f32.mrf.mxu0
  %v666 = vadd.f32 %v353, %v665
  %667 = vdwg.mxu0
  %v668 = vxor.u32 %v650, 2147483648
  %v669 = vxor.u32 %v664, 2147483648
  %v670 = vxor.u32 %v652, 2147483648
  %v671 = vxor.u32 %v666, 2147483648
  %v672 = vmul.f32 %v668, 1.442695
  %v673 = vpow.pop %v672
  %v674 = vmul.f32 %v669, 1.442695
  %v675 = vpow.pop %v674
  %v676 = vmul.f32 %v670, 1.442695
  %v677 = vpow.pop %v676
  %v678 = vmul.f32 %v671, 1.442695
  %v679 = vpow.pop %v678
  %v680 = vadd.f32 %v673, 1.0
  %v681 = vadd.f32 %v675, 1.0
  %v682 = vadd.f32 %v677, 1.0
  %v683 = vadd.f32 %v679, 1.0
  %v684 = vrcp.pop %v680
  %v685 = vmul.f32 %v680, %v684
  %v686 = vsub.f32 1.0, %v685
  %v687 = vmul.f32 %v684, %v686
  %v688 = vadd.f32 %v684, %v687
  %vm689 = vweird.f32 %v680
  %vm690 = vweird.f32 %v684
  %vm691 = vmor %vm689, %vm690
  %v692 = vsel %vm691, %v684, %v688
  %v693 = vand.u32 2147483647, %v680
  %vm694 = vcmp.eq.f32.partialorder %v693, 8.507059e+37
  %v695 = vand.u32 %v680, 2147483648
  %v696 = vor.u32 1.1754944e-38, %v695
  %v697 = vsel %vm694, %v696, %v692
  %v698 = vmul.f32 1.0, %v697
  %v699 = vrcp.pop %v681
  %v700 = vmul.f32 %v681, %v699
  %v701 = vsub.f32 1.0, %v700
  %v702 = vmul.f32 %v699, %v701
  %v703 = vadd.f32 %v699, %v702
  %vm704 = vweird.f32 %v681
  %vm705 = vweird.f32 %v699
  %vm706 = vmor %vm704, %vm705
  %v707 = vsel %vm706, %v699, %v703
  %v708 = vand.u32 2147483647, %v681
  %vm709 = vcmp.eq.f32.partialorder %v708, 8.507059e+37
  %v710 = vand.u32 %v681, 2147483648
  %v711 = vor.u32 1.1754944e-38, %v710
  %v712 = vsel %vm709, %v711, %v707
  %v713 = vmul.f32 1.0, %v712
  %v714 = vrcp.pop %v682
  %v715 = vmul.f32 %v682, %v714
  %v716 = vsub.f32 1.0, %v715
  %v717 = vmul.f32 %v714, %v716
  %v718 = vadd.f32 %v714, %v717
  %vm719 = vweird.f32 %v682
  %vm720 = vweird.f32 %v714
  %vm721 = vmor %vm719, %vm720
  %v722 = vsel %vm721, %v714, %v718
  %v723 = vand.u32 2147483647, %v682
  %vm724 = vcmp.eq.f32.partialorder %v723, 8.507059e+37
  %v725 = vand.u32 %v682, 2147483648
  %v726 = vor.u32 1.1754944e-38, %v725
  %v727 = vsel %vm724, %v726, %v722
  %v728 = vmul.f32 1.0, %v727
  %v729 = vrcp.pop %v683
  %v730 = vmul.f32 %v683, %v729
  %v731 = vsub.f32 1.0, %v730
  %v732 = vmul.f32 %v729, %v731
  %v733 = vadd.f32 %v729, %v732
  %vm734 = vweird.f32 %v683
  %vm735 = vweird.f32 %v729
  %vm736 = vmor %vm734, %vm735
  %v737 = vsel %vm736, %v729, %v733
  %v738 = vand.u32 2147483647, %v683
  %vm739 = vcmp.eq.f32.partialorder %v738, 8.507059e+37
  %v740 = vand.u32 %v683, 2147483648
  %v741 = vor.u32 1.1754944e-38, %v740
  %v742 = vsel %vm739, %v741, %v737
  %v743 = vmul.f32 1.0, %v742
  %v744 = vtanh.pop %v664
  %v745 = vtanh.pop %v666
  %v746 = vmul.f32 %v698, 0.0
  %v747 = vmul.f32 %v728, 0.0
  %750 = vrot.lane.b32.xlu0 %v744, 64
  %v751 = vpop.permute.xlu0 %750
  %752 = vrot.lane.b32.xlu0 %v745, 64
  %v753 = vpop.permute.xlu0 %752
  %v756 = vmul.f32 %v698, %v751
  %v757 = vmul.f32 %v728, %v753
  %760 = vrot.lane.b32.xlu0 %v756, 64
  %v761 = vpop.permute.xlu0 %760
  %762 = vrot.lane.b32.xlu0 %v757, 64
  %v763 = vpop.permute.xlu0 %762
  %v766 = vadd.f32 %v746, %v761
  %v767 = vadd.f32 %v747, %v763
  %v768 = vtanh.pop %v766
  %v769 = vtanh.pop %v767
  %772 = vrot.lane.b32.xlu0 %v768, 64
  %v773 = vpop.permute.xlu0 %772
  %774 = vrot.lane.b32.xlu0 %v769, 64
  %v775 = vpop.permute.xlu0 %774
  %v778 = vmul.f32 %v713, %v773
  %v779 = vmul.f32 %v743, %v775
  %s780 = smul.u32 2, 2
  %s781 = smul.addr %s780, 4
  %s782 = scalar_lea.vmem [#allocation2], %s781
  %v783 = vld [vmem:[%s782] sm:$0xff]
  %v784 = vld [vmem:[%s782 + $0x8] sm:$0xff]
  %v785 = vunpack.c.l.bf16 %v783
  %v786 = vunpack.c.h.bf16 %v783
  %v787 = vunpack.c.l.bf16 %v784
  %v788 = vunpack.c.h.bf16 %v784
  %v789 = vadd.f32 %v785, %v346
  %v790 = vadd.f32 %v786, %v347
  %v791 = vadd.f32 %v787, %v346
  %v792 = vadd.f32 %v788, %v347
  %v793 = vpack.c.bf16 %v556, %v555
  %v795 = vsel %vm409, %v793, 0
  %797 = vmatpush.bf16.msra.mxu0 0
  %798 = vmatpush.bf16.msra.mxu0 0
  %799 = vmatpush.bf16.msra.mxu0 0
  %800 = vmatpush.bf16.msra.mxu0 0
  %801 = vmatpush.bf16.msra.mxu0 %v399
  %802 = vmatpush.bf16.msra.mxu0 %v397
  %803 = vmatpush.bf16.msra.mxu0 %v395
  %804 = vmatpush.bf16.msra.mxu0 %v393
  %805 = vmatmul.bf16.gmra.mxu0 %v795
  %v806 = vpop.f32.mrf.mxu0
  %v807 = vadd.f32 0.0, %v806
  %v808 = vpop.f32.mrf.mxu0
  %v809 = vadd.f32 0.0, %v808
  %810 = vdwg.mxu0
  %811 = vmatpush.bf16.msra.mxu0 0
  %812 = vmatpush.bf16.msra.mxu0 0
  %813 = vmatpush.bf16.msra.mxu0 0
  %814 = vmatpush.bf16.msra.mxu0 0
  %815 = vmatpush.bf16.msra.mxu0 %v400
  %816 = vmatpush.bf16.msra.mxu0 %v398
  %817 = vmatpush.bf16.msra.mxu0 %v396
  %818 = vmatpush.bf16.msra.mxu0 %v394
  %819 = vmatmul.bf16.gmra.mxu0 %v795
  %v820 = vpop.f32.mrf.mxu0
  %v821 = vadd.f32 0.0, %v820
  %v822 = vpop.f32.mrf.mxu0
  %v823 = vadd.f32 0.0, %v822
  %824 = vdwg.mxu0
  %v825 = vadd.f32 %v789, %v807
  %v826 = vadd.f32 %v790, %v821
  %v827 = vadd.f32 %v791, %v809
  %v828 = vadd.f32 %v792, %v823
  %v829 = vxor.u32 %v825, 2147483648
  %v830 = vxor.u32 %v826, 2147483648
  %v831 = vxor.u32 %v827, 2147483648
  %v832 = vxor.u32 %v828, 2147483648
  %v833 = vmul.f32 %v829, 1.442695
  %v834 = vpow.pop %v833
  %v835 = vmul.f32 %v830, 1.442695
  %v836 = vpow.pop %v835
  %v837 = vmul.f32 %v831, 1.442695
  %v838 = vpow.pop %v837
  %v839 = vmul.f32 %v832, 1.442695
  %v840 = vpow.pop %v839
  %v841 = vadd.f32 %v834, 1.0
  %v842 = vadd.f32 %v836, 1.0
  %v843 = vadd.f32 %v838, 1.0
  %v844 = vadd.f32 %v840, 1.0
  %v845 = vrcp.pop %v841
  %v846 = vmul.f32 %v841, %v845
  %v847 = vsub.f32 1.0, %v846
  %v848 = vmul.f32 %v845, %v847
  %v849 = vadd.f32 %v845, %v848
  %vm850 = vweird.f32 %v841
  %vm851 = vweird.f32 %v845
  %vm852 = vmor %vm850, %vm851
  %v853 = vsel %vm852, %v845, %v849
  %v854 = vand.u32 2147483647, %v841
  %vm855 = vcmp.eq.f32.partialorder %v854, 8.507059e+37
  %v856 = vand.u32 %v841, 2147483648
  %v857 = vor.u32 1.1754944e-38, %v856
  %v858 = vsel %vm855, %v857, %v853
  %v859 = vmul.f32 1.0, %v858
  %v860 = vrcp.pop %v842
  %v861 = vmul.f32 %v842, %v860
  %v862 = vsub.f32 1.0, %v861
  %v863 = vmul.f32 %v860, %v862
  %v864 = vadd.f32 %v860, %v863
  %vm865 = vweird.f32 %v842
  %vm866 = vweird.f32 %v860
  %vm867 = vmor %vm865, %vm866
  %v868 = vsel %vm867, %v860, %v864
  %v869 = vand.u32 2147483647, %v842
  %vm870 = vcmp.eq.f32.partialorder %v869, 8.507059e+37
  %v871 = vand.u32 %v842, 2147483648
  %v872 = vor.u32 1.1754944e-38, %v871
  %v873 = vsel %vm870, %v872, %v868
  %v874 = vmul.f32 1.0, %v873
  %v875 = vrcp.pop %v843
  %v876 = vmul.f32 %v843, %v875
  %v877 = vsub.f32 1.0, %v876
  %v878 = vmul.f32 %v875, %v877
  %v879 = vadd.f32 %v875, %v878
  %vm880 = vweird.f32 %v843
  %vm881 = vweird.f32 %v875
  %vm882 = vmor %vm880, %vm881
  %v883 = vsel %vm882, %v875, %v879
  %v884 = vand.u32 2147483647, %v843
  %vm885 = vcmp.eq.f32.partialorder %v884, 8.507059e+37
  %v886 = vand.u32 %v843, 2147483648
  %v887 = vor.u32 1.1754944e-38, %v886
  %v888 = vsel %vm885, %v887, %v883
  %v889 = vmul.f32 1.0, %v888
  %v890 = vrcp.pop %v844
  %v891 = vmul.f32 %v844, %v890
  %v892 = vsub.f32 1.0, %v891
  %v893 = vmul.f32 %v890, %v892
  %v894 = vadd.f32 %v890, %v893
  %vm895 = vweird.f32 %v844
  %vm896 = vweird.f32 %v890
  %vm897 = vmor %vm895, %vm896
  %v898 = vsel %vm897, %v890, %v894
  %v899 = vand.u32 2147483647, %v844
  %vm900 = vcmp.eq.f32.partialorder %v899, 8.507059e+37
  %v901 = vand.u32 %v844, 2147483648
  %v902 = vor.u32 1.1754944e-38, %v901
  %v903 = vsel %vm900, %v902, %v898
  %v904 = vmul.f32 1.0, %v903
  %v905 = vtanh.pop %v826
  %v906 = vtanh.pop %v828
  %v907 = vmul.f32 %v859, %v543
  %v908 = vmul.f32 %v889, %v544
  %911 = vrot.lane.b32.xlu0 %v905, 64
  %v912 = vpop.permute.xlu0 %911
  %913 = vrot.lane.b32.xlu0 %v906, 64
  %v914 = vpop.permute.xlu0 %913
  %v917 = vmul.f32 %v859, %v912
  %v918 = vmul.f32 %v889, %v914
  %921 = vrot.lane.b32.xlu0 %v917, 64
  %v922 = vpop.permute.xlu0 %921
  %923 = vrot.lane.b32.xlu0 %v918, 64
  %v924 = vpop.permute.xlu0 %923
  %v927 = vadd.f32 %v907, %v922
  %v928 = vadd.f32 %v908, %v924
  %v929 = vtanh.pop %v927
  %v930 = vtanh.pop %v928
  %933 = vrot.lane.b32.xlu0 %v929, 64
  %v934 = vpop.permute.xlu0 %933
  %935 = vrot.lane.b32.xlu0 %v930, 64
  %v936 = vpop.permute.xlu0 %935
  %v939 = vmul.f32 %v874, %v934
  %v940 = vmul.f32 %v904, %v936
  %943 = vrot.lane.b32.xlu0 %v778, 64
  %v944 = vpop.permute.xlu0 %943
  %945 = vrot.lane.b32.xlu0 %v779, 64
  %v946 = vpop.permute.xlu0 %945
  %v949 = vsel %vm409, %v939, %v944
  %v950 = vsel %vm409, %v940, %v946
  %v951 = vpack.c.bf16 %v950, %v949
  %952 = vmatpush.bf16.msra.mxu0 %v622
  %953 = vmatpush.bf16.msra.mxu0 %v620
  %954 = vmatpush.bf16.msra.mxu0 %v618
  %955 = vmatpush.bf16.msra.mxu0 %v616
  %956 = vmatpush.bf16.msra.mxu0 %v614
  %957 = vmatpush.bf16.msra.mxu0 %v612
  %958 = vmatpush.bf16.msra.mxu0 %v610
  %959 = vmatpush.bf16.msra.mxu0 %v608
  %960 = vmatmul.bf16.gmra.mxu0 %v951
  %v961 = vpop.f32.mrf.mxu0
  %v962 = vadd.f32 %v352, %v961
  %v963 = vpop.f32.mrf.mxu0
  %v964 = vadd.f32 %v352, %v963
  %965 = vdwg.mxu0
  %966 = vmatpush.bf16.msra.mxu0 %v623
  %967 = vmatpush.bf16.msra.mxu0 %v621
  %968 = vmatpush.bf16.msra.mxu0 %v619
  %969 = vmatpush.bf16.msra.mxu0 %v617
  %970 = vmatpush.bf16.msra.mxu0 %v615
  %971 = vmatpush.bf16.msra.mxu0 %v613
  %972 = vmatpush.bf16.msra.mxu0 %v611
  %973 = vmatpush.bf16.msra.mxu0 %v609
  %974 = vmatmul.bf16.gmra.mxu0 %v951
  %v975 = vpop.f32.mrf.mxu0
  %v976 = vadd.f32 %v353, %v975
  %v977 = vpop.f32.mrf.mxu0
  %v978 = vadd.f32 %v353, %v977
  %979 = vdwg.mxu0
  %v980 = vxor.u32 %v962, 2147483648
  %v981 = vxor.u32 %v976, 2147483648
  %v982 = vxor.u32 %v964, 2147483648
  %v983 = vxor.u32 %v978, 2147483648
  %v984 = vmul.f32 %v980, 1.442695
  %v985 = vpow.pop %v984
  %v986 = vmul.f32 %v981, 1.442695
  %v987 = vpow.pop %v986
  %v988 = vmul.f32 %v982, 1.442695
  %v989 = vpow.pop %v988
  %v990 = vmul.f32 %v983, 1.442695
  %v991 = vpow.pop %v990
  %v992 = vadd.f32 %v985, 1.0
  %v993 = vadd.f32 %v987, 1.0
  %v994 = vadd.f32 %v989, 1.0
  %v995 = vadd.f32 %v991, 1.0
  %v996 = vrcp.pop %v992
  %v997 = vmul.f32 %v992, %v996
  %v998 = vsub.f32 1.0, %v997
  %v999 = vmul.f32 %v996, %v998
  %v1000 = vadd.f32 %v996, %v999
  %vm1001 = vweird.f32 %v992
  %vm1002 = vweird.f32 %v996
  %vm1003 = vmor %vm1001, %vm1002
  %v1004 = vsel %vm1003, %v996, %v1000
  %v1005 = vand.u32 2147483647, %v992
  %vm1006 = vcmp.eq.f32.partialorder %v1005, 8.507059e+37
  %v1007 = vand.u32 %v992, 2147483648
  %v1008 = vor.u32 1.1754944e-38, %v1007
  %v1009 = vsel %vm1006, %v1008, %v1004
  %v1010 = vmul.f32 1.0, %v1009
  %v1011 = vrcp.pop %v993
  %v1012 = vmul.f32 %v993, %v1011
  %v1013 = vsub.f32 1.0, %v1012
  %v1014 = vmul.f32 %v1011, %v1013
  %v1015 = vadd.f32 %v1011, %v1014
  %vm1016 = vweird.f32 %v993
  %vm1017 = vweird.f32 %v1011
  %vm1018 = vmor %vm1016, %vm1017
  %v1019 = vsel %vm1018, %v1011, %v1015
  %v1020 = vand.u32 2147483647, %v993
  %vm1021 = vcmp.eq.f32.partialorder %v1020, 8.507059e+37
  %v1022 = vand.u32 %v993, 2147483648
  %v1023 = vor.u32 1.1754944e-38, %v1022
  %v1024 = vsel %vm1021, %v1023, %v1019
  %v1025 = vmul.f32 1.0, %v1024
  %v1026 = vrcp.pop %v994
  %v1027 = vmul.f32 %v994, %v1026
  %v1028 = vsub.f32 1.0, %v1027
  %v1029 = vmul.f32 %v1026, %v1028
  %v1030 = vadd.f32 %v1026, %v1029
  %vm1031 = vweird.f32 %v994
  %vm1032 = vweird.f32 %v1026
  %vm1033 = vmor %vm1031, %vm1032
  %v1034 = vsel %vm1033, %v1026, %v1030
  %v1035 = vand.u32 2147483647, %v994
  %vm1036 = vcmp.eq.f32.partialorder %v1035, 8.507059e+37
  %v1037 = vand.u32 %v994, 2147483648
  %v1038 = vor.u32 1.1754944e-38, %v1037
  %v1039 = vsel %vm1036, %v1038, %v1034
  %v1040 = vmul.f32 1.0, %v1039
  %v1041 = vrcp.pop %v995
  %v1042 = vmul.f32 %v995, %v1041
  %v1043 = vsub.f32 1.0, %v1042
  %v1044 = vmul.f32 %v1041, %v1043
  %v1045 = vadd.f32 %v1041, %v1044
  %vm1046 = vweird.f32 %v995
  %vm1047 = vweird.f32 %v1041
  %vm1048 = vmor %vm1046, %vm1047
  %v1049 = vsel %vm1048, %v1041, %v1045
  %v1050 = vand.u32 2147483647, %v995
  %vm1051 = vcmp.eq.f32.partialorder %v1050, 8.507059e+37
  %v1052 = vand.u32 %v995, 2147483648
  %v1053 = vor.u32 1.1754944e-38, %v1052
  %v1054 = vsel %vm1051, %v1053, %v1049
  %v1055 = vmul.f32 1.0, %v1054
  %v1056 = vtanh.pop %v976
  %v1057 = vtanh.pop %v978
  %v1058 = vmul.f32 %v1010, %v766
  %v1059 = vmul.f32 %v1040, %v767
  %1062 = vrot.lane.b32.xlu0 %v1056, 64
  %v1063 = vpop.permute.xlu0 %1062
  %1064 = vrot.lane.b32.xlu0 %v1057, 64
  %v1065 = vpop.permute.xlu0 %1064
  %v1068 = vmul.f32 %v1010, %v1063
  %v1069 = vmul.f32 %v1040, %v1065
  %1072 = vrot.lane.b32.xlu0 %v1068, 64
  %v1073 = vpop.permute.xlu0 %1072
  %1074 = vrot.lane.b32.xlu0 %v1069, 64
  %v1075 = vpop.permute.xlu0 %1074
  %v1078 = vadd.f32 %v1058, %v1073
  %v1079 = vadd.f32 %v1059, %v1075
  %v1080 = vtanh.pop %v1078
  %v1081 = vtanh.pop %v1079
  %1084 = vrot.lane.b32.xlu0 %v1080, 64
  %v1085 = vpop.permute.xlu0 %1084
  %1086 = vrot.lane.b32.xlu0 %v1081, 64
  %v1087 = vpop.permute.xlu0 %1086
  %v1090 = vmul.f32 %v1025, %v1085
  %v1091 = vmul.f32 %v1055, %v1087
  %s1092 = smul.u32 4, 2
  %s1093 = smul.addr %s1092, 4
  %s1094 = scalar_lea.vmem [#allocation2], %s1093
  %v1095 = vld [vmem:[%s1094] sm:$0xff]
  %v1096 = vld [vmem:[%s1094 + $0x8] sm:$0xff]
  %v1097 = vunpack.c.l.bf16 %v1095
  %v1098 = vunpack.c.h.bf16 %v1095
  %v1099 = vunpack.c.l.bf16 %v1096
  %v1100 = vunpack.c.h.bf16 %v1096
  %v1101 = vadd.f32 %v1097, %v346
  %v1102 = vadd.f32 %v1098, %v347
  %v1103 = vadd.f32 %v1099, %v346
  %v1104 = vadd.f32 %v1100, %v347
  %v1105 = vpack.c.bf16 %v940, %v939
  %v1107 = vsel %vm409, %v1105, 0
  %1109 = vmatpush.bf16.msra.mxu0 0
  %1110 = vmatpush.bf16.msra.mxu0 0
  %1111 = vmatpush.bf16.msra.mxu0 0
  %1112 = vmatpush.bf16.msra.mxu0 0
  %1113 = vmatpush.bf16.msra.mxu0 %v399
  %1114 = vmatpush.bf16.msra.mxu0 %v397
  %1115 = vmatpush.bf16.msra.mxu0 %v395
  %1116 = vmatpush.bf16.msra.mxu0 %v393
  %1117 = vmatmul.bf16.gmra.mxu0 %v1107
  %v1118 = vpop.f32.mrf.mxu0
  %v1119 = vadd.f32 0.0, %v1118
  %v1120 = vpop.f32.mrf.mxu0
  %v1121 = vadd.f32 0.0, %v1120
  %1122 = vdwg.mxu0
  %1123 = vmatpush.bf16.msra.mxu0 0
  %1124 = vmatpush.bf16.msra.mxu0 0
  %1125 = vmatpush.bf16.msra.mxu0 0
  %1126 = vmatpush.bf16.msra.mxu0 0
  %1127 = vmatpush.bf16.msra.mxu0 %v400
  %1128 = vmatpush.bf16.msra.mxu0 %v398
  %1129 = vmatpush.bf16.msra.mxu0 %v396
  %1130 = vmatpush.bf16.msra.mxu0 %v394
  %1131 = vmatmul.bf16.gmra.mxu0 %v1107
  %v1132 = vpop.f32.mrf.mxu0
  %v1133 = vadd.f32 0.0, %v1132
  %v1134 = vpop.f32.mrf.mxu0
  %v1135 = vadd.f32 0.0, %v1134
  %1136 = vdwg.mxu0
  %v1137 = vadd.f32 %v1101, %v1119
  %v1138 = vadd.f32 %v1102, %v1133
  %v1139 = vadd.f32 %v1103, %v1121
  %v1140 = vadd.f32 %v1104, %v1135
  %v1141 = vxor.u32 %v1137, 2147483648
  %v1142 = vxor.u32 %v1138, 2147483648
  %v1143 = vxor.u32 %v1139, 2147483648
  %v1144 = vxor.u32 %v1140, 2147483648
  %v1145 = vmul.f32 %v1141, 1.442695
  %v1146 = vpow.pop %v1145
  %v1147 = vmul.f32 %v1142, 1.442695
  %v1148 = vpow.pop %v1147
  %v1149 = vmul.f32 %v1143, 1.442695
  %v1150 = vpow.pop %v1149
  %v1151 = vmul.f32 %v1144, 1.442695
  %v1152 = vpow.pop %v1151
  %v1153 = vadd.f32 %v1146, 1.0
  %v1154 = vadd.f32 %v1148, 1.0
  %v1155 = vadd.f32 %v1150, 1.0
  %v1156 = vadd.f32 %v1152, 1.0
  %v1157 = vrcp.pop %v1153
  %v1158 = vmul.f32 %v1153, %v1157
  %v1159 = vsub.f32 1.0, %v1158
  %v1160 = vmul.f32 %v1157, %v1159
  %v1161 = vadd.f32 %v1157, %v1160
  %vm1162 = vweird.f32 %v1153
  %vm1163 = vweird.f32 %v1157
  %vm1164 = vmor %vm1162, %vm1163
  %v1165 = vsel %vm1164, %v1157, %v1161
  %v1166 = vand.u32 2147483647, %v1153
  %vm1167 = vcmp.eq.f32.partialorder %v1166, 8.507059e+37
  %v1168 = vand.u32 %v1153, 2147483648
  %v1169 = vor.u32 1.1754944e-38, %v1168
  %v1170 = vsel %vm1167, %v1169, %v1165
  %v1171 = vmul.f32 1.0, %v1170
  %v1172 = vrcp.pop %v1154
  %v1173 = vmul.f32 %v1154, %v1172
  %v1174 = vsub.f32 1.0, %v1173
  %v1175 = vmul.f32 %v1172, %v1174
  %v1176 = vadd.f32 %v1172, %v1175
  %vm1177 = vweird.f32 %v1154
  %vm1178 = vweird.f32 %v1172
  %vm1179 = vmor %vm1177, %vm1178
  %v1180 = vsel %vm1179, %v1172, %v1176
  %v1181 = vand.u32 2147483647, %v1154
  %vm1182 = vcmp.eq.f32.partialorder %v1181, 8.507059e+37
  %v1183 = vand.u32 %v1154, 2147483648
  %v1184 = vor.u32 1.1754944e-38, %v1183
  %v1185 = vsel %vm1182, %v1184, %v1180
  %v1186 = vmul.f32 1.0, %v1185
  %v1187 = vrcp.pop %v1155
  %v1188 = vmul.f32 %v1155, %v1187
  %v1189 = vsub.f32 1.0, %v1188
  %v1190 = vmul.f32 %v1187, %v1189
  %v1191 = vadd.f32 %v1187, %v1190
  %vm1192 = vweird.f32 %v1155
  %vm1193 = vweird.f32 %v1187
  %vm1194 = vmor %vm1192, %vm1193
  %v1195 = vsel %vm1194, %v1187, %v1191
  %v1196 = vand.u32 2147483647, %v1155
  %vm1197 = vcmp.eq.f32.partialorder %v1196, 8.507059e+37
  %v1198 = vand.u32 %v1155, 2147483648
  %v1199 = vor.u32 1.1754944e-38, %v1198
  %v1200 = vsel %vm1197, %v1199, %v1195
  %v1201 = vmul.f32 1.0, %v1200
  %v1202 = vrcp.pop %v1156
  %v1203 = vmul.f32 %v1156, %v1202
  %v1204 = vsub.f32 1.0, %v1203
  %v1205 = vmul.f32 %v1202, %v1204
  %v1206 = vadd.f32 %v1202, %v1205
  %vm1207 = vweird.f32 %v1156
  %vm1208 = vweird.f32 %v1202
  %vm1209 = vmor %vm1207, %vm1208
  %v1210 = vsel %vm1209, %v1202, %v1206
  %v1211 = vand.u32 2147483647, %v1156
  %vm1212 = vcmp.eq.f32.partialorder %v1211, 8.507059e+37
  %v1213 = vand.u32 %v1156, 2147483648
  %v1214 = vor.u32 1.1754944e-38, %v1213
  %v1215 = vsel %vm1212, %v1214, %v1210
  %v1216 = vmul.f32 1.0, %v1215
  %v1217 = vtanh.pop %v1138
  %v1218 = vtanh.pop %v1140
  %v1219 = vmul.f32 %v1171, %v927
  %v1220 = vmul.f32 %v1201, %v928
  %1223 = vrot.lane.b32.xlu0 %v1217, 64
  %v1224 = vpop.permute.xlu0 %1223
  %1225 = vrot.lane.b32.xlu0 %v1218, 64
  %v1226 = vpop.permute.xlu0 %1225
  %v1229 = vmul.f32 %v1171, %v1224
  %v1230 = vmul.f32 %v1201, %v1226
  %1233 = vrot.lane.b32.xlu0 %v1229, 64
  %v1234 = vpop.permute.xlu0 %1233
  %1235 = vrot.lane.b32.xlu0 %v1230, 64
  %v1236 = vpop.permute.xlu0 %1235
  %v1239 = vadd.f32 %v1219, %v1234
  %v1240 = vadd.f32 %v1220, %v1236
  %v1241 = vtanh.pop %v1239
  %v1242 = vtanh.pop %v1240
  %1245 = vrot.lane.b32.xlu0 %v1241, 64
  %v1246 = vpop.permute.xlu0 %1245
  %1247 = vrot.lane.b32.xlu0 %v1242, 64
  %v1248 = vpop.permute.xlu0 %1247
  %v1251 = vmul.f32 %v1186, %v1246
  %v1252 = vmul.f32 %v1216, %v1248
  %1255 = vrot.lane.b32.xlu0 %v1090, 64
  %v1256 = vpop.permute.xlu0 %1255
  %1257 = vrot.lane.b32.xlu0 %v1091, 64
  %v1258 = vpop.permute.xlu0 %1257
  %v1261 = vsel %vm409, %v1251, %v1256
  %v1262 = vsel %vm409, %v1252, %v1258
  %v1263 = vpack.c.bf16 %v1262, %v1261
  %1264 = vmatpush.bf16.msra.mxu0 %v622
  %1265 = vmatpush.bf16.msra.mxu0 %v620
  %1266 = vmatpush.bf16.msra.mxu0 %v618
  %1267 = vmatpush.bf16.msra.mxu0 %v616
  %1268 = vmatpush.bf16.msra.mxu0 %v614
  %1269 = vmatpush.bf16.msra.mxu0 %v612
  %1270 = vmatpush.bf16.msra.mxu0 %v610
  %1271 = vmatpush.bf16.msra.mxu0 %v608
  %1272 = vmatmul.bf16.gmra.mxu0 %v1263
  %v1273 = vpop.f32.mrf.mxu0
  %v1274 = vadd.f32 %v352, %v1273
  %v1275 = vpop.f32.mrf.mxu0
  %v1276 = vadd.f32 %v352, %v1275
  %1277 = vdwg.mxu0
  %1278 = vmatpush.bf16.msra.mxu0 %v623
  %1279 = vmatpush.bf16.msra.mxu0 %v621
  %1280 = vmatpush.bf16.msra.mxu0 %v619
  %1281 = vmatpush.bf16.msra.mxu0 %v617
  %1282 = vmatpush.bf16.msra.mxu0 %v615
  %1283 = vmatpush.bf16.msra.mxu0 %v613
  %1284 = vmatpush.bf16.msra.mxu0 %v611
  %1285 = vmatpush.bf16.msra.mxu0 %v609
  %1286 = vmatmul.bf16.gmra.mxu0 %v1263
  %v1287 = vpop.f32.mrf.mxu0
  %v1288 = vadd.f32 %v353, %v1287
  %v1289 = vpop.f32.mrf.mxu0
  %v1290 = vadd.f32 %v353, %v1289
  %1291 = vdwg.mxu0
  %v1292 = vxor.u32 %v1274, 2147483648
  %v1293 = vxor.u32 %v1288, 2147483648
  %v1294 = vxor.u32 %v1276, 2147483648
  %v1295 = vxor.u32 %v1290, 2147483648
  %v1296 = vmul.f32 %v1292, 1.442695
  %v1297 = vpow.pop %v1296
  %v1298 = vmul.f32 %v1293, 1.442695
  %v1299 = vpow.pop %v1298
  %v1300 = vmul.f32 %v1294, 1.442695
  %v1301 = vpow.pop %v1300
  %v1302 = vmul.f32 %v1295, 1.442695
  %v1303 = vpow.pop %v1302
  %v1304 = vadd.f32 %v1297, 1.0
  %v1305 = vadd.f32 %v1299, 1.0
  %v1306 = vadd.f32 %v1301, 1.0
  %v1307 = vadd.f32 %v1303, 1.0
  %v1308 = vrcp.pop %v1304
  %v1309 = vmul.f32 %v1304, %v1308
  %v1310 = vsub.f32 1.0, %v1309
  %v1311 = vmul.f32 %v1308, %v1310
  %v1312 = vadd.f32 %v1308, %v1311
  %vm1313 = vweird.f32 %v1304
  %vm1314 = vweird.f32 %v1308
  %vm1315 = vmor %vm1313, %vm1314
  %v1316 = vsel %vm1315, %v1308, %v1312
  %v1317 = vand.u32 2147483647, %v1304
  %vm1318 = vcmp.eq.f32.partialorder %v1317, 8.507059e+37
  %v1319 = vand.u32 %v1304, 2147483648
  %v1320 = vor.u32 1.1754944e-38, %v1319
  %v1321 = vsel %vm1318, %v1320, %v1316
  %v1322 = vmul.f32 1.0, %v1321
  %v1323 = vrcp.pop %v1305
  %v1324 = vmul.f32 %v1305, %v1323
  %v1325 = vsub.f32 1.0, %v1324
  %v1326 = vmul.f32 %v1323, %v1325
  %v1327 = vadd.f32 %v1323, %v1326
  %vm1328 = vweird.f32 %v1305
  %vm1329 = vweird.f32 %v1323
  %vm1330 = vmor %vm1328, %vm1329
  %v1331 = vsel %vm1330, %v1323, %v1327
  %v1332 = vand.u32 2147483647, %v1305
  %vm1333 = vcmp.eq.f32.partialorder %v1332, 8.507059e+37
  %v1334 = vand.u32 %v1305, 2147483648
  %v1335 = vor.u32 1.1754944e-38, %v1334
  %v1336 = vsel %vm1333, %v1335, %v1331
  %v1337 = vmul.f32 1.0, %v1336
  %v1338 = vrcp.pop %v1306
  %v1339 = vmul.f32 %v1306, %v1338
  %v1340 = vsub.f32 1.0, %v1339
  %v1341 = vmul.f32 %v1338, %v1340
  %v1342 = vadd.f32 %v1338, %v1341
  %vm1343 = vweird.f32 %v1306
  %vm1344 = vweird.f32 %v1338
  %vm1345 = vmor %vm1343, %vm1344
  %v1346 = vsel %vm1345, %v1338, %v1342
  %v1347 = vand.u32 2147483647, %v1306
  %vm1348 = vcmp.eq.f32.partialorder %v1347, 8.507059e+37
  %v1349 = vand.u32 %v1306, 2147483648
  %v1350 = vor.u32 1.1754944e-38, %v1349
  %v1351 = vsel %vm1348, %v1350, %v1346
  %v1352 = vmul.f32 1.0, %v1351
  %v1353 = vrcp.pop %v1307
  %v1354 = vmul.f32 %v1307, %v1353
  %v1355 = vsub.f32 1.0, %v1354
  %v1356 = vmul.f32 %v1353, %v1355
  %v1357 = vadd.f32 %v1353, %v1356
  %vm1358 = vweird.f32 %v1307
  %vm1359 = vweird.f32 %v1353
  %vm1360 = vmor %vm1358, %vm1359
  %v1361 = vsel %vm1360, %v1353, %v1357
  %v1362 = vand.u32 2147483647, %v1307
  %vm1363 = vcmp.eq.f32.partialorder %v1362, 8.507059e+37
  %v1364 = vand.u32 %v1307, 2147483648
  %v1365 = vor.u32 1.1754944e-38, %v1364
  %v1366 = vsel %vm1363, %v1365, %v1361
  %v1367 = vmul.f32 1.0, %v1366
  %v1368 = vtanh.pop %v1288
  %v1369 = vtanh.pop %v1290
  %v1370 = vmul.f32 %v1322, %v1078
  %v1371 = vmul.f32 %v1352, %v1079
  %1374 = vrot.lane.b32.xlu0 %v1368, 64
  %v1375 = vpop.permute.xlu0 %1374
  %1376 = vrot.lane.b32.xlu0 %v1369, 64
  %v1377 = vpop.permute.xlu0 %1376
  %v1380 = vmul.f32 %v1322, %v1375
  %v1381 = vmul.f32 %v1352, %v1377
  %1384 = vrot.lane.b32.xlu0 %v1380, 64
  %v1385 = vpop.permute.xlu0 %1384
  %1386 = vrot.lane.b32.xlu0 %v1381, 64
  %v1387 = vpop.permute.xlu0 %1386
  %v1390 = vadd.f32 %v1370, %v1385
  %v1391 = vadd.f32 %v1371, %v1387
  %v1392 = vtanh.pop %v1390
  %v1393 = vtanh.pop %v1391
  %1396 = vrot.lane.b32.xlu0 %v1392, 64
  %v1397 = vpop.permute.xlu0 %1396
  %1398 = vrot.lane.b32.xlu0 %v1393, 64
  %v1399 = vpop.permute.xlu0 %1398
  %v1402 = vmul.f32 %v1337, %v1397
  %v1403 = vmul.f32 %v1367, %v1399
  %s1404 = smul.u32 6, 2
  %s1405 = smul.addr %s1404, 4
  %s1406 = scalar_lea.vmem [#allocation2], %s1405
  %v1407 = vld [vmem:[%s1406] sm:$0xff]
  %v1408 = vld [vmem:[%s1406 + $0x8] sm:$0xff]
  %v1409 = vunpack.c.l.bf16 %v1407
  %v1410 = vunpack.c.h.bf16 %v1407
  %v1411 = vunpack.c.l.bf16 %v1408
  %v1412 = vunpack.c.h.bf16 %v1408
  %v1413 = vadd.f32 %v1409, %v346
  %v1414 = vadd.f32 %v1410, %v347
  %v1415 = vadd.f32 %v1411, %v346
  %v1416 = vadd.f32 %v1412, %v347
  %v1417 = vpack.c.bf16 %v1252, %v1251
  %v1419 = vsel %vm409, %v1417, 0
  %1421 = vmatpush.bf16.msra.mxu0 0
  %1422 = vmatpush.bf16.msra.mxu0 0
  %1423 = vmatpush.bf16.msra.mxu0 0
  %1424 = vmatpush.bf16.msra.mxu0 0
  %1425 = vmatpush.bf16.msra.mxu0 %v399
  %1426 = vmatpush.bf16.msra.mxu0 %v397
  %1427 = vmatpush.bf16.msra.mxu0 %v395
  %1428 = vmatpush.bf16.msra.mxu0 %v393
  %1429 = vmatmul.bf16.gmra.mxu0 %v1419
  %v1430 = vpop.f32.mrf.mxu0
  %v1431 = vadd.f32 0.0, %v1430
  %v1432 = vpop.f32.mrf.mxu0
  %v1433 = vadd.f32 0.0, %v1432
  %1434 = vdwg.mxu0
  %1435 = vmatpush.bf16.msra.mxu0 0
  %1436 = vmatpush.bf16.msra.mxu0 0
  %1437 = vmatpush.bf16.msra.mxu0 0
  %1438 = vmatpush.bf16.msra.mxu0 0
  %1439 = vmatpush.bf16.msra.mxu0 %v400
  %1440 = vmatpush.bf16.msra.mxu0 %v398
  %1441 = vmatpush.bf16.msra.mxu0 %v396
  %1442 = vmatpush.bf16.msra.mxu0 %v394
  %1443 = vmatmul.bf16.gmra.mxu0 %v1419
  %v1444 = vpop.f32.mrf.mxu0
  %v1445 = vadd.f32 0.0, %v1444
  %v1446 = vpop.f32.mrf.mxu0
  %v1447 = vadd.f32 0.0, %v1446
  %1448 = vdwg.mxu0
  %v1449 = vadd.f32 %v1413, %v1431
  %v1450 = vadd.f32 %v1414, %v1445
  %v1451 = vadd.f32 %v1415, %v1433
  %v1452 = vadd.f32 %v1416, %v1447
  %v1453 = vxor.u32 %v1449, 2147483648
  %v1454 = vxor.u32 %v1450, 2147483648
  %v1455 = vxor.u32 %v1451, 2147483648
  %v1456 = vxor.u32 %v1452, 2147483648
  %v1457 = vmul.f32 %v1453, 1.442695
  %v1458 = vpow.pop %v1457
  %v1459 = vmul.f32 %v1454, 1.442695
  %v1460 = vpow.pop %v1459
  %v1461 = vmul.f32 %v1455, 1.442695
  %v1462 = vpow.pop %v1461
  %v1463 = vmul.f32 %v1456, 1.442695
  %v1464 = vpow.pop %v1463
  %v1465 = vadd.f32 %v1458, 1.0
  %v1466 = vadd.f32 %v1460, 1.0
  %v1467 = vadd.f32 %v1462, 1.0
  %v1468 = vadd.f32 %v1464, 1.0
  %v1469 = vrcp.pop %v1465
  %v1470 = vmul.f32 %v1465, %v1469
  %v1471 = vsub.f32 1.0, %v1470
  %v1472 = vmul.f32 %v1469, %v1471
  %v1473 = vadd.f32 %v1469, %v1472
  %vm1474 = vweird.f32 %v1465
  %vm1475 = vweird.f32 %v1469
  %vm1476 = vmor %vm1474, %vm1475
  %v1477 = vsel %vm1476, %v1469, %v1473
  %v1478 = vand.u32 2147483647, %v1465
  %vm1479 = vcmp.eq.f32.partialorder %v1478, 8.507059e+37
  %v1480 = vand.u32 %v1465, 2147483648
  %v1481 = vor.u32 1.1754944e-38, %v1480
  %v1482 = vsel %vm1479, %v1481, %v1477
  %v1483 = vmul.f32 1.0, %v1482
  %v1484 = vrcp.pop %v1466
  %v1485 = vmul.f32 %v1466, %v1484
  %v1486 = vsub.f32 1.0, %v1485
  %v1487 = vmul.f32 %v1484, %v1486
  %v1488 = vadd.f32 %v1484, %v1487
  %vm1489 = vweird.f32 %v1466
  %vm1490 = vweird.f32 %v1484
  %vm1491 = vmor %vm1489, %vm1490
  %v1492 = vsel %vm1491, %v1484, %v1488
  %v1493 = vand.u32 2147483647, %v1466
  %vm1494 = vcmp.eq.f32.partialorder %v1493, 8.507059e+37
  %v1495 = vand.u32 %v1466, 2147483648
  %v1496 = vor.u32 1.1754944e-38, %v1495
  %v1497 = vsel %vm1494, %v1496, %v1492
  %v1498 = vmul.f32 1.0, %v1497
  %v1499 = vrcp.pop %v1467
  %v1500 = vmul.f32 %v1467, %v1499
  %v1501 = vsub.f32 1.0, %v1500
  %v1502 = vmul.f32 %v1499, %v1501
  %v1503 = vadd.f32 %v1499, %v1502
  %vm1504 = vweird.f32 %v1467
  %vm1505 = vweird.f32 %v1499
  %vm1506 = vmor %vm1504, %vm1505
  %v1507 = vsel %vm1506, %v1499, %v1503
  %v1508 = vand.u32 2147483647, %v1467
  %vm1509 = vcmp.eq.f32.partialorder %v1508, 8.507059e+37
  %v1510 = vand.u32 %v1467, 2147483648
  %v1511 = vor.u32 1.1754944e-38, %v1510
  %v1512 = vsel %vm1509, %v1511, %v1507
  %v1513 = vmul.f32 1.0, %v1512
  %v1514 = vrcp.pop %v1468
  %v1515 = vmul.f32 %v1468, %v1514
  %v1516 = vsub.f32 1.0, %v1515
  %v1517 = vmul.f32 %v1514, %v1516
  %v1518 = vadd.f32 %v1514, %v1517
  %vm1519 = vweird.f32 %v1468
  %vm1520 = vweird.f32 %v1514
  %vm1521 = vmor %vm1519, %vm1520
  %v1522 = vsel %vm1521, %v1514, %v1518
  %v1523 = vand.u32 2147483647, %v1468
  %vm1524 = vcmp.eq.f32.partialorder %v1523, 8.507059e+37
  %v1525 = vand.u32 %v1468, 2147483648
  %v1526 = vor.u32 1.1754944e-38, %v1525
  %v1527 = vsel %vm1524, %v1526, %v1522
  %v1528 = vmul.f32 1.0, %v1527
  %v1529 = vtanh.pop %v1450
  %v1530 = vtanh.pop %v1452
  %v1531 = vmul.f32 %v1483, %v1239
  %v1532 = vmul.f32 %v1513, %v1240
  %1535 = vrot.lane.b32.xlu0 %v1529, 64
  %v1536 = vpop.permute.xlu0 %1535
  %1537 = vrot.lane.b32.xlu0 %v1530, 64
  %v1538 = vpop.permute.xlu0 %1537
  %v1541 = vmul.f32 %v1483, %v1536
  %v1542 = vmul.f32 %v1513, %v1538
  %1545 = vrot.lane.b32.xlu0 %v1541, 64
  %v1546 = vpop.permute.xlu0 %1545
  %1547 = vrot.lane.b32.xlu0 %v1542, 64
  %v1548 = vpop.permute.xlu0 %1547
  %v1551 = vadd.f32 %v1531, %v1546
  %v1552 = vadd.f32 %v1532, %v1548
  %v1553 = vtanh.pop %v1551
  %v1554 = vtanh.pop %v1552
  %1557 = vrot.lane.b32.xlu0 %v1553, 64
  %v1558 = vpop.permute.xlu0 %1557
  %1559 = vrot.lane.b32.xlu0 %v1554, 64
  %v1560 = vpop.permute.xlu0 %1559
  %v1563 = vmul.f32 %v1498, %v1558
  %v1564 = vmul.f32 %v1528, %v1560
  %1567 = vrot.lane.b32.xlu0 %v1402, 64
  %v1568 = vpop.permute.xlu0 %1567
  %1569 = vrot.lane.b32.xlu0 %v1403, 64
  %v1570 = vpop.permute.xlu0 %1569
  %v1573 = vsel %vm409, %v1563, %v1568
  %v1574 = vsel %vm409, %v1564, %v1570
  %v1575 = vpack.c.bf16 %v1574, %v1573
  %1576 = vmatpush.bf16.msra.mxu0 %v622
  %1577 = vmatpush.bf16.msra.mxu0 %v620
  %1578 = vmatpush.bf16.msra.mxu0 %v618
  %1579 = vmatpush.bf16.msra.mxu0 %v616
  %1580 = vmatpush.bf16.msra.mxu0 %v614
  %1581 = vmatpush.bf16.msra.mxu0 %v612
  %1582 = vmatpush.bf16.msra.mxu0 %v610
  %1583 = vmatpush.bf16.msra.mxu0 %v608
  %1584 = vmatmul.bf16.gmra.mxu0 %v1575
  %v1585 = vpop.f32.mrf.mxu0
  %v1586 = vadd.f32 %v352, %v1585
  %v1587 = vpop.f32.mrf.mxu0
  %v1588 = vadd.f32 %v352, %v1587
  %1589 = vdwg.mxu0
  %1590 = vmatpush.bf16.msra.mxu0 %v623
  %1591 = vmatpush.bf16.msra.mxu0 %v621
  %1592 = vmatpush.bf16.msra.mxu0 %v619
  %1593 = vmatpush.bf16.msra.mxu0 %v617
  %1594 = vmatpush.bf16.msra.mxu0 %v615
  %1595 = vmatpush.bf16.msra.mxu0 %v613
  %1596 = vmatpush.bf16.msra.mxu0 %v611
  %1597 = vmatpush.bf16.msra.mxu0 %v609
  %1598 = vmatmul.bf16.gmra.mxu0 %v1575
  %v1599 = vpop.f32.mrf.mxu0
  %v1600 = vadd.f32 %v353, %v1599
  %v1601 = vpop.f32.mrf.mxu0
  %v1602 = vadd.f32 %v353, %v1601
  %1603 = vdwg.mxu0
  %v1604 = vxor.u32 %v1586, 2147483648
  %v1605 = vxor.u32 %v1600, 2147483648
  %v1606 = vxor.u32 %v1588, 2147483648
  %v1607 = vxor.u32 %v1602, 2147483648
  %v1608 = vmul.f32 %v1604, 1.442695
  %v1609 = vpow.pop %v1608
  %v1610 = vmul.f32 %v1605, 1.442695
  %v1611 = vpow.pop %v1610
  %v1612 = vmul.f32 %v1606, 1.442695
  %v1613 = vpow.pop %v1612
  %v1614 = vmul.f32 %v1607, 1.442695
  %v1615 = vpow.pop %v1614
  %v1616 = vadd.f32 %v1609, 1.0
  %v1617 = vadd.f32 %v1611, 1.0
  %v1618 = vadd.f32 %v1613, 1.0
  %v1619 = vadd.f32 %v1615, 1.0
  %v1620 = vrcp.pop %v1616
  %v1621 = vmul.f32 %v1616, %v1620
  %v1622 = vsub.f32 1.0, %v1621
  %v1623 = vmul.f32 %v1620, %v1622
  %v1624 = vadd.f32 %v1620, %v1623
  %vm1625 = vweird.f32 %v1616
  %vm1626 = vweird.f32 %v1620
  %vm1627 = vmor %vm1625, %vm1626
  %v1628 = vsel %vm1627, %v1620, %v1624
  %v1629 = vand.u32 2147483647, %v1616
  %vm1630 = vcmp.eq.f32.partialorder %v1629, 8.507059e+37
  %v1631 = vand.u32 %v1616, 2147483648
  %v1632 = vor.u32 1.1754944e-38, %v1631
  %v1633 = vsel %vm1630, %v1632, %v1628
  %v1634 = vmul.f32 1.0, %v1633
  %v1635 = vrcp.pop %v1617
  %v1636 = vmul.f32 %v1617, %v1635
  %v1637 = vsub.f32 1.0, %v1636
  %v1638 = vmul.f32 %v1635, %v1637
  %v1639 = vadd.f32 %v1635, %v1638
  %vm1640 = vweird.f32 %v1617
  %vm1641 = vweird.f32 %v1635
  %vm1642 = vmor %vm1640, %vm1641
  %v1643 = vsel %vm1642, %v1635, %v1639
  %v1644 = vand.u32 2147483647, %v1617
  %vm1645 = vcmp.eq.f32.partialorder %v1644, 8.507059e+37
  %v1646 = vand.u32 %v1617, 2147483648
  %v1647 = vor.u32 1.1754944e-38, %v1646
  %v1648 = vsel %vm1645, %v1647, %v1643
  %v1649 = vmul.f32 1.0, %v1648
  %v1650 = vrcp.pop %v1618
  %v1651 = vmul.f32 %v1618, %v1650
  %v1652 = vsub.f32 1.0, %v1651
  %v1653 = vmul.f32 %v1650, %v1652
  %v1654 = vadd.f32 %v1650, %v1653
  %vm1655 = vweird.f32 %v1618
  %vm1656 = vweird.f32 %v1650
  %vm1657 = vmor %vm1655, %vm1656
  %v1658 = vsel %vm1657, %v1650, %v1654
  %v1659 = vand.u32 2147483647, %v1618
  %vm1660 = vcmp.eq.f32.partialorder %v1659, 8.507059e+37
  %v1661 = vand.u32 %v1618, 2147483648
  %v1662 = vor.u32 1.1754944e-38, %v1661
  %v1663 = vsel %vm1660, %v1662, %v1658
  %v1664 = vmul.f32 1.0, %v1663
  %v1665 = vrcp.pop %v1619
  %v1666 = vmul.f32 %v1619, %v1665
  %v1667 = vsub.f32 1.0, %v1666
  %v1668 = vmul.f32 %v1665, %v1667
  %v1669 = vadd.f32 %v1665, %v1668
  %vm1670 = vweird.f32 %v1619
  %vm1671 = vweird.f32 %v1665
  %vm1672 = vmor %vm1670, %vm1671
  %v1673 = vsel %vm1672, %v1665, %v1669
  %v1674 = vand.u32 2147483647, %v1619
  %vm1675 = vcmp.eq.f32.partialorder %v1674, 8.507059e+37
  %v1676 = vand.u32 %v1619, 2147483648
  %v1677 = vor.u32 1.1754944e-38, %v1676
  %v1678 = vsel %vm1675, %v1677, %v1673
  %v1679 = vmul.f32 1.0, %v1678
  %v1680 = vtanh.pop %v1600
  %v1681 = vtanh.pop %v1602
  %v1682 = vmul.f32 %v1634, %v1390
  %v1683 = vmul.f32 %v1664, %v1391
  %1686 = vrot.lane.b32.xlu0 %v1680, 64
  %v1687 = vpop.permute.xlu0 %1686
  %1688 = vrot.lane.b32.xlu0 %v1681, 64
  %v1689 = vpop.permute.xlu0 %1688
  %v1692 = vmul.f32 %v1634, %v1687
  %v1693 = vmul.f32 %v1664, %v1689
  %1696 = vrot.lane.b32.xlu0 %v1692, 64
  %v1697 = vpop.permute.xlu0 %1696
  %1698 = vrot.lane.b32.xlu0 %v1693, 64
  %v1699 = vpop.permute.xlu0 %1698
  %v1702 = vadd.f32 %v1682, %v1697
  %v1703 = vadd.f32 %v1683, %v1699
  %v1704 = vtanh.pop %v1702
  %v1705 = vtanh.pop %v1703
  %1708 = vrot.lane.b32.xlu0 %v1704, 64
  %v1709 = vpop.permute.xlu0 %1708
  %1710 = vrot.lane.b32.xlu0 %v1705, 64
  %v1711 = vpop.permute.xlu0 %1710
  %v1714 = vmul.f32 %v1649, %v1709
  %v1715 = vmul.f32 %v1679, %v1711
  %s1716 = smul.u32 8, 2
  %s1717 = smul.addr %s1716, 4
  %s1718 = scalar_lea.vmem [#allocation2], %s1717
  %v1719 = vld [vmem:[%s1718] sm:$0xff]
  %v1720 = vld [vmem:[%s1718 + $0x8] sm:$0xff]
  %v1721 = vunpack.c.l.bf16 %v1719
  %v1722 = vunpack.c.h.bf16 %v1719
  %v1723 = vunpack.c.l.bf16 %v1720
  %v1724 = vunpack.c.h.bf16 %v1720
  %v1725 = vadd.f32 %v1721, %v346
  %v1726 = vadd.f32 %v1722, %v347
  %v1727 = vadd.f32 %v1723, %v346
  %v1728 = vadd.f32 %v1724, %v347
  %v1729 = vpack.c.bf16 %v1564, %v1563
  %v1731 = vsel %vm409, %v1729, 0
  %1733 = vmatpush.bf16.msra.mxu0 0
  %1734 = vmatpush.bf16.msra.mxu0 0
  %1735 = vmatpush.bf16.msra.mxu0 0
  %1736 = vmatpush.bf16.msra.mxu0 0
  %1737 = vmatpush.bf16.msra.mxu0 %v399
  %1738 = vmatpush.bf16.msra.mxu0 %v397
  %1739 = vmatpush.bf16.msra.mxu0 %v395
  %1740 = vmatpush.bf16.msra.mxu0 %v393
  %1741 = vmatmul.bf16.gmra.mxu0 %v1731
  %v1742 = vpop.f32.mrf.mxu0
  %v1743 = vadd.f32 0.0, %v1742
  %v1744 = vpop.f32.mrf.mxu0
  %v1745 = vadd.f32 0.0, %v1744
  %1746 = vdwg.mxu0
  %1747 = vmatpush.bf16.msra.mxu0 0
  %1748 = vmatpush.bf16.msra.mxu0 0
  %1749 = vmatpush.bf16.msra.mxu0 0
  %1750 = vmatpush.bf16.msra.mxu0 0
  %1751 = vmatpush.bf16.msra.mxu0 %v400
  %1752 = vmatpush.bf16.msra.mxu0 %v398
  %1753 = vmatpush.bf16.msra.mxu0 %v396
  %1754 = vmatpush.bf16.msra.mxu0 %v394
  %1755 = vmatmul.bf16.gmra.mxu0 %v1731
  %v1756 = vpop.f32.mrf.mxu0
  %v1757 = vadd.f32 0.0, %v1756
  %v1758 = vpop.f32.mrf.mxu0
  %v1759 = vadd.f32 0.0, %v1758
  %1760 = vdwg.mxu0
  %v1761 = vadd.f32 %v1725, %v1743
  %v1762 = vadd.f32 %v1726, %v1757
  %v1763 = vadd.f32 %v1727, %v1745
  %v1764 = vadd.f32 %v1728, %v1759
  %v1765 = vxor.u32 %v1761, 2147483648
  %v1766 = vxor.u32 %v1762, 2147483648
  %v1767 = vxor.u32 %v1763, 2147483648
  %v1768 = vxor.u32 %v1764, 2147483648
  %v1769 = vmul.f32 %v1765, 1.442695
  %v1770 = vpow.pop %v1769
  %v1771 = vmul.f32 %v1766, 1.442695
  %v1772 = vpow.pop %v1771
  %v1773 = vmul.f32 %v1767, 1.442695
  %v1774 = vpow.pop %v1773
  %v1775 = vmul.f32 %v1768, 1.442695
  %v1776 = vpow.pop %v1775
  %v1777 = vadd.f32 %v1770, 1.0
  %v1778 = vadd.f32 %v1772, 1.0
  %v1779 = vadd.f32 %v1774, 1.0
  %v1780 = vadd.f32 %v1776, 1.0
  %v1781 = vrcp.pop %v1777
  %v1782 = vmul.f32 %v1777, %v1781
  %v1783 = vsub.f32 1.0, %v1782
  %v1784 = vmul.f32 %v1781, %v1783
  %v1785 = vadd.f32 %v1781, %v1784
  %vm1786 = vweird.f32 %v1777
  %vm1787 = vweird.f32 %v1781
  %vm1788 = vmor %vm1786, %vm1787
  %v1789 = vsel %vm1788, %v1781, %v1785
  %v1790 = vand.u32 2147483647, %v1777
  %vm1791 = vcmp.eq.f32.partialorder %v1790, 8.507059e+37
  %v1792 = vand.u32 %v1777, 2147483648
  %v1793 = vor.u32 1.1754944e-38, %v1792
  %v1794 = vsel %vm1791, %v1793, %v1789
  %v1795 = vmul.f32 1.0, %v1794
  %v1796 = vrcp.pop %v1778
  %v1797 = vmul.f32 %v1778, %v1796
  %v1798 = vsub.f32 1.0, %v1797
  %v1799 = vmul.f32 %v1796, %v1798
  %v1800 = vadd.f32 %v1796, %v1799
  %vm1801 = vweird.f32 %v1778
  %vm1802 = vweird.f32 %v1796
  %vm1803 = vmor %vm1801, %vm1802
  %v1804 = vsel %vm1803, %v1796, %v1800
  %v1805 = vand.u32 2147483647, %v1778
  %vm1806 = vcmp.eq.f32.partialorder %v1805, 8.507059e+37
  %v1807 = vand.u32 %v1778, 2147483648
  %v1808 = vor.u32 1.1754944e-38, %v1807
  %v1809 = vsel %vm1806, %v1808, %v1804
  %v1810 = vmul.f32 1.0, %v1809
  %v1811 = vrcp.pop %v1779
  %v1812 = vmul.f32 %v1779, %v1811
  %v1813 = vsub.f32 1.0, %v1812
  %v1814 = vmul.f32 %v1811, %v1813
  %v1815 = vadd.f32 %v1811, %v1814
  %vm1816 = vweird.f32 %v1779
  %vm1817 = vweird.f32 %v1811
  %vm1818 = vmor %vm1816, %vm1817
  %v1819 = vsel %vm1818, %v1811, %v1815
  %v1820 = vand.u32 2147483647, %v1779
  %vm1821 = vcmp.eq.f32.partialorder %v1820, 8.507059e+37
  %v1822 = vand.u32 %v1779, 2147483648
  %v1823 = vor.u32 1.1754944e-38, %v1822
  %v1824 = vsel %vm1821, %v1823, %v1819
  %v1825 = vmul.f32 1.0, %v1824
  %v1826 = vrcp.pop %v1780
  %v1827 = vmul.f32 %v1780, %v1826
  %v1828 = vsub.f32 1.0, %v1827
  %v1829 = vmul.f32 %v1826, %v1828
  %v1830 = vadd.f32 %v1826, %v1829
  %vm1831 = vweird.f32 %v1780
  %vm1832 = vweird.f32 %v1826
  %vm1833 = vmor %vm1831, %vm1832
  %v1834 = vsel %vm1833, %v1826, %v1830
  %v1835 = vand.u32 2147483647, %v1780
  %vm1836 = vcmp.eq.f32.partialorder %v1835, 8.507059e+37
  %v1837 = vand.u32 %v1780, 2147483648
  %v1838 = vor.u32 1.1754944e-38, %v1837
  %v1839 = vsel %vm1836, %v1838, %v1834
  %v1840 = vmul.f32 1.0, %v1839
  %v1841 = vtanh.pop %v1762
  %v1842 = vtanh.pop %v1764
  %v1843 = vmul.f32 %v1795, %v1551
  %v1844 = vmul.f32 %v1825, %v1552
  %1847 = vrot.lane.b32.xlu0 %v1841, 64
  %v1848 = vpop.permute.xlu0 %1847
  %1849 = vrot.lane.b32.xlu0 %v1842, 64
  %v1850 = vpop.permute.xlu0 %1849
  %v1853 = vmul.f32 %v1795, %v1848
  %v1854 = vmul.f32 %v1825, %v1850
  %1857 = vrot.lane.b32.xlu0 %v1853, 64
  %v1858 = vpop.permute.xlu0 %1857
  %1859 = vrot.lane.b32.xlu0 %v1854, 64
  %v1860 = vpop.permute.xlu0 %1859
  %v1863 = vadd.f32 %v1843, %v1858
  %v1864 = vadd.f32 %v1844, %v1860
  %v1865 = vtanh.pop %v1863
  %v1866 = vtanh.pop %v1864
  %1869 = vrot.lane.b32.xlu0 %v1865, 64
  %v1870 = vpop.permute.xlu0 %1869
  %1871 = vrot.lane.b32.xlu0 %v1866, 64
  %v1872 = vpop.permute.xlu0 %1871
  %v1875 = vmul.f32 %v1810, %v1870
  %v1876 = vmul.f32 %v1840, %v1872
  %1879 = vrot.lane.b32.xlu0 %v1714, 64
  %v1880 = vpop.permute.xlu0 %1879
  %1881 = vrot.lane.b32.xlu0 %v1715, 64
  %v1882 = vpop.permute.xlu0 %1881
  %v1885 = vsel %vm409, %v1875, %v1880
  %v1886 = vsel %vm409, %v1876, %v1882
  %v1887 = vpack.c.bf16 %v1886, %v1885
  %1888 = vmatpush.bf16.msra.mxu0 %v622
  %1889 = vmatpush.bf16.msra.mxu0 %v620
  %1890 = vmatpush.bf16.msra.mxu0 %v618
  %1891 = vmatpush.bf16.msra.mxu0 %v616
  %1892 = vmatpush.bf16.msra.mxu0 %v614
  %1893 = vmatpush.bf16.msra.mxu0 %v612
  %1894 = vmatpush.bf16.msra.mxu0 %v610
  %1895 = vmatpush.bf16.msra.mxu0 %v608
  %1896 = vmatmul.bf16.gmra.mxu0 %v1887
  %v1897 = vpop.f32.mrf.mxu0
  %v1898 = vadd.f32 %v352, %v1897
  %v1899 = vpop.f32.mrf.mxu0
  %v1900 = vadd.f32 %v352, %v1899
  %1901 = vdwg.mxu0
  %1902 = vmatpush.bf16.msra.mxu0 %v623
  %1903 = vmatpush.bf16.msra.mxu0 %v621
  %1904 = vmatpush.bf16.msra.mxu0 %v619
  %1905 = vmatpush.bf16.msra.mxu0 %v617
  %1906 = vmatpush.bf16.msra.mxu0 %v615
  %1907 = vmatpush.bf16.msra.mxu0 %v613
  %1908 = vmatpush.bf16.msra.mxu0 %v611
  %1909 = vmatpush.bf16.msra.mxu0 %v609
  %1910 = vmatmul.bf16.gmra.mxu0 %v1887
  %v1911 = vpop.f32.mrf.mxu0
  %v1912 = vadd.f32 %v353, %v1911
  %v1913 = vpop.f32.mrf.mxu0
  %v1914 = vadd.f32 %v353, %v1913
  %1915 = vdwg.mxu0
  %v1916 = vxor.u32 %v1898, 2147483648
  %v1917 = vxor.u32 %v1912, 2147483648
  %v1918 = vxor.u32 %v1900, 2147483648
  %v1919 = vxor.u32 %v1914, 2147483648
  %v1920 = vmul.f32 %v1916, 1.442695
  %v1921 = vpow.pop %v1920
  %v1922 = vmul.f32 %v1917, 1.442695
  %v1923 = vpow.pop %v1922
  %v1924 = vmul.f32 %v1918, 1.442695
  %v1925 = vpow.pop %v1924
  %v1926 = vmul.f32 %v1919, 1.442695
  %v1927 = vpow.pop %v1926
  %v1928 = vadd.f32 %v1921, 1.0
  %v1929 = vadd.f32 %v1923, 1.0
  %v1930 = vadd.f32 %v1925, 1.0
  %v1931 = vadd.f32 %v1927, 1.0
  %v1932 = vrcp.pop %v1928
  %v1933 = vmul.f32 %v1928, %v1932
  %v1934 = vsub.f32 1.0, %v1933
  %v1935 = vmul.f32 %v1932, %v1934
  %v1936 = vadd.f32 %v1932, %v1935
  %vm1937 = vweird.f32 %v1928
  %vm1938 = vweird.f32 %v1932
  %vm1939 = vmor %vm1937, %vm1938
  %v1940 = vsel %vm1939, %v1932, %v1936
  %v1941 = vand.u32 2147483647, %v1928
  %vm1942 = vcmp.eq.f32.partialorder %v1941, 8.507059e+37
  %v1943 = vand.u32 %v1928, 2147483648
  %v1944 = vor.u32 1.1754944e-38, %v1943
  %v1945 = vsel %vm1942, %v1944, %v1940
  %v1946 = vmul.f32 1.0, %v1945
  %v1947 = vrcp.pop %v1929
  %v1948 = vmul.f32 %v1929, %v1947
  %v1949 = vsub.f32 1.0, %v1948
  %v1950 = vmul.f32 %v1947, %v1949
  %v1951 = vadd.f32 %v1947, %v1950
  %vm1952 = vweird.f32 %v1929
  %vm1953 = vweird.f32 %v1947
  %vm1954 = vmor %vm1952, %vm1953
  %v1955 = vsel %vm1954, %v1947, %v1951
  %v1956 = vand.u32 2147483647, %v1929
  %vm1957 = vcmp.eq.f32.partialorder %v1956, 8.507059e+37
  %v1958 = vand.u32 %v1929, 2147483648
  %v1959 = vor.u32 1.1754944e-38, %v1958
  %v1960 = vsel %vm1957, %v1959, %v1955
  %v1961 = vmul.f32 1.0, %v1960
  %v1962 = vrcp.pop %v1930
  %v1963 = vmul.f32 %v1930, %v1962
  %v1964 = vsub.f32 1.0, %v1963
  %v1965 = vmul.f32 %v1962, %v1964
  %v1966 = vadd.f32 %v1962, %v1965
  %vm1967 = vweird.f32 %v1930
  %vm1968 = vweird.f32 %v1962
  %vm1969 = vmor %vm1967, %vm1968
  %v1970 = vsel %vm1969, %v1962, %v1966
  %v1971 = vand.u32 2147483647, %v1930
  %vm1972 = vcmp.eq.f32.partialorder %v1971, 8.507059e+37
  %v1973 = vand.u32 %v1930, 2147483648
  %v1974 = vor.u32 1.1754944e-38, %v1973
  %v1975 = vsel %vm1972, %v1974, %v1970
  %v1976 = vmul.f32 1.0, %v1975
  %v1977 = vrcp.pop %v1931
  %v1978 = vmul.f32 %v1931, %v1977
  %v1979 = vsub.f32 1.0, %v1978
  %v1980 = vmul.f32 %v1977, %v1979
  %v1981 = vadd.f32 %v1977, %v1980
  %vm1982 = vweird.f32 %v1931
  %vm1983 = vweird.f32 %v1977
  %vm1984 = vmor %vm1982, %vm1983
  %v1985 = vsel %vm1984, %v1977, %v1981
  %v1986 = vand.u32 2147483647, %v1931
  %vm1987 = vcmp.eq.f32.partialorder %v1986, 8.507059e+37
  %v1988 = vand.u32 %v1931, 2147483648
  %v1989 = vor.u32 1.1754944e-38, %v1988
  %v1990 = vsel %vm1987, %v1989, %v1985
  %v1991 = vmul.f32 1.0, %v1990
  %v1992 = vtanh.pop %v1912
  %v1993 = vtanh.pop %v1914
  %v1994 = vmul.f32 %v1946, %v1702
  %v1995 = vmul.f32 %v1976, %v1703
  %1998 = vrot.lane.b32.xlu0 %v1992, 64
  %v1999 = vpop.permute.xlu0 %1998
  %2000 = vrot.lane.b32.xlu0 %v1993, 64
  %v2001 = vpop.permute.xlu0 %2000
  %v2004 = vmul.f32 %v1946, %v1999
  %v2005 = vmul.f32 %v1976, %v2001
  %2008 = vrot.lane.b32.xlu0 %v2004, 64
  %v2009 = vpop.permute.xlu0 %2008
  %2010 = vrot.lane.b32.xlu0 %v2005, 64
  %v2011 = vpop.permute.xlu0 %2010
  %v2014 = vadd.f32 %v1994, %v2009
  %v2015 = vadd.f32 %v1995, %v2011
  %v2016 = vtanh.pop %v2014
  %v2017 = vtanh.pop %v2015
  %2020 = vrot.lane.b32.xlu0 %v2016, 64
  %v2021 = vpop.permute.xlu0 %2020
  %2022 = vrot.lane.b32.xlu0 %v2017, 64
  %v2023 = vpop.permute.xlu0 %2022
  %v2026 = vmul.f32 %v1961, %v2021
  %v2027 = vmul.f32 %v1991, %v2023
  %s2028 = smul.u32 10, 2
  %s2029 = smul.addr %s2028, 4
  %s2030 = scalar_lea.vmem [#allocation2], %s2029
  %v2031 = vld [vmem:[%s2030] sm:$0xff]
  %v2032 = vld [vmem:[%s2030 + $0x8] sm:$0xff]
  %v2033 = vunpack.c.l.bf16 %v2031
  %v2034 = vunpack.c.h.bf16 %v2031
  %v2035 = vunpack.c.l.bf16 %v2032
  %v2036 = vunpack.c.h.bf16 %v2032
  %v2037 = vadd.f32 %v2033, %v346
  %v2038 = vadd.f32 %v2034, %v347
  %v2039 = vadd.f32 %v2035, %v346
  %v2040 = vadd.f32 %v2036, %v347
  %v2041 = vpack.c.bf16 %v1876, %v1875
  %v2043 = vsel %vm409, %v2041, 0
  %2045 = vmatpush.bf16.msra.mxu0 0
  %2046 = vmatpush.bf16.msra.mxu0 0
  %2047 = vmatpush.bf16.msra.mxu0 0
  %2048 = vmatpush.bf16.msra.mxu0 0
  %2049 = vmatpush.bf16.msra.mxu0 %v399
  %2050 = vmatpush.bf16.msra.mxu0 %v397
  %2051 = vmatpush.bf16.msra.mxu0 %v395
  %2052 = vmatpush.bf16.msra.mxu0 %v393
  %2053 = vmatmul.bf16.gmra.mxu0 %v2043
  %v2054 = vpop.f32.mrf.mxu0
  %v2055 = vadd.f32 0.0, %v2054
  %v2056 = vpop.f32.mrf.mxu0
  %v2057 = vadd.f32 0.0, %v2056
  %2058 = vdwg.mxu0
  %2059 = vmatpush.bf16.msra.mxu0 0
  %2060 = vmatpush.bf16.msra.mxu0 0
  %2061 = vmatpush.bf16.msra.mxu0 0
  %2062 = vmatpush.bf16.msra.mxu0 0
  %2063 = vmatpush.bf16.msra.mxu0 %v400
  %2064 = vmatpush.bf16.msra.mxu0 %v398
  %2065 = vmatpush.bf16.msra.mxu0 %v396
  %2066 = vmatpush.bf16.msra.mxu0 %v394
  %2067 = vmatmul.bf16.gmra.mxu0 %v2043
  %v2068 = vpop.f32.mrf.mxu0
  %v2069 = vadd.f32 0.0, %v2068
  %v2070 = vpop.f32.mrf.mxu0
  %v2071 = vadd.f32 0.0, %v2070
  %2072 = vdwg.mxu0
  %v2073 = vadd.f32 %v2037, %v2055
  %v2074 = vadd.f32 %v2038, %v2069
  %v2075 = vadd.f32 %v2039, %v2057
  %v2076 = vadd.f32 %v2040, %v2071
  %v2077 = vxor.u32 %v2073, 2147483648
  %v2078 = vxor.u32 %v2074, 2147483648
  %v2079 = vxor.u32 %v2075, 2147483648
  %v2080 = vxor.u32 %v2076, 2147483648
  %v2081 = vmul.f32 %v2077, 1.442695
  %v2082 = vpow.pop %v2081
  %v2083 = vmul.f32 %v2078, 1.442695
  %v2084 = vpow.pop %v2083
  %v2085 = vmul.f32 %v2079, 1.442695
  %v2086 = vpow.pop %v2085
  %v2087 = vmul.f32 %v2080, 1.442695
  %v2088 = vpow.pop %v2087
  %v2089 = vadd.f32 %v2082, 1.0
  %v2090 = vadd.f32 %v2084, 1.0
  %v2091 = vadd.f32 %v2086, 1.0
  %v2092 = vadd.f32 %v2088, 1.0
  %v2093 = vrcp.pop %v2089
  %v2094 = vmul.f32 %v2089, %v2093
  %v2095 = vsub.f32 1.0, %v2094
  %v2096 = vmul.f32 %v2093, %v2095
  %v2097 = vadd.f32 %v2093, %v2096
  %vm2098 = vweird.f32 %v2089
  %vm2099 = vweird.f32 %v2093
  %vm2100 = vmor %vm2098, %vm2099
  %v2101 = vsel %vm2100, %v2093, %v2097
  %v2102 = vand.u32 2147483647, %v2089
  %vm2103 = vcmp.eq.f32.partialorder %v2102, 8.507059e+37
  %v2104 = vand.u32 %v2089, 2147483648
  %v2105 = vor.u32 1.1754944e-38, %v2104
  %v2106 = vsel %vm2103, %v2105, %v2101
  %v2107 = vmul.f32 1.0, %v2106
  %v2108 = vrcp.pop %v2090
  %v2109 = vmul.f32 %v2090, %v2108
  %v2110 = vsub.f32 1.0, %v2109
  %v2111 = vmul.f32 %v2108, %v2110
  %v2112 = vadd.f32 %v2108, %v2111
  %vm2113 = vweird.f32 %v2090
  %vm2114 = vweird.f32 %v2108
  %vm2115 = vmor %vm2113, %vm2114
  %v2116 = vsel %vm2115, %v2108, %v2112
  %v2117 = vand.u32 2147483647, %v2090
  %vm2118 = vcmp.eq.f32.partialorder %v2117, 8.507059e+37
  %v2119 = vand.u32 %v2090, 2147483648
  %v2120 = vor.u32 1.1754944e-38, %v2119
  %v2121 = vsel %vm2118, %v2120, %v2116
  %v2122 = vmul.f32 1.0, %v2121
  %v2123 = vrcp.pop %v2091
  %v2124 = vmul.f32 %v2091, %v2123
  %v2125 = vsub.f32 1.0, %v2124
  %v2126 = vmul.f32 %v2123, %v2125
  %v2127 = vadd.f32 %v2123, %v2126
  %vm2128 = vweird.f32 %v2091
  %vm2129 = vweird.f32 %v2123
  %vm2130 = vmor %vm2128, %vm2129
  %v2131 = vsel %vm2130, %v2123, %v2127
  %v2132 = vand.u32 2147483647, %v2091
  %vm2133 = vcmp.eq.f32.partialorder %v2132, 8.507059e+37
  %v2134 = vand.u32 %v2091, 2147483648
  %v2135 = vor.u32 1.1754944e-38, %v2134
  %v2136 = vsel %vm2133, %v2135, %v2131
  %v2137 = vmul.f32 1.0, %v2136
  %v2138 = vrcp.pop %v2092
  %v2139 = vmul.f32 %v2092, %v2138
  %v2140 = vsub.f32 1.0, %v2139
  %v2141 = vmul.f32 %v2138, %v2140
  %v2142 = vadd.f32 %v2138, %v2141
  %vm2143 = vweird.f32 %v2092
  %vm2144 = vweird.f32 %v2138
  %vm2145 = vmor %vm2143, %vm2144
  %v2146 = vsel %vm2145, %v2138, %v2142
  %v2147 = vand.u32 2147483647, %v2092
  %vm2148 = vcmp.eq.f32.partialorder %v2147, 8.507059e+37
  %v2149 = vand.u32 %v2092, 2147483648
  %v2150 = vor.u32 1.1754944e-38, %v2149
  %v2151 = vsel %vm2148, %v2150, %v2146
  %v2152 = vmul.f32 1.0, %v2151
  %v2153 = vtanh.pop %v2074
  %v2154 = vtanh.pop %v2076
  %v2155 = vmul.f32 %v2107, %v1863
  %v2156 = vmul.f32 %v2137, %v1864
  %2159 = vrot.lane.b32.xlu0 %v2153, 64
  %v2160 = vpop.permute.xlu0 %2159
  %2161 = vrot.lane.b32.xlu0 %v2154, 64
  %v2162 = vpop.permute.xlu0 %2161
  %v2165 = vmul.f32 %v2107, %v2160
  %v2166 = vmul.f32 %v2137, %v2162
  %2169 = vrot.lane.b32.xlu0 %v2165, 64
  %v2170 = vpop.permute.xlu0 %2169
  %2171 = vrot.lane.b32.xlu0 %v2166, 64
  %v2172 = vpop.permute.xlu0 %2171
  %v2175 = vadd.f32 %v2155, %v2170
  %v2176 = vadd.f32 %v2156, %v2172
  %v2177 = vtanh.pop %v2175
  %v2178 = vtanh.pop %v2176
  %2181 = vrot.lane.b32.xlu0 %v2177, 64
  %v2182 = vpop.permute.xlu0 %2181
  %2183 = vrot.lane.b32.xlu0 %v2178, 64
  %v2184 = vpop.permute.xlu0 %2183
  %v2187 = vmul.f32 %v2122, %v2182
  %v2188 = vmul.f32 %v2152, %v2184
  %2191 = vrot.lane.b32.xlu0 %v2026, 64
  %v2192 = vpop.permute.xlu0 %2191
  %2193 = vrot.lane.b32.xlu0 %v2027, 64
  %v2194 = vpop.permute.xlu0 %2193
  %v2197 = vsel %vm409, %v2187, %v2192
  %v2198 = vsel %vm409, %v2188, %v2194
  %v2199 = vpack.c.bf16 %v2198, %v2197
  %2200 = vmatpush.bf16.msra.mxu0 %v622
  %2201 = vmatpush.bf16.msra.mxu0 %v620
  %2202 = vmatpush.bf16.msra.mxu0 %v618
  %2203 = vmatpush.bf16.msra.mxu0 %v616
  %2204 = vmatpush.bf16.msra.mxu0 %v614
  %2205 = vmatpush.bf16.msra.mxu0 %v612
  %2206 = vmatpush.bf16.msra.mxu0 %v610
  %2207 = vmatpush.bf16.msra.mxu0 %v608
  %2208 = vmatmul.bf16.gmra.mxu0 %v2199
  %v2209 = vpop.f32.mrf.mxu0
  %v2210 = vadd.f32 %v352, %v2209
  %v2211 = vpop.f32.mrf.mxu0
  %v2212 = vadd.f32 %v352, %v2211
  %2213 = vdwg.mxu0
  %2214 = vmatpush.bf16.msra.mxu0 %v623
  %2215 = vmatpush.bf16.msra.mxu0 %v621
  %2216 = vmatpush.bf16.msra.mxu0 %v619
  %2217 = vmatpush.bf16.msra.mxu0 %v617
  %2218 = vmatpush.bf16.msra.mxu0 %v615
  %2219 = vmatpush.bf16.msra.mxu0 %v613
  %2220 = vmatpush.bf16.msra.mxu0 %v611
  %2221 = vmatpush.bf16.msra.mxu0 %v609
  %2222 = vmatmul.bf16.gmra.mxu0 %v2199
  %v2223 = vpop.f32.mrf.mxu0
  %v2224 = vadd.f32 %v353, %v2223
  %v2225 = vpop.f32.mrf.mxu0
  %v2226 = vadd.f32 %v353, %v2225
  %2227 = vdwg.mxu0
  %v2228 = vxor.u32 %v2210, 2147483648
  %v2229 = vxor.u32 %v2224, 2147483648
  %v2230 = vxor.u32 %v2212, 2147483648
  %v2231 = vxor.u32 %v2226, 2147483648
  %v2232 = vmul.f32 %v2228, 1.442695
  %v2233 = vpow.pop %v2232
  %v2234 = vmul.f32 %v2229, 1.442695
  %v2235 = vpow.pop %v2234
  %v2236 = vmul.f32 %v2230, 1.442695
  %v2237 = vpow.pop %v2236
  %v2238 = vmul.f32 %v2231, 1.442695
  %v2239 = vpow.pop %v2238
  %v2240 = vadd.f32 %v2233, 1.0
  %v2241 = vadd.f32 %v2235, 1.0
  %v2242 = vadd.f32 %v2237, 1.0
  %v2243 = vadd.f32 %v2239, 1.0
  %v2244 = vrcp.pop %v2240
  %v2245 = vmul.f32 %v2240, %v2244
  %v2246 = vsub.f32 1.0, %v2245
  %v2247 = vmul.f32 %v2244, %v2246
  %v2248 = vadd.f32 %v2244, %v2247
  %vm2249 = vweird.f32 %v2240
  %vm2250 = vweird.f32 %v2244
  %vm2251 = vmor %vm2249, %vm2250
  %v2252 = vsel %vm2251, %v2244, %v2248
  %v2253 = vand.u32 2147483647, %v2240
  %vm2254 = vcmp.eq.f32.partialorder %v2253, 8.507059e+37
  %v2255 = vand.u32 %v2240, 2147483648
  %v2256 = vor.u32 1.1754944e-38, %v2255
  %v2257 = vsel %vm2254, %v2256, %v2252
  %v2258 = vmul.f32 1.0, %v2257
  %v2259 = vrcp.pop %v2241
  %v2260 = vmul.f32 %v2241, %v2259
  %v2261 = vsub.f32 1.0, %v2260
  %v2262 = vmul.f32 %v2259, %v2261
  %v2263 = vadd.f32 %v2259, %v2262
  %vm2264 = vweird.f32 %v2241
  %vm2265 = vweird.f32 %v2259
  %vm2266 = vmor %vm2264, %vm2265
  %v2267 = vsel %vm2266, %v2259, %v2263
  %v2268 = vand.u32 2147483647, %v2241
  %vm2269 = vcmp.eq.f32.partialorder %v2268, 8.507059e+37
  %v2270 = vand.u32 %v2241, 2147483648
  %v2271 = vor.u32 1.1754944e-38, %v2270
  %v2272 = vsel %vm2269, %v2271, %v2267
  %v2273 = vmul.f32 1.0, %v2272
  %v2274 = vrcp.pop %v2242
  %v2275 = vmul.f32 %v2242, %v2274
  %v2276 = vsub.f32 1.0, %v2275
  %v2277 = vmul.f32 %v2274, %v2276
  %v2278 = vadd.f32 %v2274, %v2277
  %vm2279 = vweird.f32 %v2242
  %vm2280 = vweird.f32 %v2274
  %vm2281 = vmor %vm2279, %vm2280
  %v2282 = vsel %vm2281, %v2274, %v2278
  %v2283 = vand.u32 2147483647, %v2242
  %vm2284 = vcmp.eq.f32.partialorder %v2283, 8.507059e+37
  %v2285 = vand.u32 %v2242, 2147483648
  %v2286 = vor.u32 1.1754944e-38, %v2285
  %v2287 = vsel %vm2284, %v2286, %v2282
  %v2288 = vmul.f32 1.0, %v2287
  %v2289 = vrcp.pop %v2243
  %v2290 = vmul.f32 %v2243, %v2289
  %v2291 = vsub.f32 1.0, %v2290
  %v2292 = vmul.f32 %v2289, %v2291
  %v2293 = vadd.f32 %v2289, %v2292
  %vm2294 = vweird.f32 %v2243
  %vm2295 = vweird.f32 %v2289
  %vm2296 = vmor %vm2294, %vm2295
  %v2297 = vsel %vm2296, %v2289, %v2293
  %v2298 = vand.u32 2147483647, %v2243
  %vm2299 = vcmp.eq.f32.partialorder %v2298, 8.507059e+37
  %v2300 = vand.u32 %v2243, 2147483648
  %v2301 = vor.u32 1.1754944e-38, %v2300
  %v2302 = vsel %vm2299, %v2301, %v2297
  %v2303 = vmul.f32 1.0, %v2302
  %v2304 = vtanh.pop %v2224
  %v2305 = vtanh.pop %v2226
  %v2306 = vmul.f32 %v2258, %v2014
  %v2307 = vmul.f32 %v2288, %v2015
  %2310 = vrot.lane.b32.xlu0 %v2304, 64
  %v2311 = vpop.permute.xlu0 %2310
  %2312 = vrot.lane.b32.xlu0 %v2305, 64
  %v2313 = vpop.permute.xlu0 %2312
  %v2316 = vmul.f32 %v2258, %v2311
  %v2317 = vmul.f32 %v2288, %v2313
  %2320 = vrot.lane.b32.xlu0 %v2316, 64
  %v2321 = vpop.permute.xlu0 %2320
  %2322 = vrot.lane.b32.xlu0 %v2317, 64
  %v2323 = vpop.permute.xlu0 %2322
  %v2326 = vadd.f32 %v2306, %v2321
  %v2327 = vadd.f32 %v2307, %v2323
  %v2328 = vtanh.pop %v2326
  %v2329 = vtanh.pop %v2327
  %2332 = vrot.lane.b32.xlu0 %v2328, 64
  %v2333 = vpop.permute.xlu0 %2332
  %2334 = vrot.lane.b32.xlu0 %v2329, 64
  %v2335 = vpop.permute.xlu0 %2334
  %v2338 = vmul.f32 %v2273, %v2333
  %v2339 = vmul.f32 %v2303, %v2335
  %s2340 = smul.u32 12, 2
  %s2341 = smul.addr %s2340, 4
  %s2342 = scalar_lea.vmem [#allocation2], %s2341
  %v2343 = vld [vmem:[%s2342] sm:$0xff]
  %v2344 = vld [vmem:[%s2342 + $0x8] sm:$0xff]
  %v2345 = vunpack.c.l.bf16 %v2343
  %v2346 = vunpack.c.h.bf16 %v2343
  %v2347 = vunpack.c.l.bf16 %v2344
  %v2348 = vunpack.c.h.bf16 %v2344
  %v2349 = vadd.f32 %v2345, %v346
  %v2350 = vadd.f32 %v2346, %v347
  %v2351 = vadd.f32 %v2347, %v346
  %v2352 = vadd.f32 %v2348, %v347
  %v2353 = vpack.c.bf16 %v2188, %v2187
  %v2355 = vsel %vm409, %v2353, 0
  %2357 = vmatpush.bf16.msra.mxu0 0
  %2358 = vmatpush.bf16.msra.mxu0 0
  %2359 = vmatpush.bf16.msra.mxu0 0
  %2360 = vmatpush.bf16.msra.mxu0 0
  %2361 = vmatpush.bf16.msra.mxu0 %v399
  %2362 = vmatpush.bf16.msra.mxu0 %v397
  %2363 = vmatpush.bf16.msra.mxu0 %v395
  %2364 = vmatpush.bf16.msra.mxu0 %v393
  %2365 = vmatmul.bf16.gmra.mxu0 %v2355
  %v2366 = vpop.f32.mrf.mxu0
  %v2367 = vadd.f32 0.0, %v2366
  %v2368 = vpop.f32.mrf.mxu0
  %v2369 = vadd.f32 0.0, %v2368
  %2370 = vdwg.mxu0
  %2371 = vmatpush.bf16.msra.mxu0 0
  %2372 = vmatpush.bf16.msra.mxu0 0
  %2373 = vmatpush.bf16.msra.mxu0 0
  %2374 = vmatpush.bf16.msra.mxu0 0
  %2375 = vmatpush.bf16.msra.mxu0 %v400
  %2376 = vmatpush.bf16.msra.mxu0 %v398
  %2377 = vmatpush.bf16.msra.mxu0 %v396
  %2378 = vmatpush.bf16.msra.mxu0 %v394
  %2379 = vmatmul.bf16.gmra.mxu0 %v2355
  %v2380 = vpop.f32.mrf.mxu0
  %v2381 = vadd.f32 0.0, %v2380
  %v2382 = vpop.f32.mrf.mxu0
  %v2383 = vadd.f32 0.0, %v2382
  %2384 = vdwg.mxu0
  %v2385 = vadd.f32 %v2349, %v2367
  %v2386 = vadd.f32 %v2350, %v2381
  %v2387 = vadd.f32 %v2351, %v2369
  %v2388 = vadd.f32 %v2352, %v2383
  %v2389 = vxor.u32 %v2385, 2147483648
  %v2390 = vxor.u32 %v2386, 2147483648
  %v2391 = vxor.u32 %v2387, 2147483648
  %v2392 = vxor.u32 %v2388, 2147483648
  %v2393 = vmul.f32 %v2389, 1.442695
  %v2394 = vpow.pop %v2393
  %v2395 = vmul.f32 %v2390, 1.442695
  %v2396 = vpow.pop %v2395
  %v2397 = vmul.f32 %v2391, 1.442695
  %v2398 = vpow.pop %v2397
  %v2399 = vmul.f32 %v2392, 1.442695
  %v2400 = vpow.pop %v2399
  %v2401 = vadd.f32 %v2394, 1.0
  %v2402 = vadd.f32 %v2396, 1.0
  %v2403 = vadd.f32 %v2398, 1.0
  %v2404 = vadd.f32 %v2400, 1.0
  %v2405 = vrcp.pop %v2401
  %v2406 = vmul.f32 %v2401, %v2405
  %v2407 = vsub.f32 1.0, %v2406
  %v2408 = vmul.f32 %v2405, %v2407
  %v2409 = vadd.f32 %v2405, %v2408
  %vm2410 = vweird.f32 %v2401
  %vm2411 = vweird.f32 %v2405
  %vm2412 = vmor %vm2410, %vm2411
  %v2413 = vsel %vm2412, %v2405, %v2409
  %v2414 = vand.u32 2147483647, %v2401
  %vm2415 = vcmp.eq.f32.partialorder %v2414, 8.507059e+37
  %v2416 = vand.u32 %v2401, 2147483648
  %v2417 = vor.u32 1.1754944e-38, %v2416
  %v2418 = vsel %vm2415, %v2417, %v2413
  %v2419 = vmul.f32 1.0, %v2418
  %v2420 = vrcp.pop %v2402
  %v2421 = vmul.f32 %v2402, %v2420
  %v2422 = vsub.f32 1.0, %v2421
  %v2423 = vmul.f32 %v2420, %v2422
  %v2424 = vadd.f32 %v2420, %v2423
  %vm2425 = vweird.f32 %v2402
  %vm2426 = vweird.f32 %v2420
  %vm2427 = vmor %vm2425, %vm2426
  %v2428 = vsel %vm2427, %v2420, %v2424
  %v2429 = vand.u32 2147483647, %v2402
  %vm2430 = vcmp.eq.f32.partialorder %v2429, 8.507059e+37
  %v2431 = vand.u32 %v2402, 2147483648
  %v2432 = vor.u32 1.1754944e-38, %v2431
  %v2433 = vsel %vm2430, %v2432, %v2428
  %v2434 = vmul.f32 1.0, %v2433
  %v2435 = vrcp.pop %v2403
  %v2436 = vmul.f32 %v2403, %v2435
  %v2437 = vsub.f32 1.0, %v2436
  %v2438 = vmul.f32 %v2435, %v2437
  %v2439 = vadd.f32 %v2435, %v2438
  %vm2440 = vweird.f32 %v2403
  %vm2441 = vweird.f32 %v2435
  %vm2442 = vmor %vm2440, %vm2441
  %v2443 = vsel %vm2442, %v2435, %v2439
  %v2444 = vand.u32 2147483647, %v2403
  %vm2445 = vcmp.eq.f32.partialorder %v2444, 8.507059e+37
  %v2446 = vand.u32 %v2403, 2147483648
  %v2447 = vor.u32 1.1754944e-38, %v2446
  %v2448 = vsel %vm2445, %v2447, %v2443
  %v2449 = vmul.f32 1.0, %v2448
  %v2450 = vrcp.pop %v2404
  %v2451 = vmul.f32 %v2404, %v2450
  %v2452 = vsub.f32 1.0, %v2451
  %v2453 = vmul.f32 %v2450, %v2452
  %v2454 = vadd.f32 %v2450, %v2453
  %vm2455 = vweird.f32 %v2404
  %vm2456 = vweird.f32 %v2450
  %vm2457 = vmor %vm2455, %vm2456
  %v2458 = vsel %vm2457, %v2450, %v2454
  %v2459 = vand.u32 2147483647, %v2404
  %vm2460 = vcmp.eq.f32.partialorder %v2459, 8.507059e+37
  %v2461 = vand.u32 %v2404, 2147483648
  %v2462 = vor.u32 1.1754944e-38, %v2461
  %v2463 = vsel %vm2460, %v2462, %v2458
  %v2464 = vmul.f32 1.0, %v2463
  %v2465 = vtanh.pop %v2386
  %v2466 = vtanh.pop %v2388
  %v2467 = vmul.f32 %v2419, %v2175
  %v2468 = vmul.f32 %v2449, %v2176
  %2471 = vrot.lane.b32.xlu0 %v2465, 64
  %v2472 = vpop.permute.xlu0 %2471
  %2473 = vrot.lane.b32.xlu0 %v2466, 64
  %v2474 = vpop.permute.xlu0 %2473
  %v2477 = vmul.f32 %v2419, %v2472
  %v2478 = vmul.f32 %v2449, %v2474
  %2481 = vrot.lane.b32.xlu0 %v2477, 64
  %v2482 = vpop.permute.xlu0 %2481
  %2483 = vrot.lane.b32.xlu0 %v2478, 64
  %v2484 = vpop.permute.xlu0 %2483
  %v2487 = vadd.f32 %v2467, %v2482
  %v2488 = vadd.f32 %v2468, %v2484
  %v2489 = vtanh.pop %v2487
  %v2490 = vtanh.pop %v2488
  %2493 = vrot.lane.b32.xlu0 %v2489, 64
  %v2494 = vpop.permute.xlu0 %2493
  %2495 = vrot.lane.b32.xlu0 %v2490, 64
  %v2496 = vpop.permute.xlu0 %2495
  %v2499 = vmul.f32 %v2434, %v2494
  %v2500 = vmul.f32 %v2464, %v2496
  %2503 = vrot.lane.b32.xlu0 %v2338, 64
  %v2504 = vpop.permute.xlu0 %2503
  %2505 = vrot.lane.b32.xlu0 %v2339, 64
  %v2506 = vpop.permute.xlu0 %2505
  %v2509 = vsel %vm409, %v2499, %v2504
  %v2510 = vsel %vm409, %v2500, %v2506
  %v2511 = vpack.c.bf16 %v2510, %v2509
  %2512 = vmatpush.bf16.msra.mxu0 %v622
  %2513 = vmatpush.bf16.msra.mxu0 %v620
  %2514 = vmatpush.bf16.msra.mxu0 %v618
  %2515 = vmatpush.bf16.msra.mxu0 %v616
  %2516 = vmatpush.bf16.msra.mxu0 %v614
  %2517 = vmatpush.bf16.msra.mxu0 %v612
  %2518 = vmatpush.bf16.msra.mxu0 %v610
  %2519 = vmatpush.bf16.msra.mxu0 %v608
  %2520 = vmatmul.bf16.gmra.mxu0 %v2511
  %v2521 = vpop.f32.mrf.mxu0
  %v2522 = vadd.f32 %v352, %v2521
  %v2523 = vpop.f32.mrf.mxu0
  %v2524 = vadd.f32 %v352, %v2523
  %2525 = vdwg.mxu0
  %2526 = vmatpush.bf16.msra.mxu0 %v623
  %2527 = vmatpush.bf16.msra.mxu0 %v621
  %2528 = vmatpush.bf16.msra.mxu0 %v619
  %2529 = vmatpush.bf16.msra.mxu0 %v617
  %2530 = vmatpush.bf16.msra.mxu0 %v615
  %2531 = vmatpush.bf16.msra.mxu0 %v613
  %2532 = vmatpush.bf16.msra.mxu0 %v611
  %2533 = vmatpush.bf16.msra.mxu0 %v609
  %2534 = vmatmul.bf16.gmra.mxu0 %v2511
  %v2535 = vpop.f32.mrf.mxu0
  %v2536 = vadd.f32 %v353, %v2535
  %v2537 = vpop.f32.mrf.mxu0
  %v2538 = vadd.f32 %v353, %v2537
  %2539 = vdwg.mxu0
  %v2540 = vxor.u32 %v2522, 2147483648
  %v2541 = vxor.u32 %v2536, 2147483648
  %v2542 = vxor.u32 %v2524, 2147483648
  %v2543 = vxor.u32 %v2538, 2147483648
  %v2544 = vmul.f32 %v2540, 1.442695
  %v2545 = vpow.pop %v2544
  %v2546 = vmul.f32 %v2541, 1.442695
  %v2547 = vpow.pop %v2546
  %v2548 = vmul.f32 %v2542, 1.442695
  %v2549 = vpow.pop %v2548
  %v2550 = vmul.f32 %v2543, 1.442695
  %v2551 = vpow.pop %v2550
  %v2552 = vadd.f32 %v2545, 1.0
  %v2553 = vadd.f32 %v2547, 1.0
  %v2554 = vadd.f32 %v2549, 1.0
  %v2555 = vadd.f32 %v2551, 1.0
  %v2556 = vrcp.pop %v2552
  %v2557 = vmul.f32 %v2552, %v2556
  %v2558 = vsub.f32 1.0, %v2557
  %v2559 = vmul.f32 %v2556, %v2558
  %v2560 = vadd.f32 %v2556, %v2559
  %vm2561 = vweird.f32 %v2552
  %vm2562 = vweird.f32 %v2556
  %vm2563 = vmor %vm2561, %vm2562
  %v2564 = vsel %vm2563, %v2556, %v2560
  %v2565 = vand.u32 2147483647, %v2552
  %vm2566 = vcmp.eq.f32.partialorder %v2565, 8.507059e+37
  %v2567 = vand.u32 %v2552, 2147483648
  %v2568 = vor.u32 1.1754944e-38, %v2567
  %v2569 = vsel %vm2566, %v2568, %v2564
  %v2570 = vmul.f32 1.0, %v2569
  %v2571 = vrcp.pop %v2553
  %v2572 = vmul.f32 %v2553, %v2571
  %v2573 = vsub.f32 1.0, %v2572
  %v2574 = vmul.f32 %v2571, %v2573
  %v2575 = vadd.f32 %v2571, %v2574
  %vm2576 = vweird.f32 %v2553
  %vm2577 = vweird.f32 %v2571
  %vm2578 = vmor %vm2576, %vm2577
  %v2579 = vsel %vm2578, %v2571, %v2575
  %v2580 = vand.u32 2147483647, %v2553
  %vm2581 = vcmp.eq.f32.partialorder %v2580, 8.507059e+37
  %v2582 = vand.u32 %v2553, 2147483648
  %v2583 = vor.u32 1.1754944e-38, %v2582
  %v2584 = vsel %vm2581, %v2583, %v2579
  %v2585 = vmul.f32 1.0, %v2584
  %v2586 = vrcp.pop %v2554
  %v2587 = vmul.f32 %v2554, %v2586
  %v2588 = vsub.f32 1.0, %v2587
  %v2589 = vmul.f32 %v2586, %v2588
  %v2590 = vadd.f32 %v2586, %v2589
  %vm2591 = vweird.f32 %v2554
  %vm2592 = vweird.f32 %v2586
  %vm2593 = vmor %vm2591, %vm2592
  %v2594 = vsel %vm2593, %v2586, %v2590
  %v2595 = vand.u32 2147483647, %v2554
  %vm2596 = vcmp.eq.f32.partialorder %v2595, 8.507059e+37
  %v2597 = vand.u32 %v2554, 2147483648
  %v2598 = vor.u32 1.1754944e-38, %v2597
  %v2599 = vsel %vm2596, %v2598, %v2594
  %v2600 = vmul.f32 1.0, %v2599
  %v2601 = vrcp.pop %v2555
  %v2602 = vmul.f32 %v2555, %v2601
  %v2603 = vsub.f32 1.0, %v2602
  %v2604 = vmul.f32 %v2601, %v2603
  %v2605 = vadd.f32 %v2601, %v2604
  %vm2606 = vweird.f32 %v2555
  %vm2607 = vweird.f32 %v2601
  %vm2608 = vmor %vm2606, %vm2607
  %v2609 = vsel %vm2608, %v2601, %v2605
  %v2610 = vand.u32 2147483647, %v2555
  %vm2611 = vcmp.eq.f32.partialorder %v2610, 8.507059e+37
  %v2612 = vand.u32 %v2555, 2147483648
  %v2613 = vor.u32 1.1754944e-38, %v2612
  %v2614 = vsel %vm2611, %v2613, %v2609
  %v2615 = vmul.f32 1.0, %v2614
  %v2616 = vtanh.pop %v2536
  %v2617 = vtanh.pop %v2538
  %v2618 = vmul.f32 %v2570, %v2326
  %v2619 = vmul.f32 %v2600, %v2327
  %2622 = vrot.lane.b32.xlu0 %v2616, 64
  %v2623 = vpop.permute.xlu0 %2622
  %2624 = vrot.lane.b32.xlu0 %v2617, 64
  %v2625 = vpop.permute.xlu0 %2624
  %v2628 = vmul.f32 %v2570, %v2623
  %v2629 = vmul.f32 %v2600, %v2625
  %2632 = vrot.lane.b32.xlu0 %v2628, 64
  %v2633 = vpop.permute.xlu0 %2632
  %2634 = vrot.lane.b32.xlu0 %v2629, 64
  %v2635 = vpop.permute.xlu0 %2634
  %v2638 = vadd.f32 %v2618, %v2633
  %v2639 = vadd.f32 %v2619, %v2635
  %v2640 = vtanh.pop %v2638
  %v2641 = vtanh.pop %v2639
  %2644 = vrot.lane.b32.xlu0 %v2640, 64
  %v2645 = vpop.permute.xlu0 %2644
  %2646 = vrot.lane.b32.xlu0 %v2641, 64
  %v2647 = vpop.permute.xlu0 %2646
  %v2650 = vmul.f32 %v2585, %v2645
  %v2651 = vmul.f32 %v2615, %v2647
  %s2652 = smul.u32 14, 2
  %s2653 = smul.addr %s2652, 4
  %s2654 = scalar_lea.vmem [#allocation2], %s2653
  %v2655 = vld [vmem:[%s2654] sm:$0xff]
  %v2656 = vld [vmem:[%s2654 + $0x8] sm:$0xff]
  %v2657 = vunpack.c.l.bf16 %v2655
  %v2658 = vunpack.c.h.bf16 %v2655
  %v2659 = vunpack.c.l.bf16 %v2656
  %v2660 = vunpack.c.h.bf16 %v2656
  %v2661 = vadd.f32 %v2657, %v346
  %v2662 = vadd.f32 %v2658, %v347
  %v2663 = vadd.f32 %v2659, %v346
  %v2664 = vadd.f32 %v2660, %v347
  %v2665 = vpack.c.bf16 %v2500, %v2499
  %v2667 = vsel %vm409, %v2665, 0
  %2669 = vmatpush.bf16.msra.mxu0 0
  %2670 = vmatpush.bf16.msra.mxu0 0
  %2671 = vmatpush.bf16.msra.mxu0 0
  %2672 = vmatpush.bf16.msra.mxu0 0
  %2673 = vmatpush.bf16.msra.mxu0 %v399
  %2674 = vmatpush.bf16.msra.mxu0 %v397
  %2675 = vmatpush.bf16.msra.mxu0 %v395
  %2676 = vmatpush.bf16.msra.mxu0 %v393
  %2677 = vmatmul.bf16.gmra.mxu0 %v2667
  %v2678 = vpop.f32.mrf.mxu0
  %v2679 = vadd.f32 0.0, %v2678
  %v2680 = vpop.f32.mrf.mxu0
  %v2681 = vadd.f32 0.0, %v2680
  %2682 = vdwg.mxu0
  %2683 = vmatpush.bf16.msra.mxu0 0
  %2684 = vmatpush.bf16.msra.mxu0 0
  %2685 = vmatpush.bf16.msra.mxu0 0
  %2686 = vmatpush.bf16.msra.mxu0 0
  %2687 = vmatpush.bf16.msra.mxu0 %v400
  %2688 = vmatpush.bf16.msra.mxu0 %v398
  %2689 = vmatpush.bf16.msra.mxu0 %v396
  %2690 = vmatpush.bf16.msra.mxu0 %v394
  %2691 = vmatmul.bf16.gmra.mxu0 %v2667
  %v2692 = vpop.f32.mrf.mxu0
  %v2693 = vadd.f32 0.0, %v2692
  %v2694 = vpop.f32.mrf.mxu0
  %v2695 = vadd.f32 0.0, %v2694
  %2696 = vdwg.mxu0
  %v2697 = vadd.f32 %v2661, %v2679
  %v2698 = vadd.f32 %v2662, %v2693
  %v2699 = vadd.f32 %v2663, %v2681
  %v2700 = vadd.f32 %v2664, %v2695
  %v2701 = vxor.u32 %v2697, 2147483648
  %v2702 = vxor.u32 %v2698, 2147483648
  %v2703 = vxor.u32 %v2699, 2147483648
  %v2704 = vxor.u32 %v2700, 2147483648
  %v2705 = vmul.f32 %v2701, 1.442695
  %v2706 = vpow.pop %v2705
  %v2707 = vmul.f32 %v2702, 1.442695
  %v2708 = vpow.pop %v2707
  %v2709 = vmul.f32 %v2703, 1.442695
  %v2710 = vpow.pop %v2709
  %v2711 = vmul.f32 %v2704, 1.442695
  %v2712 = vpow.pop %v2711
  %v2713 = vadd.f32 %v2706, 1.0
  %v2714 = vadd.f32 %v2708, 1.0
  %v2715 = vadd.f32 %v2710, 1.0
  %v2716 = vadd.f32 %v2712, 1.0
  %v2717 = vrcp.pop %v2713
  %v2718 = vmul.f32 %v2713, %v2717
  %v2719 = vsub.f32 1.0, %v2718
  %v2720 = vmul.f32 %v2717, %v2719
  %v2721 = vadd.f32 %v2717, %v2720
  %vm2722 = vweird.f32 %v2713
  %vm2723 = vweird.f32 %v2717
  %vm2724 = vmor %vm2722, %vm2723
  %v2725 = vsel %vm2724, %v2717, %v2721
  %v2726 = vand.u32 2147483647, %v2713
  %vm2727 = vcmp.eq.f32.partialorder %v2726, 8.507059e+37
  %v2728 = vand.u32 %v2713, 2147483648
  %v2729 = vor.u32 1.1754944e-38, %v2728
  %v2730 = vsel %vm2727, %v2729, %v2725
  %v2731 = vmul.f32 1.0, %v2730
  %v2732 = vrcp.pop %v2714
  %v2733 = vmul.f32 %v2714, %v2732
  %v2734 = vsub.f32 1.0, %v2733
  %v2735 = vmul.f32 %v2732, %v2734
  %v2736 = vadd.f32 %v2732, %v2735
  %vm2737 = vweird.f32 %v2714
  %vm2738 = vweird.f32 %v2732
  %vm2739 = vmor %vm2737, %vm2738
  %v2740 = vsel %vm2739, %v2732, %v2736
  %v2741 = vand.u32 2147483647, %v2714
  %vm2742 = vcmp.eq.f32.partialorder %v2741, 8.507059e+37
  %v2743 = vand.u32 %v2714, 2147483648
  %v2744 = vor.u32 1.1754944e-38, %v2743
  %v2745 = vsel %vm2742, %v2744, %v2740
  %v2746 = vmul.f32 1.0, %v2745
  %v2747 = vrcp.pop %v2715
  %v2748 = vmul.f32 %v2715, %v2747
  %v2749 = vsub.f32 1.0, %v2748
  %v2750 = vmul.f32 %v2747, %v2749
  %v2751 = vadd.f32 %v2747, %v2750
  %vm2752 = vweird.f32 %v2715
  %vm2753 = vweird.f32 %v2747
  %vm2754 = vmor %vm2752, %vm2753
  %v2755 = vsel %vm2754, %v2747, %v2751
  %v2756 = vand.u32 2147483647, %v2715
  %vm2757 = vcmp.eq.f32.partialorder %v2756, 8.507059e+37
  %v2758 = vand.u32 %v2715, 2147483648
  %v2759 = vor.u32 1.1754944e-38, %v2758
  %v2760 = vsel %vm2757, %v2759, %v2755
  %v2761 = vmul.f32 1.0, %v2760
  %v2762 = vrcp.pop %v2716
  %v2763 = vmul.f32 %v2716, %v2762
  %v2764 = vsub.f32 1.0, %v2763
  %v2765 = vmul.f32 %v2762, %v2764
  %v2766 = vadd.f32 %v2762, %v2765
  %vm2767 = vweird.f32 %v2716
  %vm2768 = vweird.f32 %v2762
  %vm2769 = vmor %vm2767, %vm2768
  %v2770 = vsel %vm2769, %v2762, %v2766
  %v2771 = vand.u32 2147483647, %v2716
  %vm2772 = vcmp.eq.f32.partialorder %v2771, 8.507059e+37
  %v2773 = vand.u32 %v2716, 2147483648
  %v2774 = vor.u32 1.1754944e-38, %v2773
  %v2775 = vsel %vm2772, %v2774, %v2770
  %v2776 = vmul.f32 1.0, %v2775
  %v2777 = vtanh.pop %v2698
  %v2778 = vtanh.pop %v2700
  %v2779 = vmul.f32 %v2731, %v2487
  %v2780 = vmul.f32 %v2761, %v2488
  %2783 = vrot.lane.b32.xlu0 %v2777, 64
  %v2784 = vpop.permute.xlu0 %2783
  %2785 = vrot.lane.b32.xlu0 %v2778, 64
  %v2786 = vpop.permute.xlu0 %2785
  %v2789 = vmul.f32 %v2731, %v2784
  %v2790 = vmul.f32 %v2761, %v2786
  %2793 = vrot.lane.b32.xlu0 %v2789, 64
  %v2794 = vpop.permute.xlu0 %2793
  %2795 = vrot.lane.b32.xlu0 %v2790, 64
  %v2796 = vpop.permute.xlu0 %2795
  %v2799 = vadd.f32 %v2779, %v2794
  %v2800 = vadd.f32 %v2780, %v2796
  %v2801 = vtanh.pop %v2799
  %v2802 = vtanh.pop %v2800
  %2805 = vrot.lane.b32.xlu0 %v2801, 64
  %v2806 = vpop.permute.xlu0 %2805
  %2807 = vrot.lane.b32.xlu0 %v2802, 64
  %v2808 = vpop.permute.xlu0 %2807
  %v2811 = vmul.f32 %v2746, %v2806
  %v2812 = vmul.f32 %v2776, %v2808
  %2815 = vrot.lane.b32.xlu0 %v2650, 64
  %v2816 = vpop.permute.xlu0 %2815
  %2817 = vrot.lane.b32.xlu0 %v2651, 64
  %v2818 = vpop.permute.xlu0 %2817
  %v2821 = vsel %vm409, %v2811, %v2816
  %v2822 = vsel %vm409, %v2812, %v2818
  %v2823 = vpack.c.bf16 %v2822, %v2821
  %2824 = vmatpush.bf16.msra.mxu0 %v622
  %2825 = vmatpush.bf16.msra.mxu0 %v620
  %2826 = vmatpush.bf16.msra.mxu0 %v618
  %2827 = vmatpush.bf16.msra.mxu0 %v616
  %2828 = vmatpush.bf16.msra.mxu0 %v614
  %2829 = vmatpush.bf16.msra.mxu0 %v612
  %2830 = vmatpush.bf16.msra.mxu0 %v610
  %2831 = vmatpush.bf16.msra.mxu0 %v608
  %2832 = vmatmul.bf16.gmra.mxu0 %v2823
  %v2833 = vpop.f32.mrf.mxu0
  %v2834 = vadd.f32 %v352, %v2833
  %v2835 = vpop.f32.mrf.mxu0
  %v2836 = vadd.f32 %v352, %v2835
  %2837 = vdwg.mxu0
  %2838 = vmatpush.bf16.msra.mxu0 %v623
  %2839 = vmatpush.bf16.msra.mxu0 %v621
  %2840 = vmatpush.bf16.msra.mxu0 %v619
  %2841 = vmatpush.bf16.msra.mxu0 %v617
  %2842 = vmatpush.bf16.msra.mxu0 %v615
  %2843 = vmatpush.bf16.msra.mxu0 %v613
  %2844 = vmatpush.bf16.msra.mxu0 %v611
  %2845 = vmatpush.bf16.msra.mxu0 %v609
  %2846 = vmatmul.bf16.gmra.mxu0 %v2823
  %v2847 = vpop.f32.mrf.mxu0
  %v2848 = vadd.f32 %v353, %v2847
  %v2849 = vpop.f32.mrf.mxu0
  %v2850 = vadd.f32 %v353, %v2849
  %2851 = vdwg.mxu0
  %v2852 = vxor.u32 %v2834, 2147483648
  %v2853 = vxor.u32 %v2848, 2147483648
  %v2854 = vxor.u32 %v2836, 2147483648
  %v2855 = vxor.u32 %v2850, 2147483648
  %v2856 = vmul.f32 %v2852, 1.442695
  %v2857 = vpow.pop %v2856
  %v2858 = vmul.f32 %v2853, 1.442695
  %v2859 = vpow.pop %v2858
  %v2860 = vmul.f32 %v2854, 1.442695
  %v2861 = vpow.pop %v2860
  %v2862 = vmul.f32 %v2855, 1.442695
  %v2863 = vpow.pop %v2862
  %v2864 = vadd.f32 %v2857, 1.0
  %v2865 = vadd.f32 %v2859, 1.0
  %v2866 = vadd.f32 %v2861, 1.0
  %v2867 = vadd.f32 %v2863, 1.0
  %v2868 = vrcp.pop %v2864
  %v2869 = vmul.f32 %v2864, %v2868
  %v2870 = vsub.f32 1.0, %v2869
  %v2871 = vmul.f32 %v2868, %v2870
  %v2872 = vadd.f32 %v2868, %v2871
  %vm2873 = vweird.f32 %v2864
  %vm2874 = vweird.f32 %v2868
  %vm2875 = vmor %vm2873, %vm2874
  %v2876 = vsel %vm2875, %v2868, %v2872
  %v2877 = vand.u32 2147483647, %v2864
  %vm2878 = vcmp.eq.f32.partialorder %v2877, 8.507059e+37
  %v2879 = vand.u32 %v2864, 2147483648
  %v2880 = vor.u32 1.1754944e-38, %v2879
  %v2881 = vsel %vm2878, %v2880, %v2876
  %v2882 = vmul.f32 1.0, %v2881
  %v2883 = vrcp.pop %v2865
  %v2884 = vmul.f32 %v2865, %v2883
  %v2885 = vsub.f32 1.0, %v2884
  %v2886 = vmul.f32 %v2883, %v2885
  %v2887 = vadd.f32 %v2883, %v2886
  %vm2888 = vweird.f32 %v2865
  %vm2889 = vweird.f32 %v2883
  %vm2890 = vmor %vm2888, %vm2889
  %v2891 = vsel %vm2890, %v2883, %v2887
  %v2892 = vand.u32 2147483647, %v2865
  %vm2893 = vcmp.eq.f32.partialorder %v2892, 8.507059e+37
  %v2894 = vand.u32 %v2865, 2147483648
  %v2895 = vor.u32 1.1754944e-38, %v2894
  %v2896 = vsel %vm2893, %v2895, %v2891
  %v2897 = vmul.f32 1.0, %v2896
  %v2898 = vrcp.pop %v2866
  %v2899 = vmul.f32 %v2866, %v2898
  %v2900 = vsub.f32 1.0, %v2899
  %v2901 = vmul.f32 %v2898, %v2900
  %v2902 = vadd.f32 %v2898, %v2901
  %vm2903 = vweird.f32 %v2866
  %vm2904 = vweird.f32 %v2898
  %vm2905 = vmor %vm2903, %vm2904
  %v2906 = vsel %vm2905, %v2898, %v2902
  %v2907 = vand.u32 2147483647, %v2866
  %vm2908 = vcmp.eq.f32.partialorder %v2907, 8.507059e+37
  %v2909 = vand.u32 %v2866, 2147483648
  %v2910 = vor.u32 1.1754944e-38, %v2909
  %v2911 = vsel %vm2908, %v2910, %v2906
  %v2912 = vmul.f32 1.0, %v2911
  %v2913 = vrcp.pop %v2867
  %v2914 = vmul.f32 %v2867, %v2913
  %v2915 = vsub.f32 1.0, %v2914
  %v2916 = vmul.f32 %v2913, %v2915
  %v2917 = vadd.f32 %v2913, %v2916
  %vm2918 = vweird.f32 %v2867
  %vm2919 = vweird.f32 %v2913
  %vm2920 = vmor %vm2918, %vm2919
  %v2921 = vsel %vm2920, %v2913, %v2917
  %v2922 = vand.u32 2147483647, %v2867
  %vm2923 = vcmp.eq.f32.partialorder %v2922, 8.507059e+37
  %v2924 = vand.u32 %v2867, 2147483648
  %v2925 = vor.u32 1.1754944e-38, %v2924
  %v2926 = vsel %vm2923, %v2925, %v2921
  %v2927 = vmul.f32 1.0, %v2926
  %v2928 = vtanh.pop %v2848
  %v2929 = vtanh.pop %v2850
  %v2930 = vmul.f32 %v2882, %v2638
  %v2931 = vmul.f32 %v2912, %v2639
  %2934 = vrot.lane.b32.xlu0 %v2928, 64
  %v2935 = vpop.permute.xlu0 %2934
  %2936 = vrot.lane.b32.xlu0 %v2929, 64
  %v2937 = vpop.permute.xlu0 %2936
  %v2940 = vmul.f32 %v2882, %v2935
  %v2941 = vmul.f32 %v2912, %v2937
  %2944 = vrot.lane.b32.xlu0 %v2940, 64
  %v2945 = vpop.permute.xlu0 %2944
  %2946 = vrot.lane.b32.xlu0 %v2941, 64
  %v2947 = vpop.permute.xlu0 %2946
  %v2950 = vadd.f32 %v2930, %v2945
  %v2951 = vadd.f32 %v2931, %v2947
  %v2952 = vtanh.pop %v2950
  %v2953 = vtanh.pop %v2951
  %2956 = vrot.lane.b32.xlu0 %v2952, 64
  %v2957 = vpop.permute.xlu0 %2956
  %2958 = vrot.lane.b32.xlu0 %v2953, 64
  %v2959 = vpop.permute.xlu0 %2958
  %v2962 = vmul.f32 %v2897, %v2957
  %v2963 = vmul.f32 %v2927, %v2959
  %v2964 = vpack.c.bf16 %v2963, %v2962
  %v2965 = vld [vmem:[%s6] sm:$0xf]
  %v2966 = vld [vmem:[%s6 + $0x4] sm:$0xf]
  %v2967 = vld [vmem:[%s6 + $0x8] sm:$0xf]
  %v2968 = vld [vmem:[%s6 + $0xc] sm:$0xf]
  %v2969 = vld [vmem:[%s6 + $0x10] sm:$0xf]
  %v2970 = vld [vmem:[%s6 + $0x14] sm:$0xf]
  %v2971 = vld [vmem:[%s6 + $0x18] sm:$0xf]
  %v2972 = vld [vmem:[%s6 + $0x1c] sm:$0xf]
  %v2973 = vld [vmem:[%s7] sm:$0x1]
  %v2975 = vperm.slane %v2973, 0
  %v2985 = vunpack.c.l.b16 %v2965
  %v2986 = vunpack.c.l.b16 %v2966
  %v2987 = vunpack.c.l.b16 %v2967
  %v2988 = vunpack.c.l.b16 %v2968
  %v2989 = vunpack.c.l.b16 %v2969
  %v2990 = vunpack.c.l.b16 %v2970
  %v2991 = vunpack.c.l.b16 %v2971
  %v2992 = vunpack.c.l.b16 %v2972
  %v2993 = vpack.c.b16 %v2986, %v2985
  %v2994 = vpack.c.b16 %v2988, %v2987
  %v2995 = vpack.c.b16 %v2990, %v2989
  %v2996 = vpack.c.b16 %v2992, %v2991
  %v3002 = vsel %vm409, %v2964, 0
  %3004 = vmatpush.bf16.msra.mxu0 0
  %3005 = vmatpush.bf16.msra.mxu0 0
  %3006 = vmatpush.bf16.msra.mxu0 0
  %3007 = vmatpush.bf16.msra.mxu0 0
  %3008 = vmatpush.bf16.msra.mxu0 %v2996
  %3009 = vmatpush.bf16.msra.mxu0 %v2995
  %3010 = vmatpush.bf16.msra.mxu0 %v2994
  %3011 = vmatpush.bf16.msra.mxu0 %v2993
  %3012 = vmatmul.bf16.gmra.mxu0 %v3002
  %v3013 = vpop.f32.mrf.mxu0
  %v3014 = vadd.f32 %v2975, %v3013
  %v3015 = vpop.f32.mrf.mxu0
  %v3016 = vadd.f32 %v2975, %v3015
  %3017 = vdwg.mxu0
  %3018 = vst [vmem:[%s8] sm:$0xff] %v3014
  %3019 = vst [vmem:[%s8 + $0x8] sm:$0xff] %v3016
  // Predicated region
  $region34: #{lstm_classifier_forward.1} parent=0 // pred_check
    _
  $region35: #{lstm_classifier_forward.1} parent=0 // pred_check_branch
    %3021 = sbr.rel (0) target = $region37
  $region36: #{lstm_classifier_forward.1} parent=0 // pred_region
    _
  $region37: #{lstm_classifier_forward.1} parent=0 // pred_fallthru
    _
  // Predicated region
  $region38: #{lstm_classifier_forward.1} parent=0 // pred_check
    _
  $region39: #{lstm_classifier_forward.1} parent=0 // pred_check_branch
    %3023 = sbr.rel (0) target = $region41
  $region40: #{lstm_classifier_forward.1} parent=0 // pred_region
    _
  $region41: #{lstm_classifier_forward.1} parent=0 // pred_fallthru
    _

</llo_original>
